<compile_context>
chip_gen: v7x
topology: tpu7x:2x2x1
jax: 0.10.0
libtpu: 0.0.40
codegen_flags: <defaults>
</compile_context>

<pallas_src>
import functools
import math

import jax
import jax.numpy as jnp
from jax.experimental import pallas as pl
from jax.experimental.pallas import tpu as pltpu


UP_SIZE = 512  # hardcoded in the PyTorch module: nn.Upsample(size=512)


# ----------------------------------------------------------------------------
# Pallas kernels
# ----------------------------------------------------------------------------
def _s2d_conv_kernel(x_ref, w_ref, b_ref, o_ref, *, m_rows, shifts, neg_slope):
    """Fused Conv2d(k=4, s=2, p=1) on a space-to-depth packed, row-flattened
    input, one image per grid step.

    x_ref : (R, 4*Cin)       bf16  flattened s2d rows (incl. 1 halo row)
    w_ref : (4, 4*Cin, Cout) bf16  one weight block per 2x2 window offset
    b_ref : (1, Cout)        f32
    o_ref : (m_rows, Cout)         m_rows = Ho*(Wo+1); the wrap-around column
                                   (q == Wo) is junk and dropped by the wrapper.
    """
    cout = w_ref.shape[-1]
    acc = jnp.zeros((m_rows, cout), jnp.float32)
    for t, s in enumerate(shifts):
        xs = x_ref[pl.ds(s, m_rows), :]                       # bf16 operand
        acc = acc + jnp.dot(xs, w_ref[t], preferred_element_type=jnp.float32)
    acc = acc + b_ref[...]
    if neg_slope is not None:
        acc = jnp.where(acc >= 0.0, acc, neg_slope * acc)     # f32 epilogue
    o_ref[...] = acc.astype(o_ref.dtype)


def _classifier_upsample_kernel(xc_ref, wc_ref, bc_ref, ahw_ref, awt_ref,
                                clasf_ref, sig_ref, *, m_rows, shifts):
    """Cout=1 classifier conv fused with bilinear upsample (+ sigmoid).

    xc_ref  : (R, 4*Cin)   bf16  flattened s2d classifier input (one image)
    wc_ref  : (4, 1, 4*Cin) f32  classifier weights as row vectors
    bc_ref  : (1, 1)       f32   classifier bias
    ahw_ref : (TR, m_rows) f32   row-tile of extended A_h (junk cols zeroed)
    awt_ref : (m_rows, S)  f32   extended A_w^T (junk rows zeroed)
    clasf_ref, sig_ref : (TR, S) f32   lane-dense output tiles
    """
    # (m_rows, 1) classifier column -- tiny, recomputed per row tile, never
    # written to HBM.  Done on VPU/XLU (multiply + lane-reduce) in f32.
    c = jnp.zeros((m_rows, 1), jnp.float32)
    for t, s in enumerate(shifts):
        xs = xc_ref[pl.ds(s, m_rows), :].astype(jnp.float32)
        c = c + jnp.sum(xs * wc_ref[t], axis=-1, keepdims=True)
    c = c + bc_ref[...]

    # out = A_h_ext @ diag(c) @ A_w_ext^T  ==  A_h_ext @ (c * A_w_ext^T)
    t_mat = c * awt_ref[...]                                   # (m_rows, S)
    out = jnp.dot(ahw_ref[...], t_mat, preferred_element_type=jnp.float32)
    clasf_ref[...] = out
    sig_ref[...] = jax.nn.sigmoid(out)


# ----------------------------------------------------------------------------
# Wrapper-side plumbing (cheap, ~1x data: pad / pixel-pack / weight reorder)
# ----------------------------------------------------------------------------
def _space_to_depth_flat(x_nhwc):
    """pad=1, pack 2x2 pixels into channels, append one halo row, flatten rows.

    (N, H, W, C) -> (N, (H/2+2)*(W/2+1), 4*C); also returns (Hs, Ws)."""
    N, H, W, C = x_nhwc.shape
    assert H % 2 == 0 and W % 2 == 0, "spatial dims must be even"
    xp = jnp.pad(x_nhwc, ((0, 0), (1, 1), (1, 1), (0, 0)))
    Hs, Ws = (H + 2) // 2, (W + 2) // 2
    x = xp.reshape(N, Hs, 2, Ws, 2, C)
    x = jnp.transpose(x, (0, 1, 3, 2, 4, 5)).reshape(N, Hs, Ws, 4 * C)
    x = jnp.pad(x, ((0, 0), (0, 1), (0, 0), (0, 0)))   # halo row for max shift
    return x.reshape(N, (Hs + 1) * Ws, 4 * C), Hs, Ws


def _rearrange_weight(w_pt):
    """Torch (Cout, Cin, 4, 4) -> (4, 4*Cin, Cout): one (4*Cin, Cout) block per
    2x2 window offset (dh, dw); the 4*Cin axis is ordered (ph, pw, cin) to
    match _space_to_depth_flat's channel packing."""
    cout, cin = w_pt.shape[0], w_pt.shape[1]
    w6 = w_pt.reshape(cout, cin, 2, 2, 2, 2)            # (co, ci, dh, ph, dw, pw)
    w6 = jnp.transpose(w6, (2, 4, 3, 5, 1, 0))          # (dh, dw, ph, pw, ci, co)
    return w6.reshape(4, 4 * cin, cout)


def _conv4x4_s2_p1(x_nhwc, w_pt, b, neg_slope):
    """Conv2d(k=4, s=2, p=1) + optional LeakyReLU; output NHWC bf16."""
    N, H, W, _ = x_nhwc.shape
    cout = w_pt.shape[0]
    xf, Hs, Ws = _space_to_depth_flat(x_nhwc)
    xf = xf.astype(jnp.bfloat16)
    w_r = _rearrange_weight(w_pt).astype(jnp.bfloat16)
    ho, wo = H // 2, W // 2
    m_rows = ho * Ws
    shifts = (0, 1, Ws, Ws + 1)
    R, kc = xf.shape[1], xf.shape[2]

    out = pl.pallas_call(
        functools.partial(_s2d_conv_kernel, m_rows=m_rows, shifts=shifts,
                          neg_slope=neg_slope),
        out_shape=jax.ShapeDtypeStruct((N, m_rows, cout), jnp.bfloat16),
        grid=(N,),
        in_specs=[
            pl.BlockSpec((None, R, kc), lambda n: (n, 0, 0)),
            pl.BlockSpec((4, kc, cout), lambda n: (0, 0, 0)),
            pl.BlockSpec((1, cout), lambda n: (0, 0)),
        ],
        out_specs=pl.BlockSpec((None, m_rows, cout), lambda n: (n, 0, 0)),
        compiler_params=pltpu.CompilerParams(
            dimension_semantics=("parallel",)),
    )(xf, w_r, b.astype(jnp.float32).reshape(1, -1))

    # Drop the wrap-around junk column (q == Wo) and restore NHWC.
    return out.reshape(N, ho, Ws, cout)[:, :, :wo, :]


def _bilinear_matrix(in_size, out_size):
    """Row-interpolation matrix matching torch Upsample(mode='bilinear',
    align_corners=False)."""
    i = jnp.arange(out_size, dtype=jnp.float32)
    src = (i + 0.5) * (in_size / out_size) - 0.5
    src = jnp.maximum(src, 0.0)
    idx0 = jnp.minimum(jnp.floor(src).astype(jnp.int32), in_size - 1)
    idx1 = jnp.minimum(idx0 + 1, in_size - 1)
    lam = src - idx0.astype(jnp.float32)
    rows = jnp.arange(out_size)
    a = jnp.zeros((out_size, in_size), jnp.float32)
    a = a.at[rows, idx0].add(1.0 - lam)
    a = a.at[rows, idx1].add(lam)
    return a


def _classifier_upsample_sigmoid(x_nhwc, wc_pt, bc, out_size, row_tile=128):
    """Classifier conv (Cout=1) + bilinear upsample to out_size + sigmoid."""
    N, H, W, _ = x_nhwc.shape
    xf, Hs, Ws = _space_to_depth_flat(x_nhwc)
    xf = xf.astype(jnp.bfloat16)
    wc_r = jnp.swapaxes(_rearrange_weight(wc_pt), 1, 2).astype(jnp.float32)
    h2, w2 = H // 2, W // 2
    m_rows = h2 * Ws
    shifts = (0, 1, Ws, Ws + 1)
    R, kc = xf.shape[1], xf.shape[2]

    a_h = _bilinear_matrix(h2, out_size)                 # (S, h2)
    a_w = _bilinear_matrix(w2, out_size)                 # (S, w2)
    # Extended separable-interpolation operands over the flattened classifier
    # grid (h2, Ws): the junk column q == w2 gets zero weight.
    ahw = jnp.zeros((out_size, h2, Ws), jnp.float32)
    ahw = ahw.at[:, :, :w2].set(
        jnp.broadcast_to(a_h[:, :, None], (out_size, h2, w2)))
    ahw = ahw.reshape(out_size, m_rows)                  # (S, m_rows)
    awt = jnp.zeros((h2, Ws, out_size), jnp.float32)
    awt = awt.at[:, :w2, :].set(
        jnp.broadcast_to(a_w.T[None, :, :], (h2, w2, out_size)))
    awt = awt.reshape(m_rows, out_size)                  # (m_rows, S)

    n_rt = out_size // row_tile
    clasf, sig = pl.pallas_call(
        functools.partial(_classifier_upsample_kernel, m_rows=m_rows,
                          shifts=shifts),
        out_shape=(
            jax.ShapeDtypeStruct((N, out_size, out_size), jnp.float32),
            jax.ShapeDtypeStruct((N, out_size, out_size), jnp.float32),
        ),
        grid=(N, n_rt),
        in_specs=[
            pl.BlockSpec((None, R, kc), lambda n, r: (n, 0, 0)),
            pl.BlockSpec((4, 1, kc), lambda n, r: (0, 0, 0)),
            pl.BlockSpec((1, 1), lambda n, r: (0, 0)),
            pl.BlockSpec((row_tile, m_rows), lambda n, r: (r, 0)),
            pl.BlockSpec((m_rows, out_size), lambda n, r: (0, 0)),
        ],
        out_specs=(
            pl.BlockSpec((None, row_tile, out_size), lambda n, r: (n, r, 0)),
            pl.BlockSpec((None, row_tile, out_size), lambda n, r: (n, r, 0)),
        ),
        compiler_params=pltpu.CompilerParams(
            dimension_semantics=("parallel", "parallel")),
    )(xf, wc_r, jnp.asarray(bc, jnp.float32).reshape(1, 1), ahw, awt)

    return sig[:, None, :, :], clasf[:, None, :, :]


# ----------------------------------------------------------------------------
# Parameter init (PyTorch Conv2d defaults) and forward pass
# ----------------------------------------------------------------------------
def _conv_param_init(key, cout, cin, k=4):
    fan_in = cin * k * k
    bound = 1.0 / math.sqrt(fan_in)
    kw_, kb = jax.random.split(key)
    w = jax.random.uniform(kw_, (cout, cin, k, k), jnp.float32, -bound, bound)
    b = jax.random.uniform(kb, (cout,), jnp.float32, -bound, bound)
    return w, b


def init_params(key, num_classes, ndf=32):
    k1, k2, kc = jax.random.split(key, 3)
    w1, b1 = _conv_param_init(k1, ndf, num_classes)
    w2, b2 = _conv_param_init(k2, ndf * 2, ndf)
    wc, bc = _conv_param_init(kc, 1, ndf * 2)
    return {"w1": w1, "b1": b1, "w2": w2, "b2": b2, "wc": wc, "bc": bc}


def fcdiscriminator_wgan_forward(x_nchw, params):
    x = jnp.transpose(x_nchw, (0, 2, 3, 1)).astype(jnp.float32)   # NCHW -> NHWC
    x = _conv4x4_s2_p1(x, params["w1"], params["b1"], neg_slope=0.2)
    x = _conv4x4_s2_p1(x, params["w2"], params["b2"], neg_slope=0.2)
    sig, clasf = _classifier_upsample_sigmoid(x, params["wc"], params["bc"],
                                              UP_SIZE)
    return sig, clasf                                             # (sigmoid(x), clasf)


# ----------------------------------------------------------------------------
# Pure-JAX f32 reference (for a loose numerical sanity check)
# ----------------------------------------------------------------------------
def _reference_forward(x_nchw, params):
    x = jnp.transpose(x_nchw, (0, 2, 3, 1)).astype(jnp.float32)

    def conv(x, w_pt, b):
        w = jnp.transpose(w_pt, (2, 3, 1, 0))                    # HWIO
        y = jax.lax.conv_general_dilated(
            x, w, window_strides=(2, 2), padding=((1, 1), (1, 1)),
            dimension_numbers=("NHWC", "HWIO", "NHWC"))
        return y + b

    x = conv(x, params["w1"], params["b1"])
    x = jnp.where(x >= 0, x, 0.2 * x)
    x = conv(x, params["w2"], params["b2"])
    x = jnp.where(x >= 0, x, 0.2 * x)
    x = conv(x, params["wc"], params["bc"])[..., 0]               # (N, h2, w2)
    a_h = _bilinear_matrix(x.shape[1], UP_SIZE)
    a_w = _bilinear_matrix(x.shape[2], UP_SIZE)
    clasf = jnp.einsum("sp,npq,tq->nst", a_h, x, a_w)[:, None]
    return jax.nn.sigmoid(clasf), clasf


# ----------------------------------------------------------------------------
if __name__ == "__main__":
    num_classes, ndf = 4, 32
    N, H, W = 2, 16, 16

    key = jax.random.PRNGKey(0)
    kparam, kx = jax.random.split(key)
    params = init_params(kparam, num_classes, ndf)
    x = jax.random.normal(kx, (N, num_classes, H, W), jnp.float32)

    fwd = jax.jit(fcdiscriminator_wgan_forward)
    sig, clasf = fwd(x, params)
    jax.block_until_ready((sig, clasf))

    assert sig.shape == (N, 1, UP_SIZE, UP_SIZE), sig.shape
    assert clasf.shape == (N, 1, UP_SIZE, UP_SIZE), clasf.shape
    assert bool(jnp.all(jnp.isfinite(sig))) and bool(jnp.all(jnp.isfinite(clasf)))
    assert bool(jnp.all((sig > 0.0) & (sig < 1.0)))

    # Loose-tolerance check vs. f32 reference (kernels use bf16 MXU operands).
    sig_ref, clasf_ref = jax.jit(_reference_forward)(x, params)
    assert bool(jnp.allclose(clasf, clasf_ref, atol=5e-2, rtol=5e-2)), (
        float(jnp.max(jnp.abs(clasf - clasf_ref))))
    assert bool(jnp.allclose(sig, sig_ref, atol=2e-2, rtol=2e-2))

    print("KERNEL_OK")
</pallas_src>

<mosaic_0001>
module attributes {stable_mosaic.version = 11 : i64} {
  func.func private @main(%arg0: i32) attributes {dimension_semantics = [#tpu.dimension_semantics<core_parallel>], iteration_bounds = array<i64: 2>, tpu.core_type = #tpu.core_type<sc_scalar_subcore>, window_params = []} {
    return
  }
}

module attributes {stable_mosaic.version = 11 : i64} {
  func.func private @main(%arg0: i32) attributes {dimension_semantics = [#tpu.dimension_semantics<core_parallel>], iteration_bounds = array<i64: 2>, tpu.core_type = #tpu.core_type<sc_scalar_subcore>, window_params = []} {
    return
  }
}

module attributes {stable_mosaic.version = 11 : i64} {
  func.func @_s2d_conv_kernel(%arg0: i32, %arg1: memref<1x90x16xbf16, #tpu.memory_space<vmem>>, %arg2: memref<4x16x32xbf16, #tpu.memory_space<vmem>>, %arg3: memref<1x32xf32, #tpu.memory_space<vmem>>, %arg4: memref<1x72x32xbf16, #tpu.memory_space<vmem>>) attributes {dimension_semantics = [#tpu.dimension_semantics<parallel>], iteration_bounds = array<i64: 2>, scalar_prefetch = 0 : i64, scratch_operands = 0 : i64, tpu.core_type = #tpu.core_type<tc>, window_params = [{transform_indices = @transform_0, window_bounds = array<i64: 1, 90, 16>}, {pipeline_mode = #tpu.pipeline_mode<synchronous>, transform_indices = @transform_1, window_bounds = array<i64: 4, 16, 32>}, {pipeline_mode = #tpu.pipeline_mode<synchronous>, transform_indices = @transform_2, window_bounds = array<i64: 1, 32>}, {transform_indices = @transform_3, window_bounds = array<i64: 1, 72, 32>}]} {
    %cst = arith.constant 0.000000e+00 : f32
    %0 = vector.broadcast %cst : f32 to vector<72x32xf32>
    %c0 = arith.constant 0 : index
    %c0_0 = arith.constant 0 : index
    %c0_1 = arith.constant 0 : index
    %1 = vector.load %arg1[%c0, %c0_0, %c0_1] : memref<1x90x16xbf16, #tpu.memory_space<vmem>>, vector<1x72x16xbf16>
    %2 = vector.shape_cast %1 : vector<1x72x16xbf16> to vector<72x16xbf16>
    %c0_2 = arith.constant 0 : index
    %c0_3 = arith.constant 0 : index
    %c0_4 = arith.constant 0 : index
    %3 = vector.load %arg2[%c0_2, %c0_3, %c0_4] : memref<4x16x32xbf16, #tpu.memory_space<vmem>>, vector<1x16x32xbf16>
    %4 = vector.shape_cast %3 : vector<1x16x32xbf16> to vector<16x32xbf16>
    %cst_5 = arith.constant dense<0.000000e+00> : vector<72x32xf32>
    %5 = tpu.matmul %2, %4, %cst_5 {dimension_numbers = #tpu.dot_dimension_numbers<[1], [0], [0], [1], [0, 0, 1, 1], [], []>} : vector<72x16xbf16>, vector<16x32xbf16>, vector<72x32xf32> -> vector<72x32xf32>
    %6 = arith.addf %0, %5 : vector<72x32xf32>
    %c0_6 = arith.constant 0 : index
    %c1 = arith.constant 1 : index
    %c0_7 = arith.constant 0 : index
    %7 = vector.load %arg1[%c0_6, %c1, %c0_7] : memref<1x90x16xbf16, #tpu.memory_space<vmem>>, vector<1x72x16xbf16>
    %8 = vector.shape_cast %7 : vector<1x72x16xbf16> to vector<72x16xbf16>
    %c1_8 = arith.constant 1 : index
    %c0_9 = arith.constant 0 : index
    %c0_10 = arith.constant 0 : index
    %9 = vector.load %arg2[%c1_8, %c0_9, %c0_10] : memref<4x16x32xbf16, #tpu.memory_space<vmem>>, vector<1x16x32xbf16>
    %10 = vector.shape_cast %9 : vector<1x16x32xbf16> to vector<16x32xbf16>
    %cst_11 = arith.constant dense<0.000000e+00> : vector<72x32xf32>
    %11 = tpu.matmul %8, %10, %cst_11 {dimension_numbers = #tpu.dot_dimension_numbers<[1], [0], [0], [1], [0, 0, 1, 1], [], []>} : vector<72x16xbf16>, vector<16x32xbf16>, vector<72x32xf32> -> vector<72x32xf32>
    %12 = arith.addf %6, %11 : vector<72x32xf32>
    %c0_12 = arith.constant 0 : index
    %c9 = arith.constant 9 : index
    %c0_13 = arith.constant 0 : index
    %13 = vector.load %arg1[%c0_12, %c9, %c0_13] : memref<1x90x16xbf16, #tpu.memory_space<vmem>>, vector<1x72x16xbf16>
    %14 = vector.shape_cast %13 : vector<1x72x16xbf16> to vector<72x16xbf16>
    %c2 = arith.constant 2 : index
    %c0_14 = arith.constant 0 : index
    %c0_15 = arith.constant 0 : index
    %15 = vector.load %arg2[%c2, %c0_14, %c0_15] : memref<4x16x32xbf16, #tpu.memory_space<vmem>>, vector<1x16x32xbf16>
    %16 = vector.shape_cast %15 : vector<1x16x32xbf16> to vector<16x32xbf16>
    %cst_16 = arith.constant dense<0.000000e+00> : vector<72x32xf32>
    %17 = tpu.matmul %14, %16, %cst_16 {dimension_numbers = #tpu.dot_dimension_numbers<[1], [0], [0], [1], [0, 0, 1, 1], [], []>} : vector<72x16xbf16>, vector<16x32xbf16>, vector<72x32xf32> -> vector<72x32xf32>
    %18 = arith.addf %12, %17 : vector<72x32xf32>
    %c0_17 = arith.constant 0 : index
    %c10 = arith.constant 10 : index
    %c0_18 = arith.constant 0 : index
    %19 = vector.load %arg1[%c0_17, %c10, %c0_18] : memref<1x90x16xbf16, #tpu.memory_space<vmem>>, vector<1x72x16xbf16>
    %20 = vector.shape_cast %19 : vector<1x72x16xbf16> to vector<72x16xbf16>
    %c3 = arith.constant 3 : index
    %c0_19 = arith.constant 0 : index
    %c0_20 = arith.constant 0 : index
    %21 = vector.load %arg2[%c3, %c0_19, %c0_20] : memref<4x16x32xbf16, #tpu.memory_space<vmem>>, vector<1x16x32xbf16>
    %22 = vector.shape_cast %21 : vector<1x16x32xbf16> to vector<16x32xbf16>
    %cst_21 = arith.constant dense<0.000000e+00> : vector<72x32xf32>
    %23 = tpu.matmul %20, %22, %cst_21 {dimension_numbers = #tpu.dot_dimension_numbers<[1], [0], [0], [1], [0, 0, 1, 1], [], []>} : vector<72x16xbf16>, vector<16x32xbf16>, vector<72x32xf32> -> vector<72x32xf32>
    %24 = arith.addf %18, %23 : vector<72x32xf32>
    %c0_22 = arith.constant 0 : index
    %c0_23 = arith.constant 0 : index
    %25 = vector.load %arg3[%c0_22, %c0_23] : memref<1x32xf32, #tpu.memory_space<vmem>>, vector<1x32xf32>
    %26 = vector.broadcast %25 : vector<1x32xf32> to vector<72x32xf32>
    %27 = arith.addf %24, %26 : vector<72x32xf32>
    %cst_24 = arith.constant 0.000000e+00 : f32
    %28 = vector.broadcast %cst_24 : f32 to vector<72x32xf32>
    %29 = arith.cmpf oge, %27, %28 : vector<72x32xf32>
    %cst_25 = arith.constant 2.000000e-01 : f32
    %30 = vector.broadcast %cst_25 : f32 to vector<72x32xf32>
    %31 = arith.mulf %30, %27 : vector<72x32xf32>
    %32 = arith.select %29, %27, %31 : vector<72x32xi1>, vector<72x32xf32>
    %33 = arith.truncf %32 : vector<72x32xf32> to vector<72x32xbf16>
    %c0_26 = arith.constant 0 : index
    %c0_27 = arith.constant 0 : index
    %c0_28 = arith.constant 0 : index
    %34 = vector.load %arg4[%c0_26, %c0_27, %c0_28] : memref<1x72x32xbf16, #tpu.memory_space<vmem>>, vector<1x72x32xbf16>
    %35 = vector.shape_cast %34 : vector<1x72x32xbf16> to vector<72x32xbf16>
    %36 = vector.shape_cast %33 : vector<72x32xbf16> to vector<1x72x32xbf16>
    tpu.vector_store %arg4[%c0_26, %c0_27, %c0_28], %36 {strides = array<i32>} : memref<1x72x32xbf16, #tpu.memory_space<vmem>>, vector<1x72x32xbf16>,
    return
  }
  func.func @transform_0(%arg0: i32) -> (i32, i32, i32) {
    %c0_i32 = arith.constant 0 : i32
    %c0_i32_0 = arith.constant 0 : i32
    %c0_i32_1 = arith.constant 0 : i32
    return %arg0, %c0_i32, %c0_i32_0 : i32, i32, i32
  }
  func.func @transform_1(%arg0: i32) -> (i32, i32, i32) {
    %c0_i32 = arith.constant 0 : i32
    %c0_i32_0 = arith.constant 0 : i32
    %c0_i32_1 = arith.constant 0 : i32
    %c0_i32_2 = arith.constant 0 : i32
    return %c0_i32, %c0_i32_0, %c0_i32_1 : i32, i32, i32
  }
  func.func @transform_2(%arg0: i32) -> (i32, i32) {
    %c0_i32 = arith.constant 0 : i32
    %c0_i32_0 = arith.constant 0 : i32
    %c0_i32_1 = arith.constant 0 : i32
    return %c0_i32, %c0_i32_0 : i32, i32
  }
  func.func @transform_3(%arg0: i32) -> (i32, i32, i32) {
    %c0_i32 = arith.constant 0 : i32
    %c0_i32_0 = arith.constant 0 : i32
    %c0_i32_1 = arith.constant 0 : i32
    return %arg0, %c0_i32, %c0_i32_0 : i32, i32, i32
  }
}

module attributes {stable_mosaic.version = 11 : i64} {
  func.func @_s2d_conv_kernel(%arg0: i32, %arg1: memref<1x30x128xbf16, #tpu.memory_space<vmem>>, %arg2: memref<4x128x64xbf16, #tpu.memory_space<vmem>>, %arg3: memref<1x64xf32, #tpu.memory_space<vmem>>, %arg4: memref<1x20x64xbf16, #tpu.memory_space<vmem>>) attributes {dimension_semantics = [#tpu.dimension_semantics<parallel>], iteration_bounds = array<i64: 2>, scalar_prefetch = 0 : i64, scratch_operands = 0 : i64, tpu.core_type = #tpu.core_type<tc>, window_params = [{transform_indices = @transform_0, window_bounds = array<i64: 1, 30, 128>}, {pipeline_mode = #tpu.pipeline_mode<synchronous>, transform_indices = @transform_1, window_bounds = array<i64: 4, 128, 64>}, {pipeline_mode = #tpu.pipeline_mode<synchronous>, transform_indices = @transform_2, window_bounds = array<i64: 1, 64>}, {transform_indices = @transform_3, window_bounds = array<i64: 1, 20, 64>}]} {
    %cst = arith.constant 0.000000e+00 : f32
    %0 = vector.broadcast %cst : f32 to vector<20x64xf32>
    %c0 = arith.constant 0 : index
    %c0_0 = arith.constant 0 : index
    %c0_1 = arith.constant 0 : index
    %1 = vector.load %arg1[%c0, %c0_0, %c0_1] : memref<1x30x128xbf16, #tpu.memory_space<vmem>>, vector<1x20x128xbf16>
    %2 = vector.shape_cast %1 : vector<1x20x128xbf16> to vector<20x128xbf16>
    %c0_2 = arith.constant 0 : index
    %c0_3 = arith.constant 0 : index
    %c0_4 = arith.constant 0 : index
    %3 = vector.load %arg2[%c0_2, %c0_3, %c0_4] : memref<4x128x64xbf16, #tpu.memory_space<vmem>>, vector<1x128x64xbf16>
    %4 = vector.shape_cast %3 : vector<1x128x64xbf16> to vector<128x64xbf16>
    %cst_5 = arith.constant dense<0.000000e+00> : vector<20x64xf32>
    %5 = tpu.matmul %2, %4, %cst_5 {dimension_numbers = #tpu.dot_dimension_numbers<[1], [0], [0], [1], [0, 0, 1, 1], [], []>} : vector<20x128xbf16>, vector<128x64xbf16>, vector<20x64xf32> -> vector<20x64xf32>
    %6 = arith.addf %0, %5 : vector<20x64xf32>
    %c0_6 = arith.constant 0 : index
    %c1 = arith.constant 1 : index
    %c0_7 = arith.constant 0 : index
    %7 = vector.load %arg1[%c0_6, %c1, %c0_7] : memref<1x30x128xbf16, #tpu.memory_space<vmem>>, vector<1x20x128xbf16>
    %8 = vector.shape_cast %7 : vector<1x20x128xbf16> to vector<20x128xbf16>
    %c1_8 = arith.constant 1 : index
    %c0_9 = arith.constant 0 : index
    %c0_10 = arith.constant 0 : index
    %9 = vector.load %arg2[%c1_8, %c0_9, %c0_10] : memref<4x128x64xbf16, #tpu.memory_space<vmem>>, vector<1x128x64xbf16>
    %10 = vector.shape_cast %9 : vector<1x128x64xbf16> to vector<128x64xbf16>
    %cst_11 = arith.constant dense<0.000000e+00> : vector<20x64xf32>
    %11 = tpu.matmul %8, %10, %cst_11 {dimension_numbers = #tpu.dot_dimension_numbers<[1], [0], [0], [1], [0, 0, 1, 1], [], []>} : vector<20x128xbf16>, vector<128x64xbf16>, vector<20x64xf32> -> vector<20x64xf32>
    %12 = arith.addf %6, %11 : vector<20x64xf32>
    %c0_12 = arith.constant 0 : index
    %c5 = arith.constant 5 : index
    %c0_13 = arith.constant 0 : index
    %13 = vector.load %arg1[%c0_12, %c5, %c0_13] : memref<1x30x128xbf16, #tpu.memory_space<vmem>>, vector<1x20x128xbf16>
    %14 = vector.shape_cast %13 : vector<1x20x128xbf16> to vector<20x128xbf16>
    %c2 = arith.constant 2 : index
    %c0_14 = arith.constant 0 : index
    %c0_15 = arith.constant 0 : index
    %15 = vector.load %arg2[%c2, %c0_14, %c0_15] : memref<4x128x64xbf16, #tpu.memory_space<vmem>>, vector<1x128x64xbf16>
    %16 = vector.shape_cast %15 : vector<1x128x64xbf16> to vector<128x64xbf16>
    %cst_16 = arith.constant dense<0.000000e+00> : vector<20x64xf32>
    %17 = tpu.matmul %14, %16, %cst_16 {dimension_numbers = #tpu.dot_dimension_numbers<[1], [0], [0], [1], [0, 0, 1, 1], [], []>} : vector<20x128xbf16>, vector<128x64xbf16>, vector<20x64xf32> -> vector<20x64xf32>
    %18 = arith.addf %12, %17 : vector<20x64xf32>
    %c0_17 = arith.constant 0 : index
    %c6 = arith.constant 6 : index
    %c0_18 = arith.constant 0 : index
    %19 = vector.load %arg1[%c0_17, %c6, %c0_18] : memref<1x30x128xbf16, #tpu.memory_space<vmem>>, vector<1x20x128xbf16>
    %20 = vector.shape_cast %19 : vector<1x20x128xbf16> to vector<20x128xbf16>
    %c3 = arith.constant 3 : index
    %c0_19 = arith.constant 0 : index
    %c0_20 = arith.constant 0 : index
    %21 = vector.load %arg2[%c3, %c0_19, %c0_20] : memref<4x128x64xbf16, #tpu.memory_space<vmem>>, vector<1x128x64xbf16>
    %22 = vector.shape_cast %21 : vector<1x128x64xbf16> to vector<128x64xbf16>
    %cst_21 = arith.constant dense<0.000000e+00> : vector<20x64xf32>
    %23 = tpu.matmul %20, %22, %cst_21 {dimension_numbers = #tpu.dot_dimension_numbers<[1], [0], [0], [1], [0, 0, 1, 1], [], []>} : vector<20x128xbf16>, vector<128x64xbf16>, vector<20x64xf32> -> vector<20x64xf32>
    %24 = arith.addf %18, %23 : vector<20x64xf32>
    %c0_22 = arith.constant 0 : index
    %c0_23 = arith.constant 0 : index
    %25 = vector.load %arg3[%c0_22, %c0_23] : memref<1x64xf32, #tpu.memory_space<vmem>>, vector<1x64xf32>
    %26 = vector.broadcast %25 : vector<1x64xf32> to vector<20x64xf32>
    %27 = arith.addf %24, %26 : vector<20x64xf32>
    %cst_24 = arith.constant 0.000000e+00 : f32
    %28 = vector.broadcast %cst_24 : f32 to vector<20x64xf32>
    %29 = arith.cmpf oge, %27, %28 : vector<20x64xf32>
    %cst_25 = arith.constant 2.000000e-01 : f32
    %30 = vector.broadcast %cst_25 : f32 to vector<20x64xf32>
    %31 = arith.mulf %30, %27 : vector<20x64xf32>
    %32 = arith.select %29, %27, %31 : vector<20x64xi1>, vector<20x64xf32>
    %33 = arith.truncf %32 : vector<20x64xf32> to vector<20x64xbf16>
    %c0_26 = arith.constant 0 : index
    %c0_27 = arith.constant 0 : index
    %c0_28 = arith.constant 0 : index
    %34 = vector.load %arg4[%c0_26, %c0_27, %c0_28] : memref<1x20x64xbf16, #tpu.memory_space<vmem>>, vector<1x20x64xbf16>
    %35 = vector.shape_cast %34 : vector<1x20x64xbf16> to vector<20x64xbf16>
    %36 = vector.shape_cast %33 : vector<20x64xbf16> to vector<1x20x64xbf16>
    tpu.vector_store %arg4[%c0_26, %c0_27, %c0_28], %36 {strides = array<i32>} : memref<1x20x64xbf16, #tpu.memory_space<vmem>>, vector<1x20x64xbf16>,
    return
  }
  func.func @transform_0(%arg0: i32) -> (i32, i32, i32) {
    %c0_i32 = arith.constant 0 : i32
    %c0_i32_0 = arith.constant 0 : i32
    %c0_i32_1 = arith.constant 0 : i32
    return %arg0, %c0_i32, %c0_i32_0 : i32, i32, i32
  }
  func.func @transform_1(%arg0: i32) -> (i32, i32, i32) {
    %c0_i32 = arith.constant 0 : i32
    %c0_i32_0 = arith.constant 0 : i32
    %c0_i32_1 = arith.constant 0 : i32
    %c0_i32_2 = arith.constant 0 : i32
    return %c0_i32, %c0_i32_0, %c0_i32_1 : i32, i32, i32
  }
  func.func @transform_2(%arg0: i32) -> (i32, i32) {
    %c0_i32 = arith.constant 0 : i32
    %c0_i32_0 = arith.constant 0 : i32
    %c0_i32_1 = arith.constant 0 : i32
    return %c0_i32, %c0_i32_0 : i32, i32
  }
  func.func @transform_3(%arg0: i32) -> (i32, i32, i32) {
    %c0_i32 = arith.constant 0 : i32
    %c0_i32_0 = arith.constant 0 : i32
    %c0_i32_1 = arith.constant 0 : i32
    return %arg0, %c0_i32, %c0_i32_0 : i32, i32, i32
  }
}

module attributes {stable_mosaic.version = 11 : i64} {
  func.func @_classifier_upsample_kernel(%arg0: i32, %arg1: i32, %arg2: memref<1x12x256xbf16, #tpu.memory_space<vmem>>, %arg3: memref<4x1x256xf32, #tpu.memory_space<vmem>>, %arg4: memref<1x1xf32, #tpu.memory_space<vmem>>, %arg5: memref<128x6xf32, #tpu.memory_space<vmem>>, %arg6: memref<6x512xf32, #tpu.memory_space<vmem>>, %arg7: memref<1x128x512xf32, #tpu.memory_space<vmem>>, %arg8: memref<1x128x512xf32, #tpu.memory_space<vmem>>) attributes {dimension_semantics = [#tpu.dimension_semantics<parallel>, #tpu.dimension_semantics<parallel>], iteration_bounds = array<i64: 2, 4>, scalar_prefetch = 0 : i64, scratch_operands = 0 : i64, tpu.core_type = #tpu.core_type<tc>, window_params = [{transform_indices = @transform_0, window_bounds = array<i64: 1, 12, 256>}, {pipeline_mode = #tpu.pipeline_mode<synchronous>, transform_indices = @transform_1, window_bounds = array<i64: 4, 1, 256>}, {pipeline_mode = #tpu.pipeline_mode<synchronous>, transform_indices = @transform_2, window_bounds = array<i64: 1, 1>}, {transform_indices = @transform_3, window_bounds = array<i64: 128, 6>}, {pipeline_mode = #tpu.pipeline_mode<synchronous>, transform_indices = @transform_4, window_bounds = array<i64: 6, 512>}, {transform_indices = @transform_5, window_bounds = array<i64: 1, 128, 512>}, {transform_indices = @transform_6, window_bounds = array<i64: 1, 128, 512>}]} {
    %cst = arith.constant 0.000000e+00 : f32
    %0 = vector.broadcast %cst : f32 to vector<6x1xf32>
    %c0 = arith.constant 0 : index
    %c0_0 = arith.constant 0 : index
    %c0_1 = arith.constant 0 : index
    %1 = vector.load %arg2[%c0, %c0_0, %c0_1] : memref<1x12x256xbf16, #tpu.memory_space<vmem>>, vector<1x6x256xbf16>
    %2 = vector.shape_cast %1 : vector<1x6x256xbf16> to vector<6x256xbf16>
    %3 = arith.extf %2 : vector<6x256xbf16> to vector<6x256xf32>
    %c0_2 = arith.constant 0 : index
    %c0_3 = arith.constant 0 : index
    %c0_4 = arith.constant 0 : index
    %4 = vector.load %arg3[%c0_2, %c0_3, %c0_4] : memref<4x1x256xf32, #tpu.memory_space<vmem>>, vector<1x1x256xf32>
    %5 = vector.shape_cast %4 : vector<1x1x256xf32> to vector<1x256xf32>
    %6 = vector.broadcast %5 : vector<1x256xf32> to vector<6x256xf32>
    %7 = arith.mulf %3, %6 : vector<6x256xf32>
    %cst_5 = arith.constant dense<0.000000e+00> : vector<6xf32>
    %8 = vector.multi_reduction <add>, %7, %cst_5 [1] : vector<6x256xf32> to vector<6xf32>
    %9 = vector.shape_cast %8 : vector<6xf32> to vector<6x1xf32>
    %10 = arith.addf %0, %9 : vector<6x1xf32>
    %c0_6 = arith.constant 0 : index
    %c1 = arith.constant 1 : index
    %c0_7 = arith.constant 0 : index
    %11 = vector.load %arg2[%c0_6, %c1, %c0_7] : memref<1x12x256xbf16, #tpu.memory_space<vmem>>, vector<1x6x256xbf16>
    %12 = vector.shape_cast %11 : vector<1x6x256xbf16> to vector<6x256xbf16>
    %13 = arith.extf %12 : vector<6x256xbf16> to vector<6x256xf32>
    %c1_8 = arith.constant 1 : index
    %c0_9 = arith.constant 0 : index
    %c0_10 = arith.constant 0 : index
    %14 = vector.load %arg3[%c1_8, %c0_9, %c0_10] : memref<4x1x256xf32, #tpu.memory_space<vmem>>, vector<1x1x256xf32>
    %15 = vector.shape_cast %14 : vector<1x1x256xf32> to vector<1x256xf32>
    %16 = vector.broadcast %15 : vector<1x256xf32> to vector<6x256xf32>
    %17 = arith.mulf %13, %16 : vector<6x256xf32>
    %cst_11 = arith.constant dense<0.000000e+00> : vector<6xf32>
    %18 = vector.multi_reduction <add>, %17, %cst_11 [1] : vector<6x256xf32> to vector<6xf32>
    %19 = vector.shape_cast %18 : vector<6xf32> to vector<6x1xf32>
    %20 = arith.addf %10, %19 : vector<6x1xf32>
    %c0_12 = arith.constant 0 : index
    %c3 = arith.constant 3 : index
    %c0_13 = arith.constant 0 : index
    %21 = vector.load %arg2[%c0_12, %c3, %c0_13] : memref<1x12x256xbf16, #tpu.memory_space<vmem>>, vector<1x6x256xbf16>
    %22 = vector.shape_cast %21 : vector<1x6x256xbf16> to vector<6x256xbf16>
    %23 = arith.extf %22 : vector<6x256xbf16> to vector<6x256xf32>
    %c2 = arith.constant 2 : index
    %c0_14 = arith.constant 0 : index
    %c0_15 = arith.constant 0 : index
    %24 = vector.load %arg3[%c2, %c0_14, %c0_15] : memref<4x1x256xf32, #tpu.memory_space<vmem>>, vector<1x1x256xf32>
    %25 = vector.shape_cast %24 : vector<1x1x256xf32> to vector<1x256xf32>
    %26 = vector.broadcast %25 : vector<1x256xf32> to vector<6x256xf32>
    %27 = arith.mulf %23, %26 : vector<6x256xf32>
    %cst_16 = arith.constant dense<0.000000e+00> : vector<6xf32>
    %28 = vector.multi_reduction <add>, %27, %cst_16 [1] : vector<6x256xf32> to vector<6xf32>
    %29 = vector.shape_cast %28 : vector<6xf32> to vector<6x1xf32>
    %30 = arith.addf %20, %29 : vector<6x1xf32>
    %c0_17 = arith.constant 0 : index
    %c4 = arith.constant 4 : index
    %c0_18 = arith.constant 0 : index
    %31 = vector.load %arg2[%c0_17, %c4, %c0_18] : memref<1x12x256xbf16, #tpu.memory_space<vmem>>, vector<1x6x256xbf16>
    %32 = vector.shape_cast %31 : vector<1x6x256xbf16> to vector<6x256xbf16>
    %33 = arith.extf %32 : vector<6x256xbf16> to vector<6x256xf32>
    %c3_19 = arith.constant 3 : index
    %c0_20 = arith.constant 0 : index
    %c0_21 = arith.constant 0 : index
    %34 = vector.load %arg3[%c3_19, %c0_20, %c0_21] : memref<4x1x256xf32, #tpu.memory_space<vmem>>, vector<1x1x256xf32>
    %35 = vector.shape_cast %34 : vector<1x1x256xf32> to vector<1x256xf32>
    %36 = vector.broadcast %35 : vector<1x256xf32> to vector<6x256xf32>
    %37 = arith.mulf %33, %36 : vector<6x256xf32>
    %cst_22 = arith.constant dense<0.000000e+00> : vector<6xf32>
    %38 = vector.multi_reduction <add>, %37, %cst_22 [1] : vector<6x256xf32> to vector<6xf32>
    %39 = vector.shape_cast %38 : vector<6xf32> to vector<6x1xf32>
    %40 = arith.addf %30, %39 : vector<6x1xf32>
    %c0_23 = arith.constant 0 : index
    %c0_24 = arith.constant 0 : index
    %41 = vector.load %arg4[%c0_23, %c0_24] : memref<1x1xf32, #tpu.memory_space<vmem>>, vector<1x1xf32>
    %42 = vector.broadcast %41 : vector<1x1xf32> to vector<6x1xf32>
    %43 = arith.addf %40, %42 : vector<6x1xf32>
    %c0_25 = arith.constant 0 : index
    %c0_26 = arith.constant 0 : index
    %44 = vector.load %arg6[%c0_25, %c0_26] : memref<6x512xf32, #tpu.memory_space<vmem>>, vector<6x512xf32>
    %45 = vector.broadcast %43 : vector<6x1xf32> to vector<6x512xf32>
    %46 = arith.mulf %45, %44 : vector<6x512xf32>
    %c0_27 = arith.constant 0 : index
    %c0_28 = arith.constant 0 : index
    %47 = vector.load %arg5[%c0_27, %c0_28] : memref<128x6xf32, #tpu.memory_space<vmem>>, vector<128x6xf32>
    %cst_29 = arith.constant dense<0.000000e+00> : vector<128x512xf32>
    %48 = tpu.matmul %47, %46, %cst_29 {dimension_numbers = #tpu.dot_dimension_numbers<[1], [0], [0], [1], [0, 0, 1, 1], [], []>} : vector<128x6xf32>, vector<6x512xf32>, vector<128x512xf32> -> vector<128x512xf32>
    %c0_30 = arith.constant 0 : index
    %c0_31 = arith.constant 0 : index
    %c0_32 = arith.constant 0 : index
    %49 = vector.load %arg7[%c0_30, %c0_31, %c0_32] : memref<1x128x512xf32, #tpu.memory_space<vmem>>, vector<1x128x512xf32>
    %50 = vector.shape_cast %49 : vector<1x128x512xf32> to vector<128x512xf32>
    %51 = vector.shape_cast %48 : vector<128x512xf32> to vector<1x128x512xf32>
    tpu.vector_store %arg7[%c0_30, %c0_31, %c0_32], %51 {strides = array<i32>} : memref<1x128x512xf32, #tpu.memory_space<vmem>>, vector<1x128x512xf32>,
    %52 = arith.negf %48 : vector<128x512xf32>
    %53 = math.exp %52 : vector<128x512xf32>
    %cst_33 = arith.constant 1.000000e+00 : f32
    %54 = vector.broadcast %cst_33 : f32 to vector<128x512xf32>
    %55 = arith.addf %54, %53 : vector<128x512xf32>
    %56 = arith.divf %54, %55 : vector<128x512xf32>
    %c0_34 = arith.constant 0 : index
    %c0_35 = arith.constant 0 : index
    %c0_36 = arith.constant 0 : index
    %57 = vector.load %arg8[%c0_34, %c0_35, %c0_36] : memref<1x128x512xf32, #tpu.memory_space<vmem>>, vector<1x128x512xf32>
    %58 = vector.shape_cast %57 : vector<1x128x512xf32> to vector<128x512xf32>
    %59 = vector.shape_cast %56 : vector<128x512xf32> to vector<1x128x512xf32>
    tpu.vector_store %arg8[%c0_34, %c0_35, %c0_36], %59 {strides = array<i32>} : memref<1x128x512xf32, #tpu.memory_space<vmem>>, vector<1x128x512xf32>,
    return
  }
  func.func @transform_0(%arg0: i32, %arg1: i32) -> (i32, i32, i32) {
    %c0_i32 = arith.constant 0 : i32
    %c0_i32_0 = arith.constant 0 : i32
    %c0_i32_1 = arith.constant 0 : i32
    return %arg0, %c0_i32, %c0_i32_0 : i32, i32, i32
  }
  func.func @transform_1(%arg0: i32, %arg1: i32) -> (i32, i32, i32) {
    %c0_i32 = arith.constant 0 : i32
    %c0_i32_0 = arith.constant 0 : i32
    %c0_i32_1 = arith.constant 0 : i32
    %c0_i32_2 = arith.constant 0 : i32
    return %c0_i32, %c0_i32_0, %c0_i32_1 : i32, i32, i32
  }
  func.func @transform_2(%arg0: i32, %arg1: i32) -> (i32, i32) {
    %c0_i32 = arith.constant 0 : i32
    %c0_i32_0 = arith.constant 0 : i32
    %c0_i32_1 = arith.constant 0 : i32
    return %c0_i32, %c0_i32_0 : i32, i32
  }
  func.func @transform_3(%arg0: i32, %arg1: i32) -> (i32, i32) {
    %c0_i32 = arith.constant 0 : i32
    %c0_i32_0 = arith.constant 0 : i32
    return %arg1, %c0_i32 : i32, i32
  }
  func.func @transform_4(%arg0: i32, %arg1: i32) -> (i32, i32) {
    %c0_i32 = arith.constant 0 : i32
    %c0_i32_0 = arith.constant 0 : i32
    %c0_i32_1 = arith.constant 0 : i32
    return %c0_i32, %c0_i32_0 : i32, i32
  }
  func.func @transform_5(%arg0: i32, %arg1: i32) -> (i32, i32, i32) {
    %c0_i32 = arith.constant 0 : i32
    %c0_i32_0 = arith.constant 0 : i32
    return %arg0, %arg1, %c0_i32 : i32, i32, i32
  }
  func.func @transform_6(%arg0: i32, %arg1: i32) -> (i32, i32, i32) {
    %c0_i32 = arith.constant 0 : i32
    %c0_i32_0 = arith.constant 0 : i32
    return %arg0, %arg1, %c0_i32 : i32, i32, i32
  }
}

</mosaic_0001>

<llo_original>
// kernel: fcdiscriminator_wgan_forward.3
$region0: #{fcdiscriminator_wgan_forward.3}
  #allocation0 [shape = 'u32[]', space=smem, size = 0x4, offset = 0x4, fixed_abs, tag = 'smem constant byte address 0x4 - core index']
  #allocation1 [shape = 'u32[144,128]{1,0:T(1,128)}', space=vmem, size = 0x12000, scoped, tag = 'internal scratch']
  %s0 = inlined_call_operand.vmem [shape: bf16[2,90,16], index: 0, kind: input, shape index: {}]
  %s1 = inlined_call_operand.vmem [shape: bf16[4,16,32], index: 1, kind: input, shape index: {}]
  %s2 = inlined_call_operand.hbm [shape: f32[1,32], index: 2, kind: input, shape index: {}]
  %s3 = inlined_call_operand.vmem [shape: bf16[2,72,32], index: 3, kind: output, shape index: {}]
  %s4 = sld [smem:[#allocation0]]
  $region49: #{fcdiscriminator_wgan_forward.3} parent=0
    _
  %s6 = ssub.s32 1, %s4
  %s7 = scalar_select 0, %s6, %s4
  $region1: #{fcdiscriminator_wgan_forward.3} parent=0
    #allocation2 [shape = 'u8[512]{0}', space=vmem, size = 0x400, scoped, tag = 'input window, operand 2, single buffered']
    #allocation3 [shape = 's32[2]{0}', space=sflag, size = 0x8, scoped, tag = 'scoped memory for fcdiscriminator_wgan_forward.3']
    %8 = vsyncpa [#allocation3], 0
    loop: start=0, step=1, limit=4
    $region2: #{fcdiscriminator_wgan_forward.3} parent=1 // loop_pre_header
      _
    $region3: #{fcdiscriminator_wgan_forward.3} parent=1 // loop_header
      %s10 = sphi 0, %s14
      %p11 = scmp.ge.s32.totalorder %s10, 4
      %s20 = sphi 0, %s22
      %s23 = sphi 0, %s20
      %s24 = sphi 0, %s23
      %s40 = sphi 0, %s24
      %s44 = sphi 0, %s44
      %s46 = sphi 0, %s44
      %s47 = sphi 0, %s46
      %s61 = sphi 0, %s47
      %s65 = sphi 0, %s65
      %s67 = sphi 0, %s65
      %s68 = sphi 0, %s67
      %s82 = sphi 0, %s68
      %s88 = sphi 0, %s90
      %s91 = sphi 0, %s88
      %s92 = sphi 0, %s91
      %s108 = sphi 0, %s92
    $region4: #{fcdiscriminator_wgan_forward.3} parent=1 // loop_header_branch
      %13 = sbr.rel (%p11) target = $region8
    $region5: #{fcdiscriminator_wgan_forward.3} parent=1 // loop_body
      %s15 = ssub.s32 %s10, 1
      %s16 = ssub.s32 %s10, 2
      %s17 = sadd.s32 %s10, 1
      %s18 = ssub.s32 %s10, %s17
      %p19 = scmp.eq.s32.totalorder %s18, 0
      %s21 = sadd.s32 %s20, 1
      %s22 = scalar_select %p19, %s20, %s21
      %p25 = pneg %p19
      %p26 = scmp.eq.s32.totalorder %s10, 1
      %p27 = por %p25, %p26
      %p28 = scmp.ne.s32.totalorder %s20, %s23
      %p29 = scmp.eq.s32.totalorder %s10, 0
      %p30 = por %p28, %p29
      %p31 = scmp.ne.s32.totalorder %s20, %s23
      %p32 = scmp.eq.s32.totalorder %s15, 1
      %p33 = por %p31, %p32
      %p34 = scmp.ne.s32.totalorder %s23, %s24
      %p35 = scmp.eq.s32.totalorder %s15, 0
      %p36 = por %p34, %p35
      %p37 = scmp.ne.s32.totalorder %s23, %s24
      %p38 = scmp.eq.s32.totalorder %s16, 1
      %p39 = por %p37, %p38
      %p41 = scmp.ne.s32.totalorder %s24, %s40
      %p42 = scmp.eq.s32.totalorder %s16, 0
      %p43 = por %p41, %p42
      %s45 = sadd.s32 %s44, 1
      %p48 = scmp.eq.s32.totalorder %s10, 1
      %p49 = scmp.ne.s32.totalorder %s44, %s46
      %p50 = scmp.eq.s32.totalorder %s10, 0
      %p51 = por %p49, %p50
      %p52 = scmp.ne.s32.totalorder %s44, %s46
      %p53 = scmp.eq.s32.totalorder %s15, 1
      %p54 = por %p52, %p53
      %p55 = scmp.ne.s32.totalorder %s46, %s47
      %p56 = scmp.eq.s32.totalorder %s15, 0
      %p57 = por %p55, %p56
      %p58 = scmp.ne.s32.totalorder %s46, %s47
      %p59 = scmp.eq.s32.totalorder %s16, 1
      %p60 = por %p58, %p59
      %p62 = scmp.ne.s32.totalorder %s47, %s61
      %p63 = scmp.eq.s32.totalorder %s16, 0
      %p64 = por %p62, %p63
      %s66 = sadd.s32 %s65, 1
      %p69 = scmp.eq.s32.totalorder %s10, 1
      %p70 = scmp.ne.s32.totalorder %s65, %s67
      %p71 = scmp.eq.s32.totalorder %s10, 0
      %p72 = por %p70, %p71
      %p73 = scmp.ne.s32.totalorder %s65, %s67
      %p74 = scmp.eq.s32.totalorder %s15, 1
      %p75 = por %p73, %p74
      %p76 = scmp.ne.s32.totalorder %s67, %s68
      %p77 = scmp.eq.s32.totalorder %s15, 0
      %p78 = por %p76, %p77
      %p79 = scmp.ne.s32.totalorder %s67, %s68
      %p80 = scmp.eq.s32.totalorder %s16, 1
      %p81 = por %p79, %p80
      %p83 = scmp.ne.s32.totalorder %s68, %s82
      %p84 = scmp.eq.s32.totalorder %s16, 0
      %p85 = por %p83, %p84
      %s86 = ssub.s32 %s10, %s17
      %p87 = scmp.eq.s32.totalorder %s86, 0
      %s89 = sadd.s32 %s88, 1
      %s90 = scalar_select %p87, %s88, %s89
      %p93 = pneg %p87
      %p94 = scmp.eq.s32.totalorder %s10, 1
      %p95 = por %p93, %p94
      %p96 = scmp.ne.s32.totalorder %s88, %s91
      %p97 = scmp.eq.s32.totalorder %s10, 0
      %p98 = por %p96, %p97
      %p99 = scmp.ne.s32.totalorder %s88, %s91
      %p100 = scmp.eq.s32.totalorder %s15, 1
      %p101 = por %p99, %p100
      %p102 = scmp.ne.s32.totalorder %s91, %s92
      %p103 = scmp.eq.s32.totalorder %s15, 0
      %p104 = por %p102, %p103
      %p105 = scmp.ne.s32.totalorder %s91, %s92
      %p106 = scmp.eq.s32.totalorder %s16, 1
      %p107 = por %p105, %p106
      %p109 = scmp.ne.s32.totalorder %s92, %s108
      %p110 = scmp.eq.s32.totalorder %s16, 0
      %p111 = por %p109, %p110
      %p112 = scmp.le.s32.totalorder 1, %s10
      %p113 = scmp.lt.s32.totalorder %s10, 3
      %p114 = pnand %p112, %p113
      %p115 = pneg %p114
      // Predicated region
      $region9: #{fcdiscriminator_wgan_forward.3} parent=5 // pred_check
        _
      $region10: #{fcdiscriminator_wgan_forward.3} parent=5 // pred_check_branch
        %117 = sbr.rel (%p114) target = $region12
      $region11: #{fcdiscriminator_wgan_forward.3} parent=5 // pred_region
        %s118 = ssub.s32 %s10, 1
        // Predicated region
        $region13: #{fcdiscriminator_wgan_forward.3} parent=11 // pred_check
          %p119 = pneg %p57
        $region14: #{fcdiscriminator_wgan_forward.3} parent=11 // pred_check_branch
          %121 = sbr.rel (%p119) target = $region16
        $region15: #{fcdiscriminator_wgan_forward.3} parent=11 // pred_region
          _
        $region16: #{fcdiscriminator_wgan_forward.3} parent=11 // pred_fallthru
          _
        // Predicated region
        $region17: #{fcdiscriminator_wgan_forward.3} parent=11 // pred_check
          %p122 = pneg %p78
        $region18: #{fcdiscriminator_wgan_forward.3} parent=11 // pred_check_branch
          %124 = sbr.rel (%p122) target = $region20
        $region19: #{fcdiscriminator_wgan_forward.3} parent=11 // pred_region
          %s126 = ssub.s32 16, 16
          %127 = vsyncadd [#allocation3], %s126
          %s129 = sshll.u32 [#allocation2], 4
          %s130 = int_to_ptr.vmem [resolvable:$true] %s129
          %132 = dma.hbm_to_vmem [thread:$0]  %s2, 16, %s130, [#allocation3]
        $region20: #{fcdiscriminator_wgan_forward.3} parent=11 // pred_fallthru
          _
      $region12: #{fcdiscriminator_wgan_forward.3} parent=5 // pred_fallthru
        _
      %p133 = scmp.lt.s32.totalorder %s10, 2
      // Predicated region
      $region21: #{fcdiscriminator_wgan_forward.3} parent=5 // pred_check
        %p134 = pneg %p133
      $region22: #{fcdiscriminator_wgan_forward.3} parent=5 // pred_check_branch
        %136 = sbr.rel (%p134) target = $region24
      $region23: #{fcdiscriminator_wgan_forward.3} parent=5 // pred_region
        // Predicated region
        $region25: #{fcdiscriminator_wgan_forward.3} parent=23 // pred_check
          %p137 = pneg %p30
        $region26: #{fcdiscriminator_wgan_forward.3} parent=23 // pred_check_branch
          %139 = sbr.rel (%p137) target = $region28
        $region27: #{fcdiscriminator_wgan_forward.3} parent=23 // pred_region
          %p140 = scmp.lt.s32.totalorder %s10, 1
          %s141 = scalar_select %p140, %s10, 1
          %s142 = smul.addr %s141, 12
          %s143 = smul.addr %s142, 4
          %s144 = scalar_lea.vmem %s0, %s143
        $region28: #{fcdiscriminator_wgan_forward.3} parent=23 // pred_fallthru
          _
      $region24: #{fcdiscriminator_wgan_forward.3} parent=5 // pred_fallthru
        _
      %p145 = scmp.le.s32.totalorder 1, %s10
      %p146 = scmp.lt.s32.totalorder %s10, 3
      %p147 = pnand %p145, %p146
      %p148 = pneg %p147
      // Predicated region
      $region29: #{fcdiscriminator_wgan_forward.3} parent=5 // pred_check
        _
      $region30: #{fcdiscriminator_wgan_forward.3} parent=5 // pred_check_branch
        %150 = sbr.rel (%p147) target = $region32
      $region31: #{fcdiscriminator_wgan_forward.3} parent=5 // pred_region
        %s151 = ssub.s32 %s10, 1
        // Predicated region
        $region33: #{fcdiscriminator_wgan_forward.3} parent=31 // pred_check
          %p152 = pneg %p78
        $region34: #{fcdiscriminator_wgan_forward.3} parent=31 // pred_check_branch
          %154 = sbr.rel (%p152) target = $region36
        $region35: #{fcdiscriminator_wgan_forward.3} parent=31 // pred_region
          %155 = dma.done [#allocation3], 16
        $region36: #{fcdiscriminator_wgan_forward.3} parent=31 // pred_fallthru
          _
        %p156 = scmp.lt.s32.totalorder %s15, 1
        %s157 = scalar_select %p156, %s15, 1
        %s158 = smul.addr %s157, 12
        %s159 = smul.addr %s158, 4
        %s160 = scalar_lea.vmem %s0, %s159
        %p161 = pneg %p36
        %p162 = pneg %p33
        %p163 = pneg %p57
        %p164 = pneg %p54
        %p165 = pneg %p78
        %p166 = pneg %p75
        %p167 = pneg %p104
        %p168 = pneg %p101
        %p169 = scmp.lt.s32.totalorder %s15, 1
        %s170 = scalar_select %p169, %s15, 1
        %s171 = smul.addr %s170, 9
        %s172 = smul.addr %s171, 4
        %s173 = scalar_lea.vmem %s3, %s172
        %p174 = scmp.lt.s32.totalorder %s15, 1
        %s175 = scalar_select %p174, %s15, 1
        %s176 = smul.addr %s175, 12
        %s177 = smul.addr %s176, 4
        %s178 = scalar_lea.vmem %s0, %s177
        %p179 = scmp.lt.s32.totalorder %s15, 1
        %s180 = scalar_select %p179, %s15, 1
        %s181 = smul.addr %s180, 9
        %s182 = smul.addr %s181, 4
        %s183 = scalar_lea.vmem %s3, %s182
        %v185 = vld [vmem:[%s178] sm:$0xf]
        %v186 = vld [vmem:[%s178 + $0x4] sm:$0xf]
        %v187 = vld [vmem:[%s178 + $0x8] sm:$0xf]
        %v188 = vld [vmem:[%s178 + $0xc] sm:$0xf]
        %v189 = vld [vmem:[%s178 + $0x10] sm:$0xf]
        %v190 = vld [vmem:[%s178 + $0x14] sm:$0xf]
        %v191 = vld [vmem:[%s178 + $0x18] sm:$0xf]
        %v192 = vld [vmem:[%s178 + $0x1c] sm:$0xf]
        %v193 = vld [vmem:[%s178 + $0x20] sm:$0xf]
        %v194 = vld [vmem:[%s1] sm:$0xf]
        %v195 = vld [vmem:[%s1 + $0x4] sm:$0xf]
        %v196 = vld [vmem:[%s178 + $0x24] sm:$0x1]
        %s197 = scalar_lea.vmem %s1, 8
        %v198 = vld [vmem:[%s197] sm:$0xf]
        %v199 = vld [vmem:[%s197 + $0x4] sm:$0xf]
        %v210 = vunpack.c.l.b16 %v185
        %v211 = vunpack.c.l.b16 %v186
        %v212 = vunpack.c.l.b16 %v187
        %v213 = vunpack.c.l.b16 %v188
        %v214 = vunpack.c.l.b16 %v189
        %v215 = vunpack.c.l.b16 %v190
        %v216 = vunpack.c.l.b16 %v191
        %v217 = vunpack.c.l.b16 %v192
        %v218 = vunpack.c.l.b16 %v193
        %v219 = vunpack.c.l.b16 %v196
        %v220 = vpack.c.b16 %v211, %v210
        %v221 = vpack.c.b16 %v213, %v212
        %v222 = vpack.c.b16 %v215, %v214
        %v223 = vpack.c.b16 %v217, %v216
        %v224 = vpack.c.b16 %v219, %v218
        %vm225 = vsmask.f32 7424
        %v227 = vshrl.u32 %v220, 16
        %v229 = vshll.u32 %v220, 16
        %v231 = vrot.slane %v229, 1
        %v232 = vor.u32 %v227, %v231
        %v234 = vshll.u32 %v221, 16
        %v236 = vrot.slane %v234, 1
        %v237 = vsel %vm225, %v232, %v236
        %v238 = vshrl.u32 %v221, 16
        %v240 = vor.u32 %v238, %v236
        %v242 = vshll.u32 %v222, 16
        %v244 = vrot.slane %v242, 1
        %v245 = vsel %vm225, %v240, %v244
        %v246 = vshrl.u32 %v222, 16
        %v248 = vor.u32 %v246, %v244
        %v250 = vshll.u32 %v223, 16
        %v252 = vrot.slane %v250, 1
        %v253 = vsel %vm225, %v248, %v252
        %v254 = vshrl.u32 %v223, 16
        %v256 = vor.u32 %v254, %v252
        %v258 = vshll.u32 %v224, 16
        %v260 = vrot.slane %v258, 1
        %v261 = vsel %vm225, %v256, %v260
        %v262 = vshrl.u32 %v224, 16
        %v264 = vor.u32 %v262, %v260
        %v267 = vunpack.c.l.b16 %v198
        %v268 = vunpack.c.l.b16 %v199
        %v269 = vpack.c.b16 %v268, %v267
        %vm271 = vcmask 130048
        %v273 = vsel %vm271, %v237, 0
        %v276 = vsel %vm271, %v245, 0
        %v279 = vsel %vm271, %v253, 0
        %v282 = vsel %vm271, %v261, 0
        %v285 = vsel %vm271, %v264, 0
        %287 = vmatprep.subr.bf16.mxu0 0
        %288 = vmatpush1.bf16.msra.mxu0 %v269
        %289 = vmatprep.subr.bf16.mxu0 0
        %290 = vmatpush1.bf16.msra.mxu0 0
        %291 = vmatprep.subr.bf16.mxu0 0
        %292 = vmatpush1.bf16.msra.mxu0 0
        %293 = vmatprep.subr.bf16.mxu0 0
        %294 = vmatpush1.bf16.msra.mxu0 0
        %295 = vmatprep.subr.bf16.mxu0 0
        %296 = vmatpush1.bf16.msra.mxu0 0
        %297 = vmatprep.subr.bf16.mxu0 0
        %298 = vmatpush1.bf16.msra.mxu0 0
        %299 = vmatprep.subr.bf16.mxu0 0
        %300 = vmatpush1.bf16.msra.mxu0 0
        %301 = vmatprep.subr.bf16.mxu0 0
        %302 = vmatpush1.bf16.msra.mxu0 0
        %303 = vmatprep.subr.bf16.mxu0 0
        %304 = vmatpush1.bf16.msra.mxu0 0
        %305 = vmatprep.subr.bf16.mxu0 0
        %306 = vmatpush1.bf16.msra.mxu0 0
        %307 = vmatprep.subr.bf16.mxu0 0
        %308 = vmatpush1.bf16.msra.mxu0 0
        %309 = vmatprep.subr.bf16.mxu0 0
        %310 = vmatpush1.bf16.msra.mxu0 0
        %311 = vmatprep.subr.bf16.mxu0 0
        %312 = vmatpush1.bf16.msra.mxu0 0
        %313 = vmatprep.subr.bf16.mxu0 0
        %314 = vmatpush1.bf16.msra.mxu0 0
        %315 = vmatprep.subr.bf16.mxu0 0
        %316 = vmatpush1.bf16.msra.mxu0 0
        %317 = vmatprep.subr.bf16.mxu0 0
        %318 = vmatpush1.bf16.msra.mxu0 0
        %319 = vmatprep.mubr.bf16.mxu0 0
        %320 = vmatmul.mubr.bf16.gmra.mrb[0].mxu0 %v273
        %v321 = vpop.f32.mrb[0].mxu0
        %v322 = vadd.f32 0.0, %v321
        %v323 = vpop.f32.mrb[0].mxu0
        %v324 = vpop.f32.mrb[0].mxu0
        %v325 = vadd.f32 0.0, %v324
        %v326 = vpop.f32.mrb[0].mxu0
        %327 = vmatprep.mubr.bf16.mxu0 0
        %328 = vmatmul.mubr.bf16.gmra.mrb[0].mxu0 %v276
        %v329 = vpop.f32.mrb[0].mxu0
        %v330 = vadd.f32 0.0, %v329
        %v331 = vpop.f32.mrb[0].mxu0
        %v332 = vpop.f32.mrb[0].mxu0
        %v333 = vadd.f32 0.0, %v332
        %v334 = vpop.f32.mrb[0].mxu0
        %335 = vmatprep.mubr.bf16.mxu0 0
        %336 = vmatmul.mubr.bf16.gmra.mrb[0].mxu0 %v279
        %v337 = vpop.f32.mrb[0].mxu0
        %v338 = vadd.f32 0.0, %v337
        %v339 = vpop.f32.mrb[0].mxu0
        %v340 = vpop.f32.mrb[0].mxu0
        %v341 = vadd.f32 0.0, %v340
        %v342 = vpop.f32.mrb[0].mxu0
        %343 = vmatprep.mubr.bf16.mxu0 0
        %344 = vmatmul.mubr.bf16.gmra.mrb[0].mxu0 %v282
        %v345 = vpop.f32.mrb[0].mxu0
        %v346 = vadd.f32 0.0, %v345
        %v347 = vpop.f32.mrb[0].mxu0
        %v348 = vpop.f32.mrb[0].mxu0
        %v349 = vadd.f32 0.0, %v348
        %v350 = vpop.f32.mrb[0].mxu0
        %351 = vmatprep.mubr.bf16.mxu0 0
        %352 = vmatmul.mubr.bf16.gmra.mrb[0].mxu0 %v285
        %v353 = vpop.f32.mrb[0].mxu0
        %v354 = vadd.f32 0.0, %v353
        %v355 = vpop.f32.mrb[0].mxu0
        %v356 = vpop.f32.mrb[0].mxu0
        %v357 = vpop.f32.mrb[0].mxu0
        %358 = vdwg.mxu0
        %v359 = vpack.c.b16 %v218, %v218
        %v362 = vunpack.c.l.b16 %v194
        %v363 = vunpack.c.l.b16 %v195
        %v364 = vpack.c.b16 %v363, %v362
        %v366 = vsel %vm271, %v220, 0
        %v368 = vsel %vm271, %v221, 0
        %v370 = vsel %vm271, %v222, 0
        %v372 = vsel %vm271, %v223, 0
        %v375 = vsel %vm271, %v359, 0
        %377 = vmatprep.subr.bf16.mxu0 0
        %378 = vmatpush1.bf16.msra.mxu0 %v364
        %379 = vmatprep.subr.bf16.mxu0 0
        %380 = vmatpush1.bf16.msra.mxu0 0
        %381 = vmatprep.subr.bf16.mxu0 0
        %382 = vmatpush1.bf16.msra.mxu0 0
        %383 = vmatprep.subr.bf16.mxu0 0
        %384 = vmatpush1.bf16.msra.mxu0 0
        %385 = vmatprep.subr.bf16.mxu0 0
        %386 = vmatpush1.bf16.msra.mxu0 0
        %387 = vmatprep.subr.bf16.mxu0 0
        %388 = vmatpush1.bf16.msra.mxu0 0
        %389 = vmatprep.subr.bf16.mxu0 0
        %390 = vmatpush1.bf16.msra.mxu0 0
        %391 = vmatprep.subr.bf16.mxu0 0
        %392 = vmatpush1.bf16.msra.mxu0 0
        %393 = vmatprep.subr.bf16.mxu0 0
        %394 = vmatpush1.bf16.msra.mxu0 0
        %395 = vmatprep.subr.bf16.mxu0 0
        %396 = vmatpush1.bf16.msra.mxu0 0
        %397 = vmatprep.subr.bf16.mxu0 0
        %398 = vmatpush1.bf16.msra.mxu0 0
        %399 = vmatprep.subr.bf16.mxu0 0
        %400 = vmatpush1.bf16.msra.mxu0 0
        %401 = vmatprep.subr.bf16.mxu0 0
        %402 = vmatpush1.bf16.msra.mxu0 0
        %403 = vmatprep.subr.bf16.mxu0 0
        %404 = vmatpush1.bf16.msra.mxu0 0
        %405 = vmatprep.subr.bf16.mxu0 0
        %406 = vmatpush1.bf16.msra.mxu0 0
        %407 = vmatprep.subr.bf16.mxu0 0
        %408 = vmatpush1.bf16.msra.mxu0 0
        %409 = vmatprep.mubr.bf16.mxu0 0
        %410 = vmatmul.mubr.bf16.gmra.mrb[0].mxu0 %v366
        %v411 = vpop.f32.mrb[0].mxu0
        %v412 = vadd.f32 %v322, %v411
        %v413 = vpop.f32.mrb[0].mxu0
        %v414 = vpop.f32.mrb[0].mxu0
        %v415 = vadd.f32 %v325, %v414
        %v416 = vpop.f32.mrb[0].mxu0
        %417 = vmatprep.mubr.bf16.mxu0 0
        %418 = vmatmul.mubr.bf16.gmra.mrb[0].mxu0 %v368
        %v419 = vpop.f32.mrb[0].mxu0
        %v420 = vadd.f32 %v330, %v419
        %v421 = vpop.f32.mrb[0].mxu0
        %v422 = vpop.f32.mrb[0].mxu0
        %v423 = vadd.f32 %v333, %v422
        %v424 = vpop.f32.mrb[0].mxu0
        %425 = vmatprep.mubr.bf16.mxu0 0
        %426 = vmatmul.mubr.bf16.gmra.mrb[0].mxu0 %v370
        %v427 = vpop.f32.mrb[0].mxu0
        %v428 = vadd.f32 %v338, %v427
        %v429 = vpop.f32.mrb[0].mxu0
        %v430 = vpop.f32.mrb[0].mxu0
        %v431 = vadd.f32 %v341, %v430
        %v432 = vpop.f32.mrb[0].mxu0
        %433 = vmatprep.mubr.bf16.mxu0 0
        %434 = vmatmul.mubr.bf16.gmra.mrb[0].mxu0 %v372
        %v435 = vpop.f32.mrb[0].mxu0
        %v436 = vadd.f32 %v346, %v435
        %v437 = vpop.f32.mrb[0].mxu0
        %v438 = vpop.f32.mrb[0].mxu0
        %v439 = vadd.f32 %v349, %v438
        %v440 = vpop.f32.mrb[0].mxu0
        %441 = vmatprep.mubr.bf16.mxu0 0
        %442 = vmatmul.mubr.bf16.gmra.mrb[0].mxu0 %v375
        %v443 = vpop.f32.mrb[0].mxu0
        %v444 = vadd.f32 %v354, %v443
        %v445 = vpop.f32.mrb[0].mxu0
        %v446 = vpop.f32.mrb[0].mxu0
        %v447 = vpop.f32.mrb[0].mxu0
        %448 = vdwg.mxu0
        %v449 = vld [vmem:[%s178 + $0x4] sm:$0xf]
        %v450 = vld [vmem:[%s178 + $0x8] sm:$0xf]
        %v451 = vld [vmem:[%s178 + $0xc] sm:$0xf]
        %v452 = vld [vmem:[%s178 + $0x10] sm:$0xf]
        %v453 = vld [vmem:[%s178 + $0x14] sm:$0xf]
        %v454 = vld [vmem:[%s178 + $0x18] sm:$0xf]
        %v455 = vld [vmem:[%s178 + $0x1c] sm:$0xf]
        %v456 = vld [vmem:[%s178 + $0x20] sm:$0xf]
        %v457 = vld [vmem:[%s178 + $0x24] sm:$0xf]
        %v458 = vld [vmem:[%s178 + $0x28] sm:$0x1]
        %s459 = scalar_lea.vmem %s1, 16
        %v460 = vld [vmem:[%s459] sm:$0xf]
        %v461 = vld [vmem:[%s459 + $0x4] sm:$0xf]
        %v472 = vunpack.c.l.b16 %v449
        %v473 = vunpack.c.l.b16 %v450
        %v474 = vunpack.c.l.b16 %v451
        %v475 = vunpack.c.l.b16 %v452
        %v476 = vunpack.c.l.b16 %v453
        %v477 = vunpack.c.l.b16 %v454
        %v478 = vunpack.c.l.b16 %v455
        %v479 = vunpack.c.l.b16 %v456
        %v480 = vunpack.c.l.b16 %v457
        %v481 = vunpack.c.l.b16 %v458
        %v482 = vpack.c.b16 %v473, %v472
        %v483 = vpack.c.b16 %v475, %v474
        %v484 = vpack.c.b16 %v477, %v476
        %v485 = vpack.c.b16 %v479, %v478
        %v486 = vpack.c.b16 %v481, %v480
        %v488 = vshrl.u32 %v482, 16
        %v490 = vshll.u32 %v482, 16
        %v492 = vrot.slane %v490, 1
        %v493 = vor.u32 %v488, %v492
        %v495 = vshll.u32 %v483, 16
        %v497 = vrot.slane %v495, 1
        %v498 = vsel %vm225, %v493, %v497
        %v499 = vshrl.u32 %v483, 16
        %v501 = vor.u32 %v499, %v497
        %v503 = vshll.u32 %v484, 16
        %v505 = vrot.slane %v503, 1
        %v506 = vsel %vm225, %v501, %v505
        %v507 = vshrl.u32 %v484, 16
        %v509 = vor.u32 %v507, %v505
        %v511 = vshll.u32 %v485, 16
        %v513 = vrot.slane %v511, 1
        %v514 = vsel %vm225, %v509, %v513
        %v515 = vshrl.u32 %v485, 16
        %v517 = vor.u32 %v515, %v513
        %v519 = vshll.u32 %v486, 16
        %v521 = vrot.slane %v519, 1
        %v522 = vsel %vm225, %v517, %v521
        %v523 = vshrl.u32 %v486, 16
        %v525 = vor.u32 %v523, %v521
        %v528 = vunpack.c.l.b16 %v460
        %v529 = vunpack.c.l.b16 %v461
        %v530 = vpack.c.b16 %v529, %v528
        %v533 = vsel %vm271, %v498, 0
        %v536 = vsel %vm271, %v506, 0
        %v539 = vsel %vm271, %v514, 0
        %v542 = vsel %vm271, %v522, 0
        %v545 = vsel %vm271, %v525, 0
        %547 = vmatprep.subr.bf16.mxu0 0
        %548 = vmatpush1.bf16.msra.mxu0 %v530
        %549 = vmatprep.subr.bf16.mxu0 0
        %550 = vmatpush1.bf16.msra.mxu0 0
        %551 = vmatprep.subr.bf16.mxu0 0
        %552 = vmatpush1.bf16.msra.mxu0 0
        %553 = vmatprep.subr.bf16.mxu0 0
        %554 = vmatpush1.bf16.msra.mxu0 0
        %555 = vmatprep.subr.bf16.mxu0 0
        %556 = vmatpush1.bf16.msra.mxu0 0
        %557 = vmatprep.subr.bf16.mxu0 0
        %558 = vmatpush1.bf16.msra.mxu0 0
        %559 = vmatprep.subr.bf16.mxu0 0
        %560 = vmatpush1.bf16.msra.mxu0 0
        %561 = vmatprep.subr.bf16.mxu0 0
        %562 = vmatpush1.bf16.msra.mxu0 0
        %563 = vmatprep.subr.bf16.mxu0 0
        %564 = vmatpush1.bf16.msra.mxu0 0
        %565 = vmatprep.subr.bf16.mxu0 0
        %566 = vmatpush1.bf16.msra.mxu0 0
        %567 = vmatprep.subr.bf16.mxu0 0
        %568 = vmatpush1.bf16.msra.mxu0 0
        %569 = vmatprep.subr.bf16.mxu0 0
        %570 = vmatpush1.bf16.msra.mxu0 0
        %571 = vmatprep.subr.bf16.mxu0 0
        %572 = vmatpush1.bf16.msra.mxu0 0
        %573 = vmatprep.subr.bf16.mxu0 0
        %574 = vmatpush1.bf16.msra.mxu0 0
        %575 = vmatprep.subr.bf16.mxu0 0
        %576 = vmatpush1.bf16.msra.mxu0 0
        %577 = vmatprep.subr.bf16.mxu0 0
        %578 = vmatpush1.bf16.msra.mxu0 0
        %579 = vmatprep.mubr.bf16.mxu0 0
        %580 = vmatmul.mubr.bf16.gmra.mrb[0].mxu0 %v533
        %v581 = vpop.f32.mrb[0].mxu0
        %v582 = vadd.f32 0.0, %v581
        %v583 = vpop.f32.mrb[0].mxu0
        %v584 = vpop.f32.mrb[0].mxu0
        %v585 = vadd.f32 0.0, %v584
        %v586 = vpop.f32.mrb[0].mxu0
        %587 = vmatprep.mubr.bf16.mxu0 0
        %588 = vmatmul.mubr.bf16.gmra.mrb[0].mxu0 %v536
        %v589 = vpop.f32.mrb[0].mxu0
        %v590 = vadd.f32 0.0, %v589
        %v591 = vpop.f32.mrb[0].mxu0
        %v592 = vpop.f32.mrb[0].mxu0
        %v593 = vadd.f32 0.0, %v592
        %v594 = vpop.f32.mrb[0].mxu0
        %595 = vmatprep.mubr.bf16.mxu0 0
        %596 = vmatmul.mubr.bf16.gmra.mrb[0].mxu0 %v539
        %v597 = vpop.f32.mrb[0].mxu0
        %v598 = vadd.f32 0.0, %v597
        %v599 = vpop.f32.mrb[0].mxu0
        %v600 = vpop.f32.mrb[0].mxu0
        %v601 = vadd.f32 0.0, %v600
        %v602 = vpop.f32.mrb[0].mxu0
        %603 = vmatprep.mubr.bf16.mxu0 0
        %604 = vmatmul.mubr.bf16.gmra.mrb[0].mxu0 %v542
        %v605 = vpop.f32.mrb[0].mxu0
        %v606 = vadd.f32 0.0, %v605
        %v607 = vpop.f32.mrb[0].mxu0
        %v608 = vpop.f32.mrb[0].mxu0
        %v609 = vadd.f32 0.0, %v608
        %v610 = vpop.f32.mrb[0].mxu0
        %611 = vmatprep.mubr.bf16.mxu0 0
        %612 = vmatmul.mubr.bf16.gmra.mrb[0].mxu0 %v545
        %v613 = vpop.f32.mrb[0].mxu0
        %v614 = vadd.f32 0.0, %v613
        %v615 = vpop.f32.mrb[0].mxu0
        %v616 = vpop.f32.mrb[0].mxu0
        %v617 = vpop.f32.mrb[0].mxu0
        %618 = vdwg.mxu0
        %v619 = vadd.f32 %v412, %v582
        %v620 = vadd.f32 %v415, %v585
        %v621 = vadd.f32 %v420, %v590
        %v622 = vadd.f32 %v423, %v593
        %v623 = vadd.f32 %v428, %v598
        %v624 = vadd.f32 %v431, %v601
        %v625 = vadd.f32 %v436, %v606
        %v626 = vadd.f32 %v439, %v609
        %v627 = vadd.f32 %v444, %v614
        %v628 = vld [vmem:[%s178 + $0x4] sm:$0xe]
        %s629 = scalar_lea.vmem %s1, 24
        %v630 = vld [vmem:[%s629] sm:$0xf]
        %v631 = vld [vmem:[%s629 + $0x4] sm:$0xf]
        %v633 = vunpack.c.l.b16 %v628
        %v634 = vpack.c.b16 %v473, %v633
        %vm635 = vcmask 1046528
        %v636 = vrot.slane %v634, 1
        %v637 = vrot.slane %v483, 1
        %v638 = vsel %vm635, %v636, %v637
        %v639 = vrot.slane %v484, 1
        %v640 = vsel %vm635, %v637, %v639
        %v641 = vrot.slane %v485, 1
        %v642 = vsel %vm635, %v639, %v641
        %v643 = vrot.slane %v486, 1
        %v644 = vsel %vm635, %v641, %v643
        %v647 = vunpack.c.l.b16 %v630
        %v648 = vunpack.c.l.b16 %v631
        %v649 = vpack.c.b16 %v648, %v647
        %v652 = vsel %vm271, %v638, 0
        %v655 = vsel %vm271, %v640, 0
        %v658 = vsel %vm271, %v642, 0
        %v661 = vsel %vm271, %v644, 0
        %v664 = vsel %vm271, %v643, 0
        %666 = vmatprep.subr.bf16.mxu0 0
        %667 = vmatpush1.bf16.msra.mxu0 %v649
        %668 = vmatprep.subr.bf16.mxu0 0
        %669 = vmatpush1.bf16.msra.mxu0 0
        %670 = vmatprep.subr.bf16.mxu0 0
        %671 = vmatpush1.bf16.msra.mxu0 0
        %672 = vmatprep.subr.bf16.mxu0 0
        %673 = vmatpush1.bf16.msra.mxu0 0
        %674 = vmatprep.subr.bf16.mxu0 0
        %675 = vmatpush1.bf16.msra.mxu0 0
        %676 = vmatprep.subr.bf16.mxu0 0
        %677 = vmatpush1.bf16.msra.mxu0 0
        %678 = vmatprep.subr.bf16.mxu0 0
        %679 = vmatpush1.bf16.msra.mxu0 0
        %680 = vmatprep.subr.bf16.mxu0 0
        %681 = vmatpush1.bf16.msra.mxu0 0
        %682 = vmatprep.subr.bf16.mxu0 0
        %683 = vmatpush1.bf16.msra.mxu0 0
        %684 = vmatprep.subr.bf16.mxu0 0
        %685 = vmatpush1.bf16.msra.mxu0 0
        %686 = vmatprep.subr.bf16.mxu0 0
        %687 = vmatpush1.bf16.msra.mxu0 0
        %688 = vmatprep.subr.bf16.mxu0 0
        %689 = vmatpush1.bf16.msra.mxu0 0
        %690 = vmatprep.subr.bf16.mxu0 0
        %691 = vmatpush1.bf16.msra.mxu0 0
        %692 = vmatprep.subr.bf16.mxu0 0
        %693 = vmatpush1.bf16.msra.mxu0 0
        %694 = vmatprep.subr.bf16.mxu0 0
        %695 = vmatpush1.bf16.msra.mxu0 0
        %696 = vmatprep.subr.bf16.mxu0 0
        %697 = vmatpush1.bf16.msra.mxu0 0
        %698 = vmatprep.mubr.bf16.mxu0 0
        %699 = vmatmul.mubr.bf16.gmra.mrb[0].mxu0 %v652
        %v700 = vpop.f32.mrb[0].mxu0
        %v701 = vadd.f32 0.0, %v700
        %v702 = vpop.f32.mrb[0].mxu0
        %v703 = vpop.f32.mrb[0].mxu0
        %v704 = vadd.f32 0.0, %v703
        %v705 = vpop.f32.mrb[0].mxu0
        %706 = vmatprep.mubr.bf16.mxu0 0
        %707 = vmatmul.mubr.bf16.gmra.mrb[0].mxu0 %v655
        %v708 = vpop.f32.mrb[0].mxu0
        %v709 = vadd.f32 0.0, %v708
        %v710 = vpop.f32.mrb[0].mxu0
        %v711 = vpop.f32.mrb[0].mxu0
        %v712 = vadd.f32 0.0, %v711
        %v713 = vpop.f32.mrb[0].mxu0
        %714 = vmatprep.mubr.bf16.mxu0 0
        %715 = vmatmul.mubr.bf16.gmra.mrb[0].mxu0 %v658
        %v716 = vpop.f32.mrb[0].mxu0
        %v717 = vadd.f32 0.0, %v716
        %v718 = vpop.f32.mrb[0].mxu0
        %v719 = vpop.f32.mrb[0].mxu0
        %v720 = vadd.f32 0.0, %v719
        %v721 = vpop.f32.mrb[0].mxu0
        %722 = vmatprep.mubr.bf16.mxu0 0
        %723 = vmatmul.mubr.bf16.gmra.mrb[0].mxu0 %v661
        %v724 = vpop.f32.mrb[0].mxu0
        %v725 = vadd.f32 0.0, %v724
        %v726 = vpop.f32.mrb[0].mxu0
        %v727 = vpop.f32.mrb[0].mxu0
        %v728 = vadd.f32 0.0, %v727
        %v729 = vpop.f32.mrb[0].mxu0
        %730 = vmatprep.mubr.bf16.mxu0 0
        %731 = vmatmul.mubr.bf16.gmra.mrb[0].mxu0 %v664
        %v732 = vpop.f32.mrb[0].mxu0
        %v733 = vadd.f32 0.0, %v732
        %v734 = vpop.f32.mrb[0].mxu0
        %v735 = vpop.f32.mrb[0].mxu0
        %v736 = vpop.f32.mrb[0].mxu0
        %737 = vdwg.mxu0
        %v738 = vadd.f32 %v619, %v701
        %v739 = vadd.f32 %v620, %v704
        %v740 = vadd.f32 %v621, %v709
        %v741 = vadd.f32 %v622, %v712
        %v742 = vadd.f32 %v623, %v717
        %v743 = vadd.f32 %v624, %v720
        %v744 = vadd.f32 %v625, %v725
        %v745 = vadd.f32 %v626, %v728
        %v746 = vadd.f32 %v627, %v733
        %v747 = vld [vmem:[#allocation2] sm:$0x1]
        %v749 = vlaneseq
        %v750 = vshrl.u32 %v749, 7
        %v751 = vsub.s32 0, %v750
        %v752 = vrot.slane %v747, %v751
        %v754 = vadd.f32 %v738, %v752
        %v755 = vadd.f32 %v739, %v752
        %v756 = vadd.f32 %v740, %v752
        %v757 = vadd.f32 %v741, %v752
        %v758 = vadd.f32 %v742, %v752
        %v759 = vadd.f32 %v743, %v752
        %v760 = vadd.f32 %v744, %v752
        %v761 = vadd.f32 %v745, %v752
        %v762 = vadd.f32 %v746, %v752
        %vm763 = vcmp.ge.f32.partialorder %v754, 0.0
        %vm764 = vcmp.ge.f32.partialorder %v755, 0.0
        %vm765 = vcmp.ge.f32.partialorder %v756, 0.0
        %vm766 = vcmp.ge.f32.partialorder %v757, 0.0
        %vm767 = vcmp.ge.f32.partialorder %v758, 0.0
        %vm768 = vcmp.ge.f32.partialorder %v759, 0.0
        %vm769 = vcmp.ge.f32.partialorder %v760, 0.0
        %vm770 = vcmp.ge.f32.partialorder %v761, 0.0
        %vm771 = vcmp.ge.f32.partialorder %v762, 0.0
        %v772 = vmul.f32 %v754, 0.2
        %v773 = vmul.f32 %v755, 0.2
        %v774 = vmul.f32 %v756, 0.2
        %v775 = vmul.f32 %v757, 0.2
        %v776 = vmul.f32 %v758, 0.2
        %v777 = vmul.f32 %v759, 0.2
        %v778 = vmul.f32 %v760, 0.2
        %v779 = vmul.f32 %v761, 0.2
        %v780 = vmul.f32 %v762, 0.2
        %v781 = vsel %vm763, %v754, %v772
        %v782 = vsel %vm764, %v755, %v773
        %v783 = vsel %vm765, %v756, %v774
        %v784 = vsel %vm766, %v757, %v775
        %v785 = vsel %vm767, %v758, %v776
        %v786 = vsel %vm768, %v759, %v777
        %v787 = vsel %vm769, %v760, %v778
        %v788 = vsel %vm770, %v761, %v779
        %v789 = vsel %vm771, %v762, %v780
        %v790 = vpack.c.bf16 %v782, %v781
        %v791 = vpack.c.bf16 %v784, %v783
        %v792 = vpack.c.bf16 %v786, %v785
        %v793 = vpack.c.bf16 %v788, %v787
        %v794 = vpack.c.bf16 %v789, %v789
        %v800 = vunpack.c.l.b16 %v790
        %v801 = vunpack.c.h.b16 %v790
        %v802 = vunpack.c.l.b16 %v791
        %v803 = vunpack.c.h.b16 %v791
        %v804 = vunpack.c.l.b16 %v792
        %v805 = vunpack.c.h.b16 %v792
        %v806 = vunpack.c.l.b16 %v793
        %v807 = vunpack.c.h.b16 %v793
        %v808 = vunpack.c.l.b16 %v794
        %v809 = vpack.c.b16 %v800, %v800
        %v810 = vpack.c.b16 %v801, %v801
        %v811 = vpack.c.b16 %v802, %v802
        %v812 = vpack.c.b16 %v803, %v803
        %v813 = vpack.c.b16 %v804, %v804
        %v814 = vpack.c.b16 %v805, %v805
        %v815 = vpack.c.b16 %v806, %v806
        %v816 = vpack.c.b16 %v807, %v807
        %v817 = vpack.c.b16 %v808, %v808
        %vm827 = vcmask 257024
        %828 = vst.msk [vmem:[%s183] sm:$0xf] %vm827, %v809
        %829 = vst.msk [vmem:[%s183 + $0x4] sm:$0xf] %vm827, %v810
        %830 = vst.msk [vmem:[%s183 + $0x8] sm:$0xf] %vm827, %v811
        %831 = vst.msk [vmem:[%s183 + $0xc] sm:$0xf] %vm827, %v812
        %832 = vst.msk [vmem:[%s183 + $0x10] sm:$0xf] %vm827, %v813
        %833 = vst.msk [vmem:[%s183 + $0x14] sm:$0xf] %vm827, %v814
        %834 = vst.msk [vmem:[%s183 + $0x18] sm:$0xf] %vm827, %v815
        %835 = vst.msk [vmem:[%s183 + $0x1c] sm:$0xf] %vm827, %v816
        %836 = vst.msk [vmem:[%s183 + $0x20] sm:$0xf] %vm827, %v817
        %p837 = scmp.lt.s32.totalorder %s15, 1
        %s838 = scalar_select %p837, %s15, 1
        %s839 = smul.addr %s838, 9
        %s840 = smul.addr %s839, 4
        %s841 = scalar_lea.vmem %s3, %s840
        // Predicated region
        $region37: #{fcdiscriminator_wgan_forward.3} parent=31 // pred_check
          %p842 = pneg %p101
        $region38: #{fcdiscriminator_wgan_forward.3} parent=31 // pred_check_branch
          %844 = sbr.rel (%p842) target = $region40
        $region39: #{fcdiscriminator_wgan_forward.3} parent=31 // pred_region
          _
        $region40: #{fcdiscriminator_wgan_forward.3} parent=31 // pred_fallthru
          _
      $region32: #{fcdiscriminator_wgan_forward.3} parent=5 // pred_fallthru
        _
      %p845 = scmp.le.s32.totalorder 2, %s10
      // Predicated region
      $region41: #{fcdiscriminator_wgan_forward.3} parent=5 // pred_check
        %p846 = pneg %p845
      $region42: #{fcdiscriminator_wgan_forward.3} parent=5 // pred_check_branch
        %848 = sbr.rel (%p846) target = $region44
      $region43: #{fcdiscriminator_wgan_forward.3} parent=5 // pred_region
        %s849 = ssub.s32 %s10, 2
        // Predicated region
        $region45: #{fcdiscriminator_wgan_forward.3} parent=43 // pred_check
          %p850 = pneg %p107
        $region46: #{fcdiscriminator_wgan_forward.3} parent=43 // pred_check_branch
          %852 = sbr.rel (%p850) target = $region48
        $region47: #{fcdiscriminator_wgan_forward.3} parent=43 // pred_region
          %p853 = scmp.lt.s32.totalorder %s16, 1
          %s854 = scalar_select %p853, %s16, 1
          %s855 = smul.addr %s854, 9
          %s856 = smul.addr %s855, 4
          %s857 = scalar_lea.vmem %s3, %s856
        $region48: #{fcdiscriminator_wgan_forward.3} parent=43 // pred_fallthru
          _
      $region44: #{fcdiscriminator_wgan_forward.3} parent=5 // pred_fallthru
        _
    $region6: #{fcdiscriminator_wgan_forward.3} parent=1 // loop_footer
      %s14 = sadd.s32 1, %s10
    $region7: #{fcdiscriminator_wgan_forward.3} parent=1 // loop_footer_branch
      %9 = sbr.rel target = $region3
    $region8: #{fcdiscriminator_wgan_forward.3} parent=1 // loop_exit
      _
    %858 = vsyncpa [#allocation3], 1
    %s859 = scalar_lea.sflag [#allocation3], 1
    %860 = vsyncpa %s859, 1

// kernel: fcdiscriminator_wgan_forward.4
$region0: #{fcdiscriminator_wgan_forward.4}
  #allocation0 [shape = 'u32[]', space=smem, size = 0x4, offset = 0x4, fixed_abs, tag = 'smem constant byte address 0x4 - core index']
  #allocation1 [shape = 'u32[144,128]{1,0:T(1,128)}', space=vmem, size = 0x12000, scoped, tag = 'internal scratch']
  %s0 = inlined_call_operand.vmem [shape: bf16[2,30,128], index: 0, kind: input, shape index: {}]
  %s1 = inlined_call_operand.vmem [shape: bf16[4,128,64], index: 1, kind: input, shape index: {}]
  %s2 = inlined_call_operand.vmem [shape: f32[1,64], index: 2, kind: input, shape index: {}]
  %s3 = inlined_call_operand.vmem [shape: bf16[2,20,64], index: 3, kind: output, shape index: {}]
  %s4 = sld [smem:[#allocation0]]
  $region45: #{fcdiscriminator_wgan_forward.4} parent=0
    _
  %s6 = ssub.s32 1, %s4
  %s7 = scalar_select 0, %s6, %s4
  loop: start=0, step=1, limit=4
  $region2: #{fcdiscriminator_wgan_forward.4} parent=0 // loop_pre_header
    _
  $region3: #{fcdiscriminator_wgan_forward.4} parent=0 // loop_header
    %s9 = sphi 0, %s13
    %p10 = scmp.ge.s32.totalorder %s9, 4
    %s19 = sphi 0, %s21
    %s22 = sphi 0, %s19
    %s23 = sphi 0, %s22
    %s39 = sphi 0, %s23
    %s43 = sphi 0, %s43
    %s45 = sphi 0, %s43
    %s46 = sphi 0, %s45
    %s60 = sphi 0, %s46
    %s64 = sphi 0, %s64
    %s66 = sphi 0, %s64
    %s67 = sphi 0, %s66
    %s81 = sphi 0, %s67
    %s87 = sphi 0, %s89
    %s90 = sphi 0, %s87
    %s91 = sphi 0, %s90
    %s107 = sphi 0, %s91
  $region4: #{fcdiscriminator_wgan_forward.4} parent=0 // loop_header_branch
    %12 = sbr.rel (%p10) target = $region8
  $region5: #{fcdiscriminator_wgan_forward.4} parent=0 // loop_body
    %s14 = ssub.s32 %s9, 1
    %s15 = ssub.s32 %s9, 2
    %s16 = sadd.s32 %s9, 1
    %s17 = ssub.s32 %s9, %s16
    %p18 = scmp.eq.s32.totalorder %s17, 0
    %s20 = sadd.s32 %s19, 1
    %s21 = scalar_select %p18, %s19, %s20
    %p24 = pneg %p18
    %p25 = scmp.eq.s32.totalorder %s9, 1
    %p26 = por %p24, %p25
    %p27 = scmp.ne.s32.totalorder %s19, %s22
    %p28 = scmp.eq.s32.totalorder %s9, 0
    %p29 = por %p27, %p28
    %p30 = scmp.ne.s32.totalorder %s19, %s22
    %p31 = scmp.eq.s32.totalorder %s14, 1
    %p32 = por %p30, %p31
    %p33 = scmp.ne.s32.totalorder %s22, %s23
    %p34 = scmp.eq.s32.totalorder %s14, 0
    %p35 = por %p33, %p34
    %p36 = scmp.ne.s32.totalorder %s22, %s23
    %p37 = scmp.eq.s32.totalorder %s15, 1
    %p38 = por %p36, %p37
    %p40 = scmp.ne.s32.totalorder %s23, %s39
    %p41 = scmp.eq.s32.totalorder %s15, 0
    %p42 = por %p40, %p41
    %s44 = sadd.s32 %s43, 1
    %p47 = scmp.eq.s32.totalorder %s9, 1
    %p48 = scmp.ne.s32.totalorder %s43, %s45
    %p49 = scmp.eq.s32.totalorder %s9, 0
    %p50 = por %p48, %p49
    %p51 = scmp.ne.s32.totalorder %s43, %s45
    %p52 = scmp.eq.s32.totalorder %s14, 1
    %p53 = por %p51, %p52
    %p54 = scmp.ne.s32.totalorder %s45, %s46
    %p55 = scmp.eq.s32.totalorder %s14, 0
    %p56 = por %p54, %p55
    %p57 = scmp.ne.s32.totalorder %s45, %s46
    %p58 = scmp.eq.s32.totalorder %s15, 1
    %p59 = por %p57, %p58
    %p61 = scmp.ne.s32.totalorder %s46, %s60
    %p62 = scmp.eq.s32.totalorder %s15, 0
    %p63 = por %p61, %p62
    %s65 = sadd.s32 %s64, 1
    %p68 = scmp.eq.s32.totalorder %s9, 1
    %p69 = scmp.ne.s32.totalorder %s64, %s66
    %p70 = scmp.eq.s32.totalorder %s9, 0
    %p71 = por %p69, %p70
    %p72 = scmp.ne.s32.totalorder %s64, %s66
    %p73 = scmp.eq.s32.totalorder %s14, 1
    %p74 = por %p72, %p73
    %p75 = scmp.ne.s32.totalorder %s66, %s67
    %p76 = scmp.eq.s32.totalorder %s14, 0
    %p77 = por %p75, %p76
    %p78 = scmp.ne.s32.totalorder %s66, %s67
    %p79 = scmp.eq.s32.totalorder %s15, 1
    %p80 = por %p78, %p79
    %p82 = scmp.ne.s32.totalorder %s67, %s81
    %p83 = scmp.eq.s32.totalorder %s15, 0
    %p84 = por %p82, %p83
    %s85 = ssub.s32 %s9, %s16
    %p86 = scmp.eq.s32.totalorder %s85, 0
    %s88 = sadd.s32 %s87, 1
    %s89 = scalar_select %p86, %s87, %s88
    %p92 = pneg %p86
    %p93 = scmp.eq.s32.totalorder %s9, 1
    %p94 = por %p92, %p93
    %p95 = scmp.ne.s32.totalorder %s87, %s90
    %p96 = scmp.eq.s32.totalorder %s9, 0
    %p97 = por %p95, %p96
    %p98 = scmp.ne.s32.totalorder %s87, %s90
    %p99 = scmp.eq.s32.totalorder %s14, 1
    %p100 = por %p98, %p99
    %p101 = scmp.ne.s32.totalorder %s90, %s91
    %p102 = scmp.eq.s32.totalorder %s14, 0
    %p103 = por %p101, %p102
    %p104 = scmp.ne.s32.totalorder %s90, %s91
    %p105 = scmp.eq.s32.totalorder %s15, 1
    %p106 = por %p104, %p105
    %p108 = scmp.ne.s32.totalorder %s91, %s107
    %p109 = scmp.eq.s32.totalorder %s15, 0
    %p110 = por %p108, %p109
    %p111 = scmp.le.s32.totalorder 1, %s9
    %p112 = scmp.lt.s32.totalorder %s9, 3
    %p113 = pnand %p111, %p112
    %p114 = pneg %p113
    // Predicated region
    $region9: #{fcdiscriminator_wgan_forward.4} parent=5 // pred_check
      _
    $region10: #{fcdiscriminator_wgan_forward.4} parent=5 // pred_check_branch
      %116 = sbr.rel (%p113) target = $region12
    $region11: #{fcdiscriminator_wgan_forward.4} parent=5 // pred_region
      %s117 = ssub.s32 %s9, 1
      // Predicated region
      $region13: #{fcdiscriminator_wgan_forward.4} parent=11 // pred_check
        %p118 = pneg %p56
      $region14: #{fcdiscriminator_wgan_forward.4} parent=11 // pred_check_branch
        %120 = sbr.rel (%p118) target = $region16
      $region15: #{fcdiscriminator_wgan_forward.4} parent=11 // pred_region
        _
      $region16: #{fcdiscriminator_wgan_forward.4} parent=11 // pred_fallthru
        _
      // Predicated region
      $region17: #{fcdiscriminator_wgan_forward.4} parent=11 // pred_check
        %p121 = pneg %p77
      $region18: #{fcdiscriminator_wgan_forward.4} parent=11 // pred_check_branch
        %123 = sbr.rel (%p121) target = $region20
      $region19: #{fcdiscriminator_wgan_forward.4} parent=11 // pred_region
        _
      $region20: #{fcdiscriminator_wgan_forward.4} parent=11 // pred_fallthru
        _
    $region12: #{fcdiscriminator_wgan_forward.4} parent=5 // pred_fallthru
      _
    %p124 = scmp.lt.s32.totalorder %s9, 2
    // Predicated region
    $region21: #{fcdiscriminator_wgan_forward.4} parent=5 // pred_check
      %p125 = pneg %p124
    $region22: #{fcdiscriminator_wgan_forward.4} parent=5 // pred_check_branch
      %127 = sbr.rel (%p125) target = $region24
    $region23: #{fcdiscriminator_wgan_forward.4} parent=5 // pred_region
      // Predicated region
      $region25: #{fcdiscriminator_wgan_forward.4} parent=23 // pred_check
        %p128 = pneg %p29
      $region26: #{fcdiscriminator_wgan_forward.4} parent=23 // pred_check_branch
        %130 = sbr.rel (%p128) target = $region28
      $region27: #{fcdiscriminator_wgan_forward.4} parent=23 // pred_region
        %p131 = scmp.lt.s32.totalorder %s9, 1
        %s132 = scalar_select %p131, %s9, 1
        %s133 = smul.addr %s132, 4
        %s134 = smul.addr %s133, 4
        %s135 = scalar_lea.vmem %s0, %s134
      $region28: #{fcdiscriminator_wgan_forward.4} parent=23 // pred_fallthru
        _
    $region24: #{fcdiscriminator_wgan_forward.4} parent=5 // pred_fallthru
      _
    %p136 = scmp.le.s32.totalorder 1, %s9
    %p137 = scmp.lt.s32.totalorder %s9, 3
    %p138 = pnand %p136, %p137
    %p139 = pneg %p138
    // Predicated region
    $region29: #{fcdiscriminator_wgan_forward.4} parent=5 // pred_check
      _
    $region30: #{fcdiscriminator_wgan_forward.4} parent=5 // pred_check_branch
      %141 = sbr.rel (%p138) target = $region32
    $region31: #{fcdiscriminator_wgan_forward.4} parent=5 // pred_region
      %s142 = ssub.s32 %s9, 1
      %p143 = scmp.lt.s32.totalorder %s14, 1
      %s144 = scalar_select %p143, %s14, 1
      %s145 = smul.addr %s144, 4
      %s146 = smul.addr %s145, 4
      %s147 = scalar_lea.vmem %s0, %s146
      %p148 = pneg %p35
      %p149 = pneg %p32
      %p150 = pneg %p56
      %p151 = pneg %p53
      %p152 = pneg %p77
      %p153 = pneg %p74
      %p154 = pneg %p103
      %p155 = pneg %p100
      %p156 = scmp.lt.s32.totalorder %s14, 1
      %s157 = scalar_select %p156, %s14, 1
      %s158 = smul.addr %s157, 3
      %s159 = smul.addr %s158, 4
      %s160 = scalar_lea.vmem %s3, %s159
      %p161 = scmp.lt.s32.totalorder %s14, 1
      %s162 = scalar_select %p161, %s14, 1
      %s163 = smul.addr %s162, 4
      %s164 = smul.addr %s163, 4
      %s165 = scalar_lea.vmem %s0, %s164
      %p166 = scmp.lt.s32.totalorder %s14, 1
      %s167 = scalar_select %p166, %s14, 1
      %s168 = smul.addr %s167, 3
      %s169 = smul.addr %s168, 4
      %s170 = scalar_lea.vmem %s3, %s169
      %v172 = vld [vmem:[%s165] sm:$0xf]
      %v173 = vld [vmem:[%s165 + $0x4] sm:$0xf]
      %v174 = vld [vmem:[%s165 + $0x8] sm:$0x3]
      %v175 = vld [vmem:[%s1] sm:$0xf]
      %v176 = vld [vmem:[%s1 + $0x4] sm:$0xf]
      %v177 = vld [vmem:[%s1 + $0x8] sm:$0xf]
      %v178 = vld [vmem:[%s1 + $0xc] sm:$0xf]
      %v179 = vld [vmem:[%s1 + $0x10] sm:$0xf]
      %v180 = vld [vmem:[%s1 + $0x14] sm:$0xf]
      %v181 = vld [vmem:[%s1 + $0x18] sm:$0xf]
      %v182 = vld [vmem:[%s1 + $0x1c] sm:$0xf]
      %v183 = vld [vmem:[%s1 + $0x20] sm:$0xf]
      %v184 = vld [vmem:[%s1 + $0x24] sm:$0xf]
      %v185 = vld [vmem:[%s1 + $0x28] sm:$0xf]
      %v186 = vld [vmem:[%s1 + $0x2c] sm:$0xf]
      %v187 = vld [vmem:[%s1 + $0x30] sm:$0xf]
      %v188 = vld [vmem:[%s1 + $0x34] sm:$0xf]
      %v189 = vld [vmem:[%s1 + $0x38] sm:$0xf]
      %v190 = vld [vmem:[%s1 + $0x3c] sm:$0xf]
      %v191 = vld [vmem:[%s165 + $0x8] sm:$0x7]
      %s192 = scalar_lea.vmem %s1, 64
      %v193 = vld [vmem:[%s192] sm:$0xf]
      %v194 = vld [vmem:[%s192 + $0x4] sm:$0xf]
      %v195 = vld [vmem:[%s192 + $0x8] sm:$0xf]
      %v196 = vld [vmem:[%s192 + $0xc] sm:$0xf]
      %v197 = vld [vmem:[%s192 + $0x10] sm:$0xf]
      %v198 = vld [vmem:[%s192 + $0x14] sm:$0xf]
      %v199 = vld [vmem:[%s192 + $0x18] sm:$0xf]
      %v200 = vld [vmem:[%s192 + $0x1c] sm:$0xf]
      %v201 = vld [vmem:[%s192 + $0x20] sm:$0xf]
      %v202 = vld [vmem:[%s192 + $0x24] sm:$0xf]
      %v203 = vld [vmem:[%s192 + $0x28] sm:$0xf]
      %v204 = vld [vmem:[%s192 + $0x2c] sm:$0xf]
      %v205 = vld [vmem:[%s192 + $0x30] sm:$0xf]
      %v206 = vld [vmem:[%s192 + $0x34] sm:$0xf]
      %v207 = vld [vmem:[%s192 + $0x38] sm:$0xf]
      %v208 = vld [vmem:[%s192 + $0x3c] sm:$0xf]
      %v212 = vunpack.c.l.b16 %v172
      %v213 = vunpack.c.l.b16 %v173
      %v214 = vunpack.c.l.b16 %v191
      %v215 = vpack.c.b16 %v213, %v212
      %v216 = vpack.c.b16 %v214, %v214
      %vm217 = vsmask.f32 7424
      %v219 = vshrl.u32 %v215, 16
      %v221 = vshll.u32 %v215, 16
      %v223 = vrot.slane %v221, 1
      %v224 = vor.u32 %v219, %v223
      %v226 = vshll.u32 %v216, 16
      %v228 = vrot.slane %v226, 1
      %v229 = vsel %vm217, %v224, %v228
      %v230 = vshrl.u32 %v216, 16
      %v232 = vor.u32 %v230, %v228
      %v251 = vunpack.c.l.b16 %v193
      %v252 = vunpack.c.l.b16 %v194
      %v253 = vunpack.c.l.b16 %v195
      %v254 = vunpack.c.l.b16 %v196
      %v255 = vunpack.c.l.b16 %v197
      %v256 = vunpack.c.l.b16 %v198
      %v257 = vunpack.c.l.b16 %v199
      %v258 = vunpack.c.l.b16 %v200
      %v259 = vunpack.c.l.b16 %v201
      %v260 = vunpack.c.l.b16 %v202
      %v261 = vunpack.c.l.b16 %v203
      %v262 = vunpack.c.l.b16 %v204
      %v263 = vunpack.c.l.b16 %v205
      %v264 = vunpack.c.l.b16 %v206
      %v265 = vunpack.c.l.b16 %v207
      %v266 = vunpack.c.l.b16 %v208
      %v267 = vpack.c.b16 %v252, %v251
      %v268 = vpack.c.b16 %v254, %v253
      %v269 = vpack.c.b16 %v256, %v255
      %v270 = vpack.c.b16 %v258, %v257
      %v271 = vpack.c.b16 %v260, %v259
      %v272 = vpack.c.b16 %v262, %v261
      %v273 = vpack.c.b16 %v264, %v263
      %v274 = vpack.c.b16 %v266, %v265
      %283 = vmatprep.subr.bf16.mxu0 0
      %284 = vmatpush1.bf16.msra.mxu0 %v267
      %285 = vmatprep.subr.bf16.mxu0 0
      %286 = vmatpush1.bf16.msra.mxu0 %v268
      %287 = vmatprep.subr.bf16.mxu0 0
      %288 = vmatpush1.bf16.msra.mxu0 %v269
      %289 = vmatprep.subr.bf16.mxu0 0
      %290 = vmatpush1.bf16.msra.mxu0 %v270
      %291 = vmatprep.subr.bf16.mxu0 0
      %292 = vmatpush1.bf16.msra.mxu0 %v271
      %293 = vmatprep.subr.bf16.mxu0 0
      %294 = vmatpush1.bf16.msra.mxu0 %v272
      %295 = vmatprep.subr.bf16.mxu0 0
      %296 = vmatpush1.bf16.msra.mxu0 %v273
      %297 = vmatprep.subr.bf16.mxu0 0
      %298 = vmatpush1.bf16.msra.mxu0 %v274
      %299 = vmatprep.subr.bf16.mxu0 0
      %300 = vmatpush1.bf16.msra.mxu0 0
      %301 = vmatprep.subr.bf16.mxu0 0
      %302 = vmatpush1.bf16.msra.mxu0 0
      %303 = vmatprep.subr.bf16.mxu0 0
      %304 = vmatpush1.bf16.msra.mxu0 0
      %305 = vmatprep.subr.bf16.mxu0 0
      %306 = vmatpush1.bf16.msra.mxu0 0
      %307 = vmatprep.subr.bf16.mxu0 0
      %308 = vmatpush1.bf16.msra.mxu0 0
      %309 = vmatprep.subr.bf16.mxu0 0
      %310 = vmatpush1.bf16.msra.mxu0 0
      %311 = vmatprep.subr.bf16.mxu0 0
      %312 = vmatpush1.bf16.msra.mxu0 0
      %313 = vmatprep.subr.bf16.mxu0 0
      %314 = vmatpush1.bf16.msra.mxu0 0
      %315 = vmatprep.mubr.bf16.mxu0 0
      %316 = vmatmul.mubr.bf16.gmra.mrb[0].mxu0 %v229
      %v317 = vpop.f32.mrb[0].mxu0
      %v318 = vadd.f32 0.0, %v317
      %v319 = vpop.f32.mrb[0].mxu0
      %v320 = vpop.f32.mrb[0].mxu0
      %v321 = vadd.f32 0.0, %v320
      %v322 = vpop.f32.mrb[0].mxu0
      %323 = vmatprep.mubr.bf16.mxu0 0
      %324 = vmatmul.mubr.bf16.gmra.mrb[0].mxu0 %v232
      %v325 = vpop.f32.mrb[0].mxu0
      %v326 = vadd.f32 0.0, %v325
      %v327 = vpop.f32.mrb[0].mxu0
      %v328 = vpop.f32.mrb[0].mxu0
      %v329 = vpop.f32.mrb[0].mxu0
      %330 = vdwg.mxu0
      %v332 = vunpack.c.l.b16 %v174
      %v333 = vpack.c.b16 %v332, %v332
      %v352 = vunpack.c.l.b16 %v175
      %v353 = vunpack.c.l.b16 %v176
      %v354 = vunpack.c.l.b16 %v177
      %v355 = vunpack.c.l.b16 %v178
      %v356 = vunpack.c.l.b16 %v179
      %v357 = vunpack.c.l.b16 %v180
      %v358 = vunpack.c.l.b16 %v181
      %v359 = vunpack.c.l.b16 %v182
      %v360 = vunpack.c.l.b16 %v183
      %v361 = vunpack.c.l.b16 %v184
      %v362 = vunpack.c.l.b16 %v185
      %v363 = vunpack.c.l.b16 %v186
      %v364 = vunpack.c.l.b16 %v187
      %v365 = vunpack.c.l.b16 %v188
      %v366 = vunpack.c.l.b16 %v189
      %v367 = vunpack.c.l.b16 %v190
      %v368 = vpack.c.b16 %v353, %v352
      %v369 = vpack.c.b16 %v355, %v354
      %v370 = vpack.c.b16 %v357, %v356
      %v371 = vpack.c.b16 %v359, %v358
      %v372 = vpack.c.b16 %v361, %v360
      %v373 = vpack.c.b16 %v363, %v362
      %v374 = vpack.c.b16 %v365, %v364
      %v375 = vpack.c.b16 %v367, %v366
      %384 = vmatprep.subr.bf16.mxu0 0
      %385 = vmatpush1.bf16.msra.mxu0 %v368
      %386 = vmatprep.subr.bf16.mxu0 0
      %387 = vmatpush1.bf16.msra.mxu0 %v369
      %388 = vmatprep.subr.bf16.mxu0 0
      %389 = vmatpush1.bf16.msra.mxu0 %v370
      %390 = vmatprep.subr.bf16.mxu0 0
      %391 = vmatpush1.bf16.msra.mxu0 %v371
      %392 = vmatprep.subr.bf16.mxu0 0
      %393 = vmatpush1.bf16.msra.mxu0 %v372
      %394 = vmatprep.subr.bf16.mxu0 0
      %395 = vmatpush1.bf16.msra.mxu0 %v373
      %396 = vmatprep.subr.bf16.mxu0 0
      %397 = vmatpush1.bf16.msra.mxu0 %v374
      %398 = vmatprep.subr.bf16.mxu0 0
      %399 = vmatpush1.bf16.msra.mxu0 %v375
      %400 = vmatprep.subr.bf16.mxu0 0
      %401 = vmatpush1.bf16.msra.mxu0 0
      %402 = vmatprep.subr.bf16.mxu0 0
      %403 = vmatpush1.bf16.msra.mxu0 0
      %404 = vmatprep.subr.bf16.mxu0 0
      %405 = vmatpush1.bf16.msra.mxu0 0
      %406 = vmatprep.subr.bf16.mxu0 0
      %407 = vmatpush1.bf16.msra.mxu0 0
      %408 = vmatprep.subr.bf16.mxu0 0
      %409 = vmatpush1.bf16.msra.mxu0 0
      %410 = vmatprep.subr.bf16.mxu0 0
      %411 = vmatpush1.bf16.msra.mxu0 0
      %412 = vmatprep.subr.bf16.mxu0 0
      %413 = vmatpush1.bf16.msra.mxu0 0
      %414 = vmatprep.subr.bf16.mxu0 0
      %415 = vmatpush1.bf16.msra.mxu0 0
      %416 = vmatprep.mubr.bf16.mxu0 0
      %417 = vmatmul.mubr.bf16.gmra.mrb[0].mxu0 %v215
      %v418 = vpop.f32.mrb[0].mxu0
      %v419 = vadd.f32 %v318, %v418
      %v420 = vpop.f32.mrb[0].mxu0
      %v421 = vpop.f32.mrb[0].mxu0
      %v422 = vadd.f32 %v321, %v421
      %v423 = vpop.f32.mrb[0].mxu0
      %424 = vmatprep.mubr.bf16.mxu0 0
      %425 = vmatmul.mubr.bf16.gmra.mrb[0].mxu0 %v333
      %v426 = vpop.f32.mrb[0].mxu0
      %v427 = vadd.f32 %v326, %v426
      %v428 = vpop.f32.mrb[0].mxu0
      %v429 = vpop.f32.mrb[0].mxu0
      %v430 = vpop.f32.mrb[0].mxu0
      %431 = vdwg.mxu0
      %v432 = vld [vmem:[%s165] sm:$0xc]
      %v433 = vld [vmem:[%s165 + $0x4] sm:$0xf]
      %v434 = vld [vmem:[%s165 + $0x8] sm:$0xf]
      %v435 = vld [vmem:[%s165 + $0xc] sm:$0x1]
      %s436 = scalar_lea.vmem %s1, 128
      %v437 = vld [vmem:[%s436] sm:$0xf]
      %v438 = vld [vmem:[%s436 + $0x4] sm:$0xf]
      %v439 = vld [vmem:[%s436 + $0x8] sm:$0xf]
      %v440 = vld [vmem:[%s436 + $0xc] sm:$0xf]
      %v441 = vld [vmem:[%s436 + $0x10] sm:$0xf]
      %v442 = vld [vmem:[%s436 + $0x14] sm:$0xf]
      %v443 = vld [vmem:[%s436 + $0x18] sm:$0xf]
      %v444 = vld [vmem:[%s436 + $0x1c] sm:$0xf]
      %v445 = vld [vmem:[%s436 + $0x20] sm:$0xf]
      %v446 = vld [vmem:[%s436 + $0x24] sm:$0xf]
      %v447 = vld [vmem:[%s436 + $0x28] sm:$0xf]
      %v448 = vld [vmem:[%s436 + $0x2c] sm:$0xf]
      %v449 = vld [vmem:[%s436 + $0x30] sm:$0xf]
      %v450 = vld [vmem:[%s436 + $0x34] sm:$0xf]
      %v451 = vld [vmem:[%s436 + $0x38] sm:$0xf]
      %v452 = vld [vmem:[%s436 + $0x3c] sm:$0xf]
      %v457 = vunpack.c.l.b16 %v432
      %v458 = vunpack.c.l.b16 %v433
      %v459 = vunpack.c.l.b16 %v434
      %v460 = vunpack.c.l.b16 %v435
      %v461 = vpack.c.b16 %v458, %v457
      %v462 = vpack.c.b16 %v460, %v459
      %vm463 = vsmask.f32 5376
      %v465 = vshrl.u32 %v461, 16
      %v467 = vrot.slane %v465, 2
      %v468 = vshll.u32 %v461, 16
      %v470 = vrot.slane %v468, 3
      %v471 = vor.u32 %v467, %v470
      %v473 = vshrl.u32 %v462, 16
      %v475 = vrot.slane %v473, 2
      %v476 = vshll.u32 %v462, 16
      %v478 = vrot.slane %v476, 3
      %v479 = vor.u32 %v475, %v478
      %v480 = vsel %vm463, %v471, %v479
      %v499 = vunpack.c.l.b16 %v437
      %v500 = vunpack.c.l.b16 %v438
      %v501 = vunpack.c.l.b16 %v439
      %v502 = vunpack.c.l.b16 %v440
      %v503 = vunpack.c.l.b16 %v441
      %v504 = vunpack.c.l.b16 %v442
      %v505 = vunpack.c.l.b16 %v443
      %v506 = vunpack.c.l.b16 %v444
      %v507 = vunpack.c.l.b16 %v445
      %v508 = vunpack.c.l.b16 %v446
      %v509 = vunpack.c.l.b16 %v447
      %v510 = vunpack.c.l.b16 %v448
      %v511 = vunpack.c.l.b16 %v449
      %v512 = vunpack.c.l.b16 %v450
      %v513 = vunpack.c.l.b16 %v451
      %v514 = vunpack.c.l.b16 %v452
      %v515 = vpack.c.b16 %v500, %v499
      %v516 = vpack.c.b16 %v502, %v501
      %v517 = vpack.c.b16 %v504, %v503
      %v518 = vpack.c.b16 %v506, %v505
      %v519 = vpack.c.b16 %v508, %v507
      %v520 = vpack.c.b16 %v510, %v509
      %v521 = vpack.c.b16 %v512, %v511
      %v522 = vpack.c.b16 %v514, %v513
      %531 = vmatprep.subr.bf16.mxu0 0
      %532 = vmatpush1.bf16.msra.mxu0 %v515
      %533 = vmatprep.subr.bf16.mxu0 0
      %534 = vmatpush1.bf16.msra.mxu0 %v516
      %535 = vmatprep.subr.bf16.mxu0 0
      %536 = vmatpush1.bf16.msra.mxu0 %v517
      %537 = vmatprep.subr.bf16.mxu0 0
      %538 = vmatpush1.bf16.msra.mxu0 %v518
      %539 = vmatprep.subr.bf16.mxu0 0
      %540 = vmatpush1.bf16.msra.mxu0 %v519
      %541 = vmatprep.subr.bf16.mxu0 0
      %542 = vmatpush1.bf16.msra.mxu0 %v520
      %543 = vmatprep.subr.bf16.mxu0 0
      %544 = vmatpush1.bf16.msra.mxu0 %v521
      %545 = vmatprep.subr.bf16.mxu0 0
      %546 = vmatpush1.bf16.msra.mxu0 %v522
      %547 = vmatprep.subr.bf16.mxu0 0
      %548 = vmatpush1.bf16.msra.mxu0 0
      %549 = vmatprep.subr.bf16.mxu0 0
      %550 = vmatpush1.bf16.msra.mxu0 0
      %551 = vmatprep.subr.bf16.mxu0 0
      %552 = vmatpush1.bf16.msra.mxu0 0
      %553 = vmatprep.subr.bf16.mxu0 0
      %554 = vmatpush1.bf16.msra.mxu0 0
      %555 = vmatprep.subr.bf16.mxu0 0
      %556 = vmatpush1.bf16.msra.mxu0 0
      %557 = vmatprep.subr.bf16.mxu0 0
      %558 = vmatpush1.bf16.msra.mxu0 0
      %559 = vmatprep.subr.bf16.mxu0 0
      %560 = vmatpush1.bf16.msra.mxu0 0
      %561 = vmatprep.subr.bf16.mxu0 0
      %562 = vmatpush1.bf16.msra.mxu0 0
      %563 = vmatprep.mubr.bf16.mxu0 0
      %564 = vmatmul.mubr.bf16.gmra.mrb[0].mxu0 %v480
      %v565 = vpop.f32.mrb[0].mxu0
      %v566 = vadd.f32 0.0, %v565
      %v567 = vpop.f32.mrb[0].mxu0
      %v568 = vpop.f32.mrb[0].mxu0
      %v569 = vadd.f32 0.0, %v568
      %v570 = vpop.f32.mrb[0].mxu0
      %571 = vmatprep.mubr.bf16.mxu0 0
      %572 = vmatmul.mubr.bf16.gmra.mrb[0].mxu0 %v479
      %v573 = vpop.f32.mrb[0].mxu0
      %v574 = vadd.f32 0.0, %v573
      %v575 = vpop.f32.mrb[0].mxu0
      %v576 = vpop.f32.mrb[0].mxu0
      %v577 = vpop.f32.mrb[0].mxu0
      %578 = vdwg.mxu0
      %v579 = vadd.f32 %v419, %v566
      %v580 = vadd.f32 %v422, %v569
      %v581 = vadd.f32 %v427, %v574
      %v582 = vld [vmem:[%s165] sm:$0x8]
      %s583 = scalar_lea.vmem %s1, 192
      %v584 = vld [vmem:[%s583] sm:$0xf]
      %v585 = vld [vmem:[%s583 + $0x4] sm:$0xf]
      %v586 = vld [vmem:[%s583 + $0x8] sm:$0xf]
      %v587 = vld [vmem:[%s583 + $0xc] sm:$0xf]
      %v588 = vld [vmem:[%s583 + $0x10] sm:$0xf]
      %v589 = vld [vmem:[%s583 + $0x14] sm:$0xf]
      %v590 = vld [vmem:[%s583 + $0x18] sm:$0xf]
      %v591 = vld [vmem:[%s583 + $0x1c] sm:$0xf]
      %v592 = vld [vmem:[%s583 + $0x20] sm:$0xf]
      %v593 = vld [vmem:[%s583 + $0x24] sm:$0xf]
      %v594 = vld [vmem:[%s583 + $0x28] sm:$0xf]
      %v595 = vld [vmem:[%s583 + $0x2c] sm:$0xf]
      %v596 = vld [vmem:[%s583 + $0x30] sm:$0xf]
      %v597 = vld [vmem:[%s583 + $0x34] sm:$0xf]
      %v598 = vld [vmem:[%s583 + $0x38] sm:$0xf]
      %v599 = vld [vmem:[%s583 + $0x3c] sm:$0xf]
      %v601 = vunpack.c.l.b16 %v582
      %v602 = vpack.c.b16 %v458, %v601
      %vm603 = vcmask 1044480
      %v604 = vrot.slane %v602, 3
      %v605 = vrot.slane %v462, 3
      %v606 = vsel %vm603, %v604, %v605
      %v625 = vunpack.c.l.b16 %v584
      %v626 = vunpack.c.l.b16 %v585
      %v627 = vunpack.c.l.b16 %v586
      %v628 = vunpack.c.l.b16 %v587
      %v629 = vunpack.c.l.b16 %v588
      %v630 = vunpack.c.l.b16 %v589
      %v631 = vunpack.c.l.b16 %v590
      %v632 = vunpack.c.l.b16 %v591
      %v633 = vunpack.c.l.b16 %v592
      %v634 = vunpack.c.l.b16 %v593
      %v635 = vunpack.c.l.b16 %v594
      %v636 = vunpack.c.l.b16 %v595
      %v637 = vunpack.c.l.b16 %v596
      %v638 = vunpack.c.l.b16 %v597
      %v639 = vunpack.c.l.b16 %v598
      %v640 = vunpack.c.l.b16 %v599
      %v641 = vpack.c.b16 %v626, %v625
      %v642 = vpack.c.b16 %v628, %v627
      %v643 = vpack.c.b16 %v630, %v629
      %v644 = vpack.c.b16 %v632, %v631
      %v645 = vpack.c.b16 %v634, %v633
      %v646 = vpack.c.b16 %v636, %v635
      %v647 = vpack.c.b16 %v638, %v637
      %v648 = vpack.c.b16 %v640, %v639
      %657 = vmatprep.subr.bf16.mxu0 0
      %658 = vmatpush1.bf16.msra.mxu0 %v641
      %659 = vmatprep.subr.bf16.mxu0 0
      %660 = vmatpush1.bf16.msra.mxu0 %v642
      %661 = vmatprep.subr.bf16.mxu0 0
      %662 = vmatpush1.bf16.msra.mxu0 %v643
      %663 = vmatprep.subr.bf16.mxu0 0
      %664 = vmatpush1.bf16.msra.mxu0 %v644
      %665 = vmatprep.subr.bf16.mxu0 0
      %666 = vmatpush1.bf16.msra.mxu0 %v645
      %667 = vmatprep.subr.bf16.mxu0 0
      %668 = vmatpush1.bf16.msra.mxu0 %v646
      %669 = vmatprep.subr.bf16.mxu0 0
      %670 = vmatpush1.bf16.msra.mxu0 %v647
      %671 = vmatprep.subr.bf16.mxu0 0
      %672 = vmatpush1.bf16.msra.mxu0 %v648
      %673 = vmatprep.subr.bf16.mxu0 0
      %674 = vmatpush1.bf16.msra.mxu0 0
      %675 = vmatprep.subr.bf16.mxu0 0
      %676 = vmatpush1.bf16.msra.mxu0 0
      %677 = vmatprep.subr.bf16.mxu0 0
      %678 = vmatpush1.bf16.msra.mxu0 0
      %679 = vmatprep.subr.bf16.mxu0 0
      %680 = vmatpush1.bf16.msra.mxu0 0
      %681 = vmatprep.subr.bf16.mxu0 0
      %682 = vmatpush1.bf16.msra.mxu0 0
      %683 = vmatprep.subr.bf16.mxu0 0
      %684 = vmatpush1.bf16.msra.mxu0 0
      %685 = vmatprep.subr.bf16.mxu0 0
      %686 = vmatpush1.bf16.msra.mxu0 0
      %687 = vmatprep.subr.bf16.mxu0 0
      %688 = vmatpush1.bf16.msra.mxu0 0
      %689 = vmatprep.mubr.bf16.mxu0 0
      %690 = vmatmul.mubr.bf16.gmra.mrb[0].mxu0 %v606
      %v691 = vpop.f32.mrb[0].mxu0
      %v692 = vadd.f32 0.0, %v691
      %v693 = vpop.f32.mrb[0].mxu0
      %v694 = vpop.f32.mrb[0].mxu0
      %v695 = vadd.f32 0.0, %v694
      %v696 = vpop.f32.mrb[0].mxu0
      %697 = vmatprep.mubr.bf16.mxu0 0
      %698 = vmatmul.mubr.bf16.gmra.mrb[0].mxu0 %v605
      %v699 = vpop.f32.mrb[0].mxu0
      %v700 = vadd.f32 0.0, %v699
      %v701 = vpop.f32.mrb[0].mxu0
      %v702 = vpop.f32.mrb[0].mxu0
      %v703 = vpop.f32.mrb[0].mxu0
      %704 = vdwg.mxu0
      %v705 = vadd.f32 %v579, %v692
      %v706 = vadd.f32 %v580, %v695
      %v707 = vadd.f32 %v581, %v700
      %v708 = vld [vmem:[%s2] sm:$0x1]
      %v710 = vlaneseq
      %v711 = vshrl.u32 %v710, 7
      %v712 = vsub.s32 0, %v711
      %v713 = vrot.slane %v708, %v712
      %v715 = vadd.f32 %v705, %v713
      %v716 = vadd.f32 %v706, %v713
      %v717 = vadd.f32 %v707, %v713
      %vm718 = vcmp.ge.f32.partialorder %v715, 0.0
      %vm719 = vcmp.ge.f32.partialorder %v716, 0.0
      %vm720 = vcmp.ge.f32.partialorder %v717, 0.0
      %v721 = vmul.f32 %v715, 0.2
      %v722 = vmul.f32 %v716, 0.2
      %v723 = vmul.f32 %v717, 0.2
      %v724 = vsel %vm718, %v715, %v721
      %v725 = vsel %vm719, %v716, %v722
      %v726 = vsel %vm720, %v717, %v723
      %v727 = vpack.c.bf16 %v725, %v724
      %v728 = vpack.c.bf16 %v726, %v726
      %v731 = vunpack.c.l.b16 %v727
      %v732 = vunpack.c.h.b16 %v727
      %v733 = vunpack.c.l.b16 %v728
      %v734 = vpack.c.b16 %v731, %v731
      %v735 = vpack.c.b16 %v732, %v732
      %v736 = vpack.c.b16 %v733, %v733
      %vm740 = vcmask 519168
      %741 = vst.msk [vmem:[%s170] sm:$0xf] %vm740, %v734
      %742 = vst.msk [vmem:[%s170 + $0x4] sm:$0xf] %vm740, %v735
      %vm743 = vcmask 517120
      %744 = vst.msk [vmem:[%s170 + $0x8] sm:$0x3] %vm743, %v736
      %p745 = scmp.lt.s32.totalorder %s14, 1
      %s746 = scalar_select %p745, %s14, 1
      %s747 = smul.addr %s746, 3
      %s748 = smul.addr %s747, 4
      %s749 = scalar_lea.vmem %s3, %s748
      // Predicated region
      $region33: #{fcdiscriminator_wgan_forward.4} parent=31 // pred_check
        %p750 = pneg %p100
      $region34: #{fcdiscriminator_wgan_forward.4} parent=31 // pred_check_branch
        %752 = sbr.rel (%p750) target = $region36
      $region35: #{fcdiscriminator_wgan_forward.4} parent=31 // pred_region
        _
      $region36: #{fcdiscriminator_wgan_forward.4} parent=31 // pred_fallthru
        _
    $region32: #{fcdiscriminator_wgan_forward.4} parent=5 // pred_fallthru
      _
    %p753 = scmp.le.s32.totalorder 2, %s9
    // Predicated region
    $region37: #{fcdiscriminator_wgan_forward.4} parent=5 // pred_check
      %p754 = pneg %p753
    $region38: #{fcdiscriminator_wgan_forward.4} parent=5 // pred_check_branch
      %756 = sbr.rel (%p754) target = $region40
    $region39: #{fcdiscriminator_wgan_forward.4} parent=5 // pred_region
      %s757 = ssub.s32 %s9, 2
      // Predicated region
      $region41: #{fcdiscriminator_wgan_forward.4} parent=39 // pred_check
        %p758 = pneg %p106
      $region42: #{fcdiscriminator_wgan_forward.4} parent=39 // pred_check_branch
        %760 = sbr.rel (%p758) target = $region44
      $region43: #{fcdiscriminator_wgan_forward.4} parent=39 // pred_region
        %p761 = scmp.lt.s32.totalorder %s15, 1
        %s762 = scalar_select %p761, %s15, 1
        %s763 = smul.addr %s762, 3
        %s764 = smul.addr %s763, 4
        %s765 = scalar_lea.vmem %s3, %s764
      $region44: #{fcdiscriminator_wgan_forward.4} parent=39 // pred_fallthru
        _
    $region40: #{fcdiscriminator_wgan_forward.4} parent=5 // pred_fallthru
      _
  $region6: #{fcdiscriminator_wgan_forward.4} parent=0 // loop_footer
    %s13 = sadd.s32 1, %s9
  $region7: #{fcdiscriminator_wgan_forward.4} parent=0 // loop_footer_branch
    %8 = sbr.rel target = $region3
  $region8: #{fcdiscriminator_wgan_forward.4} parent=0 // loop_exit
    _

// kernel: fcdiscriminator_wgan_forward.5
$region0: #{fcdiscriminator_wgan_forward.5}
  #allocation0 [shape = 'u32[]', space=smem, size = 0x4, offset = 0x4, fixed_abs, tag = 'smem constant byte address 0x4 - core index']
  #allocation1 [shape = 'u32[144,128]{1,0:T(1,128)}', space=vmem, size = 0x12000, scoped, tag = 'internal scratch']
  #allocation2 [shape = 'f32[1,1]{1,0:T(1,128)S(1)}', space=vmem, size = 0x200, scoped, tag = 'scoped memory for fcdiscriminator_wgan_forward.5']
  %s0 = inlined_call_operand.vmem [shape: bf16[2,12,256], index: 0, kind: input, shape index: {}]
  %s1 = inlined_call_operand.vmem [shape: f32[4,1,256], index: 1, kind: input, shape index: {}]
  %s2 = inlined_call_operand.<no memory space> [shape: f32[1,1], index: 2, kind: input, shape index: {}]
  %s3 = inlined_call_operand.vmem [shape: f32[512,6], index: 3, kind: input, shape index: {}]
  %s4 = inlined_call_operand.vmem [shape: f32[6,512], index: 4, kind: input, shape index: {}]
  %s5 = inlined_call_operand.hbm [shape: f32[2,512,512], index: 5, kind: output, shape index: {0}]
  %s6 = inlined_call_operand.hbm [shape: f32[2,512,512], index: 6, kind: output, shape index: {1}]
  %7 = xla_tuple %s5, %s6
  %s8 = sld [smem:[#allocation0]]
  $region61: #{fcdiscriminator_wgan_forward.5} parent=0
    _
  %s10 = ssub.s32 1, %s8
  %s11 = scalar_select 0, %s10, %s8
  %v12 = vstv %s2
  %13 = vst [vmem:[#allocation2] sm:$0x1] %v12
  $region1: #{fcdiscriminator_wgan_forward.5} parent=0
    #allocation3 [shape = 'u8[524288]{0}', space=vmem, size = 0x80000, scoped, tag = 'output window, operand 0']
    #allocation4 [shape = 's32[2]{0}', space=sflag, size = 0x8, scoped, tag = 'scoped memory for fcdiscriminator_wgan_forward.5']
    #allocation5 [shape = 'u8[524288]{0}', space=vmem, size = 0x80000, scoped, tag = 'output window, operand 1']
    #allocation6 [shape = 's32[2]{0}', space=sflag, size = 0x8, scoped, tag = 'scoped memory for fcdiscriminator_wgan_forward.5']
    %14 = vsyncpa [#allocation4], 0
    %s15 = scalar_lea.sflag [#allocation4], 1
    %16 = vsyncpa %s15, 0
    %17 = vsyncpa [#allocation6], 0
    %s18 = scalar_lea.sflag [#allocation6], 1
    %19 = vsyncpa %s18, 0
    loop: start=0, step=1, limit=10
    $region2: #{fcdiscriminator_wgan_forward.5} parent=1 // loop_pre_header
      _
    $region3: #{fcdiscriminator_wgan_forward.5} parent=1 // loop_header
      %s21 = sphi 0, %s25
      %p22 = scmp.ge.s32.totalorder %s21, 10
      %s28 = sphi 0, %s40
      %s29 = sphi 0, %s36
      %s30 = sphi 0, %s28
      %s31 = sphi 0, %s29
      %s32 = sphi 0, %s30
      %s33 = sphi 0, %s31
      %s43 = sphi 0, %s45
      %s46 = sphi 0, %s43
      %s47 = sphi 0, %s46
      %s63 = sphi 0, %s47
      %s67 = sphi 0, %s67
      %s69 = sphi 0, %s67
      %s70 = sphi 0, %s69
      %s84 = sphi 0, %s70
      %s88 = sphi 0, %s88
      %s90 = sphi 0, %s88
      %s91 = sphi 0, %s90
      %s105 = sphi 0, %s91
      %s111 = sphi 0, %s113
      %s114 = sphi 0, %s111
      %s115 = sphi 0, %s114
      %s131 = sphi 0, %s115
      %s135 = sphi 0, %s135
      %s137 = sphi 0, %s135
      %s138 = sphi 0, %s137
      %s152 = sphi 0, %s138
      %s160 = sphi 0, %s162
      %s163 = sphi 0, %s160
      %s164 = sphi 0, %s163
      %s180 = sphi 0, %s164
      %s188 = sphi 0, %s190
      %s191 = sphi 0, %s188
      %s192 = sphi 0, %s191
      %s208 = sphi 0, %s192
    $region4: #{fcdiscriminator_wgan_forward.5} parent=1 // loop_header_branch
      %24 = sbr.rel (%p22) target = $region8
    $region5: #{fcdiscriminator_wgan_forward.5} parent=1 // loop_body
      %s26 = ssub.s32 %s21, 1
      %s27 = ssub.s32 %s21, 2
      %s34 = sadd.s32 1, %s29
      %p35 = scmp.ge.s32.totalorder %s34, 4
      %s36 = scalar_select %p35, 0, %s34
      %s37 = sadd.s32 1, %s28
      %s38 = scalar_select %p35, %s37, %s28
      %p39 = scmp.ge.s32.totalorder %s38, 2
      %s40 = scalar_select %p39, 0, %s38
      %s41 = ssub.s32 %s28, %s40
      %p42 = scmp.eq.s32.totalorder %s41, 0
      %s44 = sadd.s32 %s43, 1
      %s45 = scalar_select %p42, %s43, %s44
      %p48 = pneg %p42
      %p49 = scmp.eq.s32.totalorder %s21, 7
      %p50 = por %p48, %p49
      %p51 = scmp.ne.s32.totalorder %s43, %s46
      %p52 = scmp.eq.s32.totalorder %s21, 0
      %p53 = por %p51, %p52
      %p54 = scmp.ne.s32.totalorder %s43, %s46
      %p55 = scmp.eq.s32.totalorder %s26, 7
      %p56 = por %p54, %p55
      %p57 = scmp.ne.s32.totalorder %s46, %s47
      %p58 = scmp.eq.s32.totalorder %s26, 0
      %p59 = por %p57, %p58
      %p60 = scmp.ne.s32.totalorder %s46, %s47
      %p61 = scmp.eq.s32.totalorder %s27, 7
      %p62 = por %p60, %p61
      %p64 = scmp.ne.s32.totalorder %s47, %s63
      %p65 = scmp.eq.s32.totalorder %s27, 0
      %p66 = por %p64, %p65
      %s68 = sadd.s32 %s67, 1
      %p71 = scmp.eq.s32.totalorder %s21, 7
      %p72 = scmp.ne.s32.totalorder %s67, %s69
      %p73 = scmp.eq.s32.totalorder %s21, 0
      %p74 = por %p72, %p73
      %p75 = scmp.ne.s32.totalorder %s67, %s69
      %p76 = scmp.eq.s32.totalorder %s26, 7
      %p77 = por %p75, %p76
      %p78 = scmp.ne.s32.totalorder %s69, %s70
      %p79 = scmp.eq.s32.totalorder %s26, 0
      %p80 = por %p78, %p79
      %p81 = scmp.ne.s32.totalorder %s69, %s70
      %p82 = scmp.eq.s32.totalorder %s27, 7
      %p83 = por %p81, %p82
      %p85 = scmp.ne.s32.totalorder %s70, %s84
      %p86 = scmp.eq.s32.totalorder %s27, 0
      %p87 = por %p85, %p86
      %s89 = sadd.s32 %s88, 1
      %p92 = scmp.eq.s32.totalorder %s21, 7
      %p93 = scmp.ne.s32.totalorder %s88, %s90
      %p94 = scmp.eq.s32.totalorder %s21, 0
      %p95 = por %p93, %p94
      %p96 = scmp.ne.s32.totalorder %s88, %s90
      %p97 = scmp.eq.s32.totalorder %s26, 7
      %p98 = por %p96, %p97
      %p99 = scmp.ne.s32.totalorder %s90, %s91
      %p100 = scmp.eq.s32.totalorder %s26, 0
      %p101 = por %p99, %p100
      %p102 = scmp.ne.s32.totalorder %s90, %s91
      %p103 = scmp.eq.s32.totalorder %s27, 7
      %p104 = por %p102, %p103
      %p106 = scmp.ne.s32.totalorder %s91, %s105
      %p107 = scmp.eq.s32.totalorder %s27, 0
      %p108 = por %p106, %p107
      %s109 = ssub.s32 %s29, %s36
      %p110 = scmp.eq.s32.totalorder %s109, 0
      %s112 = sadd.s32 %s111, 1
      %s113 = scalar_select %p110, %s111, %s112
      %p116 = pneg %p110
      %p117 = scmp.eq.s32.totalorder %s21, 7
      %p118 = por %p116, %p117
      %p119 = scmp.ne.s32.totalorder %s111, %s114
      %p120 = scmp.eq.s32.totalorder %s21, 0
      %p121 = por %p119, %p120
      %p122 = scmp.ne.s32.totalorder %s111, %s114
      %p123 = scmp.eq.s32.totalorder %s26, 7
      %p124 = por %p122, %p123
      %p125 = scmp.ne.s32.totalorder %s114, %s115
      %p126 = scmp.eq.s32.totalorder %s26, 0
      %p127 = por %p125, %p126
      %p128 = scmp.ne.s32.totalorder %s114, %s115
      %p129 = scmp.eq.s32.totalorder %s27, 7
      %p130 = por %p128, %p129
      %p132 = scmp.ne.s32.totalorder %s115, %s131
      %p133 = scmp.eq.s32.totalorder %s27, 0
      %p134 = por %p132, %p133
      %s136 = sadd.s32 %s135, 1
      %p139 = scmp.eq.s32.totalorder %s21, 7
      %p140 = scmp.ne.s32.totalorder %s135, %s137
      %p141 = scmp.eq.s32.totalorder %s21, 0
      %p142 = por %p140, %p141
      %p143 = scmp.ne.s32.totalorder %s135, %s137
      %p144 = scmp.eq.s32.totalorder %s26, 7
      %p145 = por %p143, %p144
      %p146 = scmp.ne.s32.totalorder %s137, %s138
      %p147 = scmp.eq.s32.totalorder %s26, 0
      %p148 = por %p146, %p147
      %p149 = scmp.ne.s32.totalorder %s137, %s138
      %p150 = scmp.eq.s32.totalorder %s27, 7
      %p151 = por %p149, %p150
      %p153 = scmp.ne.s32.totalorder %s138, %s152
      %p154 = scmp.eq.s32.totalorder %s27, 0
      %p155 = por %p153, %p154
      %s156 = ssub.s32 %s28, %s40
      %s157 = ssub.s32 %s29, %s36
      %s158 = sor.u32 %s156, %s157
      %p159 = scmp.eq.s32.totalorder %s158, 0
      %s161 = sadd.s32 %s160, 1
      %s162 = scalar_select %p159, %s160, %s161
      %p165 = pneg %p159
      %p166 = scmp.eq.s32.totalorder %s21, 7
      %p167 = por %p165, %p166
      %p168 = scmp.ne.s32.totalorder %s160, %s163
      %p169 = scmp.eq.s32.totalorder %s21, 0
      %p170 = por %p168, %p169
      %p171 = scmp.ne.s32.totalorder %s160, %s163
      %p172 = scmp.eq.s32.totalorder %s26, 7
      %p173 = por %p171, %p172
      %p174 = scmp.ne.s32.totalorder %s163, %s164
      %p175 = scmp.eq.s32.totalorder %s26, 0
      %p176 = por %p174, %p175
      %p177 = scmp.ne.s32.totalorder %s163, %s164
      %p178 = scmp.eq.s32.totalorder %s27, 7
      %p179 = por %p177, %p178
      %p181 = scmp.ne.s32.totalorder %s164, %s180
      %p182 = scmp.eq.s32.totalorder %s27, 0
      %p183 = por %p181, %p182
      %s184 = ssub.s32 %s28, %s40
      %s185 = ssub.s32 %s29, %s36
      %s186 = sor.u32 %s184, %s185
      %p187 = scmp.eq.s32.totalorder %s186, 0
      %s189 = sadd.s32 %s188, 1
      %s190 = scalar_select %p187, %s188, %s189
      %p193 = pneg %p187
      %p194 = scmp.eq.s32.totalorder %s21, 7
      %p195 = por %p193, %p194
      %p196 = scmp.ne.s32.totalorder %s188, %s191
      %p197 = scmp.eq.s32.totalorder %s21, 0
      %p198 = por %p196, %p197
      %p199 = scmp.ne.s32.totalorder %s188, %s191
      %p200 = scmp.eq.s32.totalorder %s26, 7
      %p201 = por %p199, %p200
      %p202 = scmp.ne.s32.totalorder %s191, %s192
      %p203 = scmp.eq.s32.totalorder %s26, 0
      %p204 = por %p202, %p203
      %p205 = scmp.ne.s32.totalorder %s191, %s192
      %p206 = scmp.eq.s32.totalorder %s27, 7
      %p207 = por %p205, %p206
      %p209 = scmp.ne.s32.totalorder %s192, %s208
      %p210 = scmp.eq.s32.totalorder %s27, 0
      %p211 = por %p209, %p210
      %p212 = scmp.le.s32.totalorder 1, %s21
      %p213 = scmp.lt.s32.totalorder %s21, 9
      %p214 = pnand %p212, %p213
      %p215 = pneg %p214
      // Predicated region
      $region9: #{fcdiscriminator_wgan_forward.5} parent=5 // pred_check
        _
      $region10: #{fcdiscriminator_wgan_forward.5} parent=5 // pred_check_branch
        %217 = sbr.rel (%p214) target = $region12
      $region11: #{fcdiscriminator_wgan_forward.5} parent=5 // pred_region
        %s218 = ssub.s32 %s21, 1
        // Predicated region
        $region13: #{fcdiscriminator_wgan_forward.5} parent=11 // pred_check
          %p219 = pneg %p80
        $region14: #{fcdiscriminator_wgan_forward.5} parent=11 // pred_check_branch
          %221 = sbr.rel (%p219) target = $region16
        $region15: #{fcdiscriminator_wgan_forward.5} parent=11 // pred_region
          _
        $region16: #{fcdiscriminator_wgan_forward.5} parent=11 // pred_fallthru
          _
        // Predicated region
        $region17: #{fcdiscriminator_wgan_forward.5} parent=11 // pred_check
          %p222 = pneg %p101
        $region18: #{fcdiscriminator_wgan_forward.5} parent=11 // pred_check_branch
          %224 = sbr.rel (%p222) target = $region20
        $region19: #{fcdiscriminator_wgan_forward.5} parent=11 // pred_region
          _
        $region20: #{fcdiscriminator_wgan_forward.5} parent=11 // pred_fallthru
          _
        // Predicated region
        $region21: #{fcdiscriminator_wgan_forward.5} parent=11 // pred_check
          %p225 = pneg %p148
        $region22: #{fcdiscriminator_wgan_forward.5} parent=11 // pred_check_branch
          %227 = sbr.rel (%p225) target = $region24
        $region23: #{fcdiscriminator_wgan_forward.5} parent=11 // pred_region
          _
        $region24: #{fcdiscriminator_wgan_forward.5} parent=11 // pred_fallthru
          _
      $region12: #{fcdiscriminator_wgan_forward.5} parent=5 // pred_fallthru
        _
      %p228 = scmp.lt.s32.totalorder %s21, 8
      // Predicated region
      $region25: #{fcdiscriminator_wgan_forward.5} parent=5 // pred_check
        %p229 = pneg %p228
      $region26: #{fcdiscriminator_wgan_forward.5} parent=5 // pred_check_branch
        %231 = sbr.rel (%p229) target = $region28
      $region27: #{fcdiscriminator_wgan_forward.5} parent=5 // pred_region
        // Predicated region
        $region29: #{fcdiscriminator_wgan_forward.5} parent=27 // pred_check
          %p232 = pneg %p53
        $region30: #{fcdiscriminator_wgan_forward.5} parent=27 // pred_check_branch
          %234 = sbr.rel (%p232) target = $region32
        $region31: #{fcdiscriminator_wgan_forward.5} parent=27 // pred_region
          %p235 = scmp.lt.s32.totalorder %s28, 1
          %s236 = scalar_select %p235, %s28, 1
          %s237 = smul.addr %s236, 4
          %s238 = smul.addr %s237, 4
          %s239 = scalar_lea.vmem %s0, %s238
        $region32: #{fcdiscriminator_wgan_forward.5} parent=27 // pred_fallthru
          _
        // Predicated region
        $region33: #{fcdiscriminator_wgan_forward.5} parent=27 // pred_check
          %p240 = pneg %p121
        $region34: #{fcdiscriminator_wgan_forward.5} parent=27 // pred_check_branch
          %242 = sbr.rel (%p240) target = $region36
        $region35: #{fcdiscriminator_wgan_forward.5} parent=27 // pred_region
          %s243 = smul.u32 16, %s29
          %p244 = scmp.lt.s32.totalorder %s243, 63
          %s245 = scalar_select %p244, %s243, 63
          %s246 = smul.addr %s245, 8
          %s247 = scalar_lea.vmem %s3, %s246
          %s248 = smul.u32 16, %s29
        $region36: #{fcdiscriminator_wgan_forward.5} parent=27 // pred_fallthru
          _
      $region28: #{fcdiscriminator_wgan_forward.5} parent=5 // pred_fallthru
        _
      %p249 = scmp.le.s32.totalorder 1, %s21
      %p250 = scmp.lt.s32.totalorder %s21, 9
      %p251 = pnand %p249, %p250
      %p252 = pneg %p251
      // Predicated region
      $region37: #{fcdiscriminator_wgan_forward.5} parent=5 // pred_check
        _
      $region38: #{fcdiscriminator_wgan_forward.5} parent=5 // pred_check_branch
        %254 = sbr.rel (%p251) target = $region40
      $region39: #{fcdiscriminator_wgan_forward.5} parent=5 // pred_region
        %s255 = ssub.s32 %s21, 1
        %p256 = scmp.lt.s32.totalorder %s30, 1
        %s257 = scalar_select %p256, %s30, 1
        %s258 = smul.addr %s257, 4
        %s259 = smul.addr %s258, 4
        %s260 = scalar_lea.vmem %s0, %s259
        %p261 = pneg %p59
        %p262 = pneg %p56
        %p263 = pneg %p80
        %p264 = pneg %p77
        %p265 = pneg %p101
        %p266 = pneg %p98
        %s267 = smul.u32 16, %s31
        %p268 = scmp.lt.s32.totalorder %s267, 63
        %s269 = scalar_select %p268, %s267, 63
        %s270 = smul.addr %s269, 8
        %s271 = scalar_lea.vmem %s3, %s270
        %p272 = pneg %p127
        %p273 = pneg %p124
        %p274 = pneg %p148
        %p275 = pneg %p145
        %p276 = pneg %p176
        %p277 = pneg %p173
        %s278 = sand.u32 %s163, 1
        %s279 = scalar_lea.sflag [#allocation4], %s278
        %s280 = sand.u32 %s163, 1
        %s281 = smul.addr %s280, 512
        %s282 = scalar_lea.vmem [#allocation3], %s281
        %p283 = pneg %p204
        %p284 = pneg %p201
        %s285 = sand.u32 %s191, 1
        %s286 = scalar_lea.sflag [#allocation6], %s285
        %s287 = sand.u32 %s191, 1
        %s288 = smul.addr %s287, 512
        %s289 = scalar_lea.vmem [#allocation5], %s288
        %p290 = scmp.lt.s32.totalorder %s30, 1
        %s291 = scalar_select %p290, %s30, 1
        %s292 = smul.addr %s291, 4
        %s293 = smul.addr %s292, 4
        %s294 = scalar_lea.vmem %s0, %s293
        %s295 = smul.u32 16, %s31
        %p296 = scmp.lt.s32.totalorder %s295, 63
        %s297 = scalar_select %p296, %s295, 63
        %s298 = smul.addr %s297, 8
        %s299 = scalar_lea.vmem %s3, %s298
        %s300 = smul.u32 16, %s31
        %s301 = smul.u32 16, %s31
        %s302 = smul.u32 16, %s31
        %v303 = vld [vmem:[%s294] sm:$0x77]
        %v304 = vunpack.c.l.bf16 %v303
        %v305 = vunpack.c.h.bf16 %v303
        %v306 = vld [vmem:[%s1] sm:$0x3]
        %v308 = vlaneseq
        %v309 = vshrl.u32 %v308, 7
        %v310 = vsub.s32 0, %v309
        %v311 = vrot.slane %v306, %v310
        %v312 = vlaneseq
        %v313 = vshrl.u32 %v312, 7
        %v314 = vsub.s32 1, %v313
        %v315 = vrot.slane %v306, %v314
        %v318 = vmul.f32 %v304, %v311
        %v319 = vmul.f32 %v305, %v315
        %vm320 = vcmask 1045504
        %v321 = vsel %vm320, %v318, 0.0
        %v322 = vsel %vm320, %v319, 0.0
        %v323 = vadd.f32 %v321, %v322
        %324 = vadd.xlane.f32.xlu0 %v323
        %v325 = vpop.xlane.xlu0 %324
        %v326 = vadd.f32 %v325, 0.0
        %v327 = vld [vmem:[%s294] sm:$0xff]
        %v328 = vunpack.c.l.bf16 %v327
        %v329 = vunpack.c.h.bf16 %v327
        %s330 = scalar_lea.vmem %s1, 2
        %v331 = vld [vmem:[%s330] sm:$0x3]
        %v333 = vlaneseq
        %v334 = vshrl.u32 %v333, 7
        %v335 = vsub.s32 0, %v334
        %v336 = vrot.slane %v331, %v335
        %v337 = vlaneseq
        %v338 = vshrl.u32 %v337, 7
        %v339 = vsub.s32 1, %v338
        %v340 = vrot.slane %v331, %v339
        %v343 = vmul.f32 %v328, %v336
        %v344 = vmul.f32 %v329, %v340
        %vm345 = vcmask 1046529
        %v346 = vsel %vm345, %v343, 0.0
        %v347 = vsel %vm345, %v344, 0.0
        %v348 = vadd.f32 %v346, %v347
        %349 = vadd.xlane.f32.xlu0 %v348
        %v350 = vpop.xlane.xlu0 %349
        %v352 = vrot.slane %v350, 1
        %v354 = vadd.f32 %v326, %v352
        %v355 = vld [vmem:[%s294] sm:$0xee]
        %v356 = vld [vmem:[%s294 + $0x8] sm:$0x11]
        %v357 = vunpack.c.l.bf16 %v355
        %v358 = vunpack.c.h.bf16 %v355
        %v359 = vunpack.c.l.bf16 %v356
        %v360 = vunpack.c.h.bf16 %v356
        %s361 = scalar_lea.vmem %s1, 4
        %v362 = vld [vmem:[%s361] sm:$0x3]
        %v364 = vlaneseq
        %v365 = vshrl.u32 %v364, 7
        %v366 = vsub.s32 0, %v365
        %v367 = vrot.slane %v362, %v366
        %v368 = vlaneseq
        %v369 = vshrl.u32 %v368, 7
        %v370 = vsub.s32 1, %v369
        %v371 = vrot.slane %v362, %v370
        %v374 = vmul.f32 %v357, %v367
        %v375 = vmul.f32 %v358, %v371
        %v376 = vmul.f32 %v359, %v367
        %v377 = vmul.f32 %v360, %v371
        %vm378 = vcmask 1047555
        %v379 = vsel %vm378, %v374, 0.0
        %v380 = vsel %vm378, %v375, 0.0
        %v381 = vadd.f32 %v379, %v380
        %382 = vadd.xlane.f32.xlu0 %v381
        %v383 = vpop.xlane.xlu0 %382
        %vm384 = vcmask 1040384
        %v385 = vsel %vm384, %v376, 0.0
        %v386 = vsel %vm384, %v377, 0.0
        %v387 = vadd.f32 %v385, %v386
        %388 = vadd.xlane.f32.xlu0 %v387
        %v389 = vpop.xlane.xlu0 %388
        %vm392 = vcmask 1044480
        %v393 = vrot.slane %v383, 3
        %v394 = vrot.slane %v389, 3
        %v395 = vsel %vm392, %v393, %v394
        %v397 = vadd.f32 %v354, %v395
        %v398 = vld [vmem:[%s294] sm:$0xcc]
        %v399 = vunpack.c.l.bf16 %v398
        %v400 = vunpack.c.h.bf16 %v398
        %s401 = scalar_lea.vmem %s1, 6
        %v402 = vld [vmem:[%s401] sm:$0x3]
        %v404 = vlaneseq
        %v405 = vshrl.u32 %v404, 7
        %v406 = vsub.s32 0, %v405
        %v407 = vrot.slane %v402, %v406
        %v408 = vlaneseq
        %v409 = vshrl.u32 %v408, 7
        %v410 = vsub.s32 1, %v409
        %v411 = vrot.slane %v402, %v410
        %v414 = vmul.f32 %v399, %v407
        %v415 = vmul.f32 %v400, %v411
        %v416 = vmul.f32 %v359, %v407
        %v417 = vmul.f32 %v360, %v411
        %vm418 = vcmask 1047556
        %v419 = vsel %vm418, %v414, 0.0
        %v420 = vsel %vm418, %v415, 0.0
        %v421 = vadd.f32 %v419, %v420
        %422 = vadd.xlane.f32.xlu0 %v421
        %v423 = vpop.xlane.xlu0 %422
        %vm424 = vcmask 1041408
        %v425 = vsel %vm424, %v416, 0.0
        %v426 = vsel %vm424, %v417, 0.0
        %v427 = vadd.f32 %v425, %v426
        %428 = vadd.xlane.f32.xlu0 %v427
        %v429 = vpop.xlane.xlu0 %428
        %vm432 = vcmask 1043456
        %v433 = vrot.slane %v423, 4
        %v434 = vrot.slane %v429, 4
        %v435 = vsel %vm432, %v433, %v434
        %v437 = vadd.f32 %v397, %v435
        %v438 = vld [vmem:[#allocation2] sm:$0x1]
        %v440 = vlaneseq
        %v441 = vshrl.u32 %v440, 7
        %v442 = vsub.s32 0, %v441
        %v443 = vrot.slane %v438, %v442
        %v445 = vadd.f32 %v437, %v443
        %v446 = vld [vmem:[%s4] sm:$0x3f]
        %v447 = vld [vmem:[%s4 + $0x8] sm:$0x3f]
        %v448 = vld [vmem:[%s4 + $0x10] sm:$0x3f]
        %v449 = vld [vmem:[%s4 + $0x18] sm:$0x3f]
        %451 = vset.pattern.permute.xlu0 0
        %452 = vperm.xlu0 %451, %v445
        %v453 = vpop.permute.xlu0 %452
        %v455 = vmul.f32 %v453, %v446
        %v456 = vmul.f32 %v453, %v447
        %v457 = vmul.f32 %v453, %v448
        %v458 = vmul.f32 %v453, %v449
        %v459 = vld [vmem:[%s299] sm:$0xff]
        %v460 = vld [vmem:[%s299 + $0x8] sm:$0xff]
        %v461 = vld [vmem:[%s299 + $0x10] sm:$0xff]
        %v462 = vld [vmem:[%s299 + $0x18] sm:$0xff]
        %v463 = vld [vmem:[%s299 + $0x20] sm:$0xff]
        %v464 = vld [vmem:[%s299 + $0x28] sm:$0xff]
        %v465 = vld [vmem:[%s299 + $0x30] sm:$0xff]
        %v466 = vld [vmem:[%s299 + $0x38] sm:$0xff]
        %v467 = vld [vmem:[%s299 + $0x40] sm:$0xff]
        %v468 = vld [vmem:[%s299 + $0x48] sm:$0xff]
        %v469 = vld [vmem:[%s299 + $0x50] sm:$0xff]
        %v470 = vld [vmem:[%s299 + $0x58] sm:$0xff]
        %v471 = vld [vmem:[%s299 + $0x60] sm:$0xff]
        %v472 = vld [vmem:[%s299 + $0x68] sm:$0xff]
        %v473 = vld [vmem:[%s299 + $0x70] sm:$0xff]
        %v474 = vld [vmem:[%s299 + $0x78] sm:$0xff]
        %vm475 = vcmask 48128
        %v477 = vsel %vm475, %v459, 0
        %v480 = vsel %vm475, %v460, 0
        %v483 = vsel %vm475, %v461, 0
        %v486 = vsel %vm475, %v462, 0
        %v489 = vsel %vm475, %v463, 0
        %v492 = vsel %vm475, %v464, 0
        %v495 = vsel %vm475, %v465, 0
        %v498 = vsel %vm475, %v466, 0
        %v501 = vsel %vm475, %v467, 0
        %v504 = vsel %vm475, %v468, 0
        %v507 = vsel %vm475, %v469, 0
        %v510 = vsel %vm475, %v470, 0
        %v513 = vsel %vm475, %v471, 0
        %v516 = vsel %vm475, %v472, 0
        %v519 = vsel %vm475, %v473, 0
        %v522 = vsel %vm475, %v474, 0
        %v525 = vsel %vm320, %v455, 0
        %v528 = vsel %vm320, %v456, 0
        %v531 = vsel %vm320, %v457, 0
        %v534 = vsel %vm320, %v458, 0
        %536 = vmatprep.subr.mxu0 %v528
        %537 = vmatpush1.msra.mxu0 %v525
        %538 = vmatprep.subr.mxu0 0.0
        %539 = vmatpush1.msra.mxu0 0.0
        %540 = vmatprep.subr.mxu0 0.0
        %541 = vmatpush1.msra.mxu0 0.0
        %542 = vmatprep.subr.mxu0 0.0
        %543 = vmatpush1.msra.mxu0 0.0
        %544 = vmatprep.subr.mxu0 0.0
        %545 = vmatpush1.msra.mxu0 0.0
        %546 = vmatprep.subr.mxu0 0.0
        %547 = vmatpush1.msra.mxu0 0.0
        %548 = vmatprep.subr.mxu0 0.0
        %549 = vmatpush1.msra.mxu0 0.0
        %550 = vmatprep.subr.mxu0 0.0
        %551 = vmatpush1.msra.mxu0 0.0
        %552 = vmatprep.subr.mxu0 0.0
        %553 = vmatpush1.msra.mxu0 0.0
        %554 = vmatprep.subr.mxu0 0.0
        %555 = vmatpush1.msra.mxu0 0.0
        %556 = vmatprep.subr.mxu0 0.0
        %557 = vmatpush1.msra.mxu0 0.0
        %558 = vmatprep.subr.mxu0 0.0
        %559 = vmatpush1.msra.mxu0 0.0
        %560 = vmatprep.subr.mxu0 0.0
        %561 = vmatpush1.msra.mxu0 0.0
        %562 = vmatprep.subr.mxu0 0.0
        %563 = vmatpush1.msra.mxu0 0.0
        %564 = vmatprep.subr.mxu0 0.0
        %565 = vmatpush1.msra.mxu0 0.0
        %566 = vmatprep.subr.mxu0 0.0
        %567 = vmatpush1.msra.mxu0 0.0
        %568 = vmatprep.subr.mxu0 0.0
        %569 = vmatpush1.msra.mxu0 0.0
        %570 = vmatprep.subr.mxu0 0.0
        %571 = vmatpush1.msra.mxu0 0.0
        %572 = vmatprep.subr.mxu0 0.0
        %573 = vmatpush1.msra.mxu0 0.0
        %574 = vmatprep.subr.mxu0 0.0
        %575 = vmatpush1.msra.mxu0 0.0
        %576 = vmatprep.subr.mxu0 0.0
        %577 = vmatpush1.msra.mxu0 0.0
        %578 = vmatprep.subr.mxu0 0.0
        %579 = vmatpush1.msra.mxu0 0.0
        %580 = vmatprep.subr.mxu0 0.0
        %581 = vmatpush1.msra.mxu0 0.0
        %582 = vmatprep.subr.mxu0 0.0
        %583 = vmatpush1.msra.mxu0 0.0
        %584 = vmatprep.subr.mxu0 0.0
        %585 = vmatpush1.msra.mxu0 0.0
        %586 = vmatprep.subr.mxu0 0.0
        %587 = vmatpush1.msra.mxu0 0.0
        %588 = vmatprep.subr.mxu0 0.0
        %589 = vmatpush1.msra.mxu0 0.0
        %590 = vmatprep.subr.mxu0 0.0
        %591 = vmatpush1.msra.mxu0 0.0
        %592 = vmatprep.subr.mxu0 0.0
        %593 = vmatpush1.msra.mxu0 0.0
        %594 = vmatprep.subr.mxu0 0.0
        %595 = vmatpush1.msra.mxu0 0.0
        %596 = vmatprep.subr.mxu0 0.0
        %597 = vmatpush1.msra.mxu0 0.0
        %598 = vmatprep.subr.mxu0 0.0
        %599 = vmatpush1.msra.mxu0 0.0
        %600 = vmatprep.mubr.f32.mxu0 0.0
        %601 = vmatmul.mubr.f32.gmra.mrb[0].mxu0 %v477
        %v602 = vpop.f32.mrb[0].mxu0
        %v603 = vadd.f32 0.0, %v602
        %v604 = vpop.f32.mrb[0].mxu0
        %v605 = vadd.f32 0.0, %v604
        %606 = vmatprep.mubr.f32.mxu0 0.0
        %607 = vmatmul.mubr.f32.gmra.mrb[0].mxu0 %v480
        %v608 = vpop.f32.mrb[0].mxu0
        %v609 = vadd.f32 0.0, %v608
        %v610 = vpop.f32.mrb[0].mxu0
        %v611 = vadd.f32 0.0, %v610
        %612 = vmatprep.mubr.f32.mxu0 0.0
        %613 = vmatmul.mubr.f32.gmra.mrb[0].mxu0 %v483
        %v614 = vpop.f32.mrb[0].mxu0
        %v615 = vadd.f32 0.0, %v614
        %v616 = vpop.f32.mrb[0].mxu0
        %v617 = vadd.f32 0.0, %v616
        %618 = vmatprep.mubr.f32.mxu0 0.0
        %619 = vmatmul.mubr.f32.gmra.mrb[0].mxu0 %v486
        %v620 = vpop.f32.mrb[0].mxu0
        %v621 = vadd.f32 0.0, %v620
        %v622 = vpop.f32.mrb[0].mxu0
        %v623 = vadd.f32 0.0, %v622
        %624 = vmatprep.mubr.f32.mxu0 0.0
        %625 = vmatmul.mubr.f32.gmra.mrb[0].mxu0 %v489
        %v626 = vpop.f32.mrb[0].mxu0
        %v627 = vadd.f32 0.0, %v626
        %v628 = vpop.f32.mrb[0].mxu0
        %v629 = vadd.f32 0.0, %v628
        %630 = vmatprep.mubr.f32.mxu0 0.0
        %631 = vmatmul.mubr.f32.gmra.mrb[0].mxu0 %v492
        %v632 = vpop.f32.mrb[0].mxu0
        %v633 = vadd.f32 0.0, %v632
        %v634 = vpop.f32.mrb[0].mxu0
        %v635 = vadd.f32 0.0, %v634
        %636 = vmatprep.mubr.f32.mxu0 0.0
        %637 = vmatmul.mubr.f32.gmra.mrb[0].mxu0 %v495
        %v638 = vpop.f32.mrb[0].mxu0
        %v639 = vadd.f32 0.0, %v638
        %v640 = vpop.f32.mrb[0].mxu0
        %v641 = vadd.f32 0.0, %v640
        %642 = vmatprep.mubr.f32.mxu0 0.0
        %643 = vmatmul.mubr.f32.gmra.mrb[0].mxu0 %v498
        %v644 = vpop.f32.mrb[0].mxu0
        %v645 = vadd.f32 0.0, %v644
        %v646 = vpop.f32.mrb[0].mxu0
        %v647 = vadd.f32 0.0, %v646
        %648 = vmatprep.mubr.f32.mxu0 0.0
        %649 = vmatmul.mubr.f32.gmra.mrb[0].mxu0 %v501
        %v650 = vpop.f32.mrb[0].mxu0
        %v651 = vadd.f32 0.0, %v650
        %v652 = vpop.f32.mrb[0].mxu0
        %v653 = vadd.f32 0.0, %v652
        %654 = vmatprep.mubr.f32.mxu0 0.0
        %655 = vmatmul.mubr.f32.gmra.mrb[0].mxu0 %v504
        %v656 = vpop.f32.mrb[0].mxu0
        %v657 = vadd.f32 0.0, %v656
        %v658 = vpop.f32.mrb[0].mxu0
        %v659 = vadd.f32 0.0, %v658
        %660 = vmatprep.mubr.f32.mxu0 0.0
        %661 = vmatmul.mubr.f32.gmra.mrb[0].mxu0 %v507
        %v662 = vpop.f32.mrb[0].mxu0
        %v663 = vadd.f32 0.0, %v662
        %v664 = vpop.f32.mrb[0].mxu0
        %v665 = vadd.f32 0.0, %v664
        %666 = vmatprep.mubr.f32.mxu0 0.0
        %667 = vmatmul.mubr.f32.gmra.mrb[0].mxu0 %v510
        %v668 = vpop.f32.mrb[0].mxu0
        %v669 = vadd.f32 0.0, %v668
        %v670 = vpop.f32.mrb[0].mxu0
        %v671 = vadd.f32 0.0, %v670
        %672 = vmatprep.mubr.f32.mxu0 0.0
        %673 = vmatmul.mubr.f32.gmra.mrb[0].mxu0 %v513
        %v674 = vpop.f32.mrb[0].mxu0
        %v675 = vadd.f32 0.0, %v674
        %v676 = vpop.f32.mrb[0].mxu0
        %v677 = vadd.f32 0.0, %v676
        %678 = vmatprep.mubr.f32.mxu0 0.0
        %679 = vmatmul.mubr.f32.gmra.mrb[0].mxu0 %v516
        %v680 = vpop.f32.mrb[0].mxu0
        %v681 = vadd.f32 0.0, %v680
        %v682 = vpop.f32.mrb[0].mxu0
        %v683 = vadd.f32 0.0, %v682
        %684 = vmatprep.mubr.f32.mxu0 0.0
        %685 = vmatmul.mubr.f32.gmra.mrb[0].mxu0 %v519
        %v686 = vpop.f32.mrb[0].mxu0
        %v687 = vadd.f32 0.0, %v686
        %v688 = vpop.f32.mrb[0].mxu0
        %v689 = vadd.f32 0.0, %v688
        %690 = vmatprep.mubr.f32.mxu0 0.0
        %691 = vmatmul.mubr.f32.gmra.mrb[0].mxu0 %v522
        %v692 = vpop.f32.mrb[0].mxu0
        %v693 = vadd.f32 0.0, %v692
        %v694 = vpop.f32.mrb[0].mxu0
        %v695 = vadd.f32 0.0, %v694
        %696 = vdwg.mxu0
        %697 = vmatprep.subr.mxu0 %v534
        %698 = vmatpush1.msra.mxu0 %v531
        %699 = vmatprep.subr.mxu0 0.0
        %700 = vmatpush1.msra.mxu0 0.0
        %701 = vmatprep.subr.mxu0 0.0
        %702 = vmatpush1.msra.mxu0 0.0
        %703 = vmatprep.subr.mxu0 0.0
        %704 = vmatpush1.msra.mxu0 0.0
        %705 = vmatprep.subr.mxu0 0.0
        %706 = vmatpush1.msra.mxu0 0.0
        %707 = vmatprep.subr.mxu0 0.0
        %708 = vmatpush1.msra.mxu0 0.0
        %709 = vmatprep.subr.mxu0 0.0
        %710 = vmatpush1.msra.mxu0 0.0
        %711 = vmatprep.subr.mxu0 0.0
        %712 = vmatpush1.msra.mxu0 0.0
        %713 = vmatprep.subr.mxu0 0.0
        %714 = vmatpush1.msra.mxu0 0.0
        %715 = vmatprep.subr.mxu0 0.0
        %716 = vmatpush1.msra.mxu0 0.0
        %717 = vmatprep.subr.mxu0 0.0
        %718 = vmatpush1.msra.mxu0 0.0
        %719 = vmatprep.subr.mxu0 0.0
        %720 = vmatpush1.msra.mxu0 0.0
        %721 = vmatprep.subr.mxu0 0.0
        %722 = vmatpush1.msra.mxu0 0.0
        %723 = vmatprep.subr.mxu0 0.0
        %724 = vmatpush1.msra.mxu0 0.0
        %725 = vmatprep.subr.mxu0 0.0
        %726 = vmatpush1.msra.mxu0 0.0
        %727 = vmatprep.subr.mxu0 0.0
        %728 = vmatpush1.msra.mxu0 0.0
        %729 = vmatprep.subr.mxu0 0.0
        %730 = vmatpush1.msra.mxu0 0.0
        %731 = vmatprep.subr.mxu0 0.0
        %732 = vmatpush1.msra.mxu0 0.0
        %733 = vmatprep.subr.mxu0 0.0
        %734 = vmatpush1.msra.mxu0 0.0
        %735 = vmatprep.subr.mxu0 0.0
        %736 = vmatpush1.msra.mxu0 0.0
        %737 = vmatprep.subr.mxu0 0.0
        %738 = vmatpush1.msra.mxu0 0.0
        %739 = vmatprep.subr.mxu0 0.0
        %740 = vmatpush1.msra.mxu0 0.0
        %741 = vmatprep.subr.mxu0 0.0
        %742 = vmatpush1.msra.mxu0 0.0
        %743 = vmatprep.subr.mxu0 0.0
        %744 = vmatpush1.msra.mxu0 0.0
        %745 = vmatprep.subr.mxu0 0.0
        %746 = vmatpush1.msra.mxu0 0.0
        %747 = vmatprep.subr.mxu0 0.0
        %748 = vmatpush1.msra.mxu0 0.0
        %749 = vmatprep.subr.mxu0 0.0
        %750 = vmatpush1.msra.mxu0 0.0
        %751 = vmatprep.subr.mxu0 0.0
        %752 = vmatpush1.msra.mxu0 0.0
        %753 = vmatprep.subr.mxu0 0.0
        %754 = vmatpush1.msra.mxu0 0.0
        %755 = vmatprep.subr.mxu0 0.0
        %756 = vmatpush1.msra.mxu0 0.0
        %757 = vmatprep.subr.mxu0 0.0
        %758 = vmatpush1.msra.mxu0 0.0
        %759 = vmatprep.subr.mxu0 0.0
        %760 = vmatpush1.msra.mxu0 0.0
        %761 = vmatprep.mubr.f32.mxu0 0.0
        %762 = vmatmul.mubr.f32.gmra.mrb[0].mxu0 %v477
        %v763 = vpop.f32.mrb[0].mxu0
        %v764 = vadd.f32 0.0, %v763
        %v765 = vpop.f32.mrb[0].mxu0
        %v766 = vadd.f32 0.0, %v765
        %767 = vmatprep.mubr.f32.mxu0 0.0
        %768 = vmatmul.mubr.f32.gmra.mrb[0].mxu0 %v480
        %v769 = vpop.f32.mrb[0].mxu0
        %v770 = vadd.f32 0.0, %v769
        %v771 = vpop.f32.mrb[0].mxu0
        %v772 = vadd.f32 0.0, %v771
        %773 = vmatprep.mubr.f32.mxu0 0.0
        %774 = vmatmul.mubr.f32.gmra.mrb[0].mxu0 %v483
        %v775 = vpop.f32.mrb[0].mxu0
        %v776 = vadd.f32 0.0, %v775
        %v777 = vpop.f32.mrb[0].mxu0
        %v778 = vadd.f32 0.0, %v777
        %779 = vmatprep.mubr.f32.mxu0 0.0
        %780 = vmatmul.mubr.f32.gmra.mrb[0].mxu0 %v486
        %v781 = vpop.f32.mrb[0].mxu0
        %v782 = vadd.f32 0.0, %v781
        %v783 = vpop.f32.mrb[0].mxu0
        %v784 = vadd.f32 0.0, %v783
        %785 = vmatprep.mubr.f32.mxu0 0.0
        %786 = vmatmul.mubr.f32.gmra.mrb[0].mxu0 %v489
        %v787 = vpop.f32.mrb[0].mxu0
        %v788 = vadd.f32 0.0, %v787
        %v789 = vpop.f32.mrb[0].mxu0
        %v790 = vadd.f32 0.0, %v789
        %791 = vmatprep.mubr.f32.mxu0 0.0
        %792 = vmatmul.mubr.f32.gmra.mrb[0].mxu0 %v492
        %v793 = vpop.f32.mrb[0].mxu0
        %v794 = vadd.f32 0.0, %v793
        %v795 = vpop.f32.mrb[0].mxu0
        %v796 = vadd.f32 0.0, %v795
        %797 = vmatprep.mubr.f32.mxu0 0.0
        %798 = vmatmul.mubr.f32.gmra.mrb[0].mxu0 %v495
        %v799 = vpop.f32.mrb[0].mxu0
        %v800 = vadd.f32 0.0, %v799
        %v801 = vpop.f32.mrb[0].mxu0
        %v802 = vadd.f32 0.0, %v801
        %803 = vmatprep.mubr.f32.mxu0 0.0
        %804 = vmatmul.mubr.f32.gmra.mrb[0].mxu0 %v498
        %v805 = vpop.f32.mrb[0].mxu0
        %v806 = vadd.f32 0.0, %v805
        %v807 = vpop.f32.mrb[0].mxu0
        %v808 = vadd.f32 0.0, %v807
        %809 = vmatprep.mubr.f32.mxu0 0.0
        %810 = vmatmul.mubr.f32.gmra.mrb[0].mxu0 %v501
        %v811 = vpop.f32.mrb[0].mxu0
        %v812 = vadd.f32 0.0, %v811
        %v813 = vpop.f32.mrb[0].mxu0
        %v814 = vadd.f32 0.0, %v813
        %815 = vmatprep.mubr.f32.mxu0 0.0
        %816 = vmatmul.mubr.f32.gmra.mrb[0].mxu0 %v504
        %v817 = vpop.f32.mrb[0].mxu0
        %v818 = vadd.f32 0.0, %v817
        %v819 = vpop.f32.mrb[0].mxu0
        %v820 = vadd.f32 0.0, %v819
        %821 = vmatprep.mubr.f32.mxu0 0.0
        %822 = vmatmul.mubr.f32.gmra.mrb[0].mxu0 %v507
        %v823 = vpop.f32.mrb[0].mxu0
        %v824 = vadd.f32 0.0, %v823
        %v825 = vpop.f32.mrb[0].mxu0
        %v826 = vadd.f32 0.0, %v825
        %827 = vmatprep.mubr.f32.mxu0 0.0
        %828 = vmatmul.mubr.f32.gmra.mrb[0].mxu0 %v510
        %v829 = vpop.f32.mrb[0].mxu0
        %v830 = vadd.f32 0.0, %v829
        %v831 = vpop.f32.mrb[0].mxu0
        %v832 = vadd.f32 0.0, %v831
        %833 = vmatprep.mubr.f32.mxu0 0.0
        %834 = vmatmul.mubr.f32.gmra.mrb[0].mxu0 %v513
        %v835 = vpop.f32.mrb[0].mxu0
        %v836 = vadd.f32 0.0, %v835
        %v837 = vpop.f32.mrb[0].mxu0
        %v838 = vadd.f32 0.0, %v837
        %839 = vmatprep.mubr.f32.mxu0 0.0
        %840 = vmatmul.mubr.f32.gmra.mrb[0].mxu0 %v516
        %v841 = vpop.f32.mrb[0].mxu0
        %v842 = vadd.f32 0.0, %v841
        %v843 = vpop.f32.mrb[0].mxu0
        %v844 = vadd.f32 0.0, %v843
        %845 = vmatprep.mubr.f32.mxu0 0.0
        %846 = vmatmul.mubr.f32.gmra.mrb[0].mxu0 %v519
        %v847 = vpop.f32.mrb[0].mxu0
        %v848 = vadd.f32 0.0, %v847
        %v849 = vpop.f32.mrb[0].mxu0
        %v850 = vadd.f32 0.0, %v849
        %851 = vmatprep.mubr.f32.mxu0 0.0
        %852 = vmatmul.mubr.f32.gmra.mrb[0].mxu0 %v522
        %v853 = vpop.f32.mrb[0].mxu0
        %v854 = vadd.f32 0.0, %v853
        %v855 = vpop.f32.mrb[0].mxu0
        %v856 = vadd.f32 0.0, %v855
        %857 = vdwg.mxu0
        %858 = vst [vmem:[%s282] sm:$0xff] %v603
        %859 = vst [vmem:[%s282 + $0x8] sm:$0xff] %v605
        %860 = vst [vmem:[%s282 + $0x10] sm:$0xff] %v764
        %861 = vst [vmem:[%s282 + $0x18] sm:$0xff] %v766
        %862 = vst [vmem:[%s282 + $0x20] sm:$0xff] %v609
        %863 = vst [vmem:[%s282 + $0x28] sm:$0xff] %v611
        %864 = vst [vmem:[%s282 + $0x30] sm:$0xff] %v770
        %865 = vst [vmem:[%s282 + $0x38] sm:$0xff] %v772
        %866 = vst [vmem:[%s282 + $0x40] sm:$0xff] %v615
        %867 = vst [vmem:[%s282 + $0x48] sm:$0xff] %v617
        %868 = vst [vmem:[%s282 + $0x50] sm:$0xff] %v776
        %869 = vst [vmem:[%s282 + $0x58] sm:$0xff] %v778
        %870 = vst [vmem:[%s282 + $0x60] sm:$0xff] %v621
        %871 = vst [vmem:[%s282 + $0x68] sm:$0xff] %v623
        %872 = vst [vmem:[%s282 + $0x70] sm:$0xff] %v782
        %873 = vst [vmem:[%s282 + $0x78] sm:$0xff] %v784
        %874 = vst [vmem:[%s282 + $0x80] sm:$0xff] %v627
        %875 = vst [vmem:[%s282 + $0x88] sm:$0xff] %v629
        %876 = vst [vmem:[%s282 + $0x90] sm:$0xff] %v788
        %877 = vst [vmem:[%s282 + $0x98] sm:$0xff] %v790
        %878 = vst [vmem:[%s282 + $0xa0] sm:$0xff] %v633
        %879 = vst [vmem:[%s282 + $0xa8] sm:$0xff] %v635
        %880 = vst [vmem:[%s282 + $0xb0] sm:$0xff] %v794
        %881 = vst [vmem:[%s282 + $0xb8] sm:$0xff] %v796
        %882 = vst [vmem:[%s282 + $0xc0] sm:$0xff] %v639
        %883 = vst [vmem:[%s282 + $0xc8] sm:$0xff] %v641
        %884 = vst [vmem:[%s282 + $0xd0] sm:$0xff] %v800
        %885 = vst [vmem:[%s282 + $0xd8] sm:$0xff] %v802
        %886 = vst [vmem:[%s282 + $0xe0] sm:$0xff] %v645
        %887 = vst [vmem:[%s282 + $0xe8] sm:$0xff] %v647
        %888 = vst [vmem:[%s282 + $0xf0] sm:$0xff] %v806
        %889 = vst [vmem:[%s282 + $0xf8] sm:$0xff] %v808
        %890 = vst [vmem:[%s282 + $0x100] sm:$0xff] %v651
        %891 = vst [vmem:[%s282 + $0x108] sm:$0xff] %v653
        %892 = vst [vmem:[%s282 + $0x110] sm:$0xff] %v812
        %893 = vst [vmem:[%s282 + $0x118] sm:$0xff] %v814
        %894 = vst [vmem:[%s282 + $0x120] sm:$0xff] %v657
        %895 = vst [vmem:[%s282 + $0x128] sm:$0xff] %v659
        %896 = vst [vmem:[%s282 + $0x130] sm:$0xff] %v818
        %897 = vst [vmem:[%s282 + $0x138] sm:$0xff] %v820
        %898 = vst [vmem:[%s282 + $0x140] sm:$0xff] %v663
        %899 = vst [vmem:[%s282 + $0x148] sm:$0xff] %v665
        %900 = vst [vmem:[%s282 + $0x150] sm:$0xff] %v824
        %901 = vst [vmem:[%s282 + $0x158] sm:$0xff] %v826
        %902 = vst [vmem:[%s282 + $0x160] sm:$0xff] %v669
        %903 = vst [vmem:[%s282 + $0x168] sm:$0xff] %v671
        %904 = vst [vmem:[%s282 + $0x170] sm:$0xff] %v830
        %905 = vst [vmem:[%s282 + $0x178] sm:$0xff] %v832
        %906 = vst [vmem:[%s282 + $0x180] sm:$0xff] %v675
        %907 = vst [vmem:[%s282 + $0x188] sm:$0xff] %v677
        %908 = vst [vmem:[%s282 + $0x190] sm:$0xff] %v836
        %909 = vst [vmem:[%s282 + $0x198] sm:$0xff] %v838
        %910 = vst [vmem:[%s282 + $0x1a0] sm:$0xff] %v681
        %911 = vst [vmem:[%s282 + $0x1a8] sm:$0xff] %v683
        %912 = vst [vmem:[%s282 + $0x1b0] sm:$0xff] %v842
        %913 = vst [vmem:[%s282 + $0x1b8] sm:$0xff] %v844
        %914 = vst [vmem:[%s282 + $0x1c0] sm:$0xff] %v687
        %915 = vst [vmem:[%s282 + $0x1c8] sm:$0xff] %v689
        %916 = vst [vmem:[%s282 + $0x1d0] sm:$0xff] %v848
        %917 = vst [vmem:[%s282 + $0x1d8] sm:$0xff] %v850
        %918 = vst [vmem:[%s282 + $0x1e0] sm:$0xff] %v693
        %919 = vst [vmem:[%s282 + $0x1e8] sm:$0xff] %v695
        %920 = vst [vmem:[%s282 + $0x1f0] sm:$0xff] %v854
        %921 = vst [vmem:[%s282 + $0x1f8] sm:$0xff] %v856
        %v922 = vxor.u32 %v603, 2147483648
        %v923 = vxor.u32 %v605, 2147483648
        %v924 = vxor.u32 %v764, 2147483648
        %v925 = vxor.u32 %v766, 2147483648
        %v926 = vxor.u32 %v609, 2147483648
        %v927 = vxor.u32 %v611, 2147483648
        %v928 = vxor.u32 %v770, 2147483648
        %v929 = vxor.u32 %v772, 2147483648
        %v930 = vxor.u32 %v615, 2147483648
        %v931 = vxor.u32 %v617, 2147483648
        %v932 = vxor.u32 %v776, 2147483648
        %v933 = vxor.u32 %v778, 2147483648
        %v934 = vxor.u32 %v621, 2147483648
        %v935 = vxor.u32 %v623, 2147483648
        %v936 = vxor.u32 %v782, 2147483648
        %v937 = vxor.u32 %v784, 2147483648
        %v938 = vxor.u32 %v627, 2147483648
        %v939 = vxor.u32 %v629, 2147483648
        %v940 = vxor.u32 %v788, 2147483648
        %v941 = vxor.u32 %v790, 2147483648
        %v942 = vxor.u32 %v633, 2147483648
        %v943 = vxor.u32 %v635, 2147483648
        %v944 = vxor.u32 %v794, 2147483648
        %v945 = vxor.u32 %v796, 2147483648
        %v946 = vxor.u32 %v639, 2147483648
        %v947 = vxor.u32 %v641, 2147483648
        %v948 = vxor.u32 %v800, 2147483648
        %v949 = vxor.u32 %v802, 2147483648
        %v950 = vxor.u32 %v645, 2147483648
        %v951 = vxor.u32 %v647, 2147483648
        %v952 = vxor.u32 %v806, 2147483648
        %v953 = vxor.u32 %v808, 2147483648
        %v954 = vxor.u32 %v651, 2147483648
        %v955 = vxor.u32 %v653, 2147483648
        %v956 = vxor.u32 %v812, 2147483648
        %v957 = vxor.u32 %v814, 2147483648
        %v958 = vxor.u32 %v657, 2147483648
        %v959 = vxor.u32 %v659, 2147483648
        %v960 = vxor.u32 %v818, 2147483648
        %v961 = vxor.u32 %v820, 2147483648
        %v962 = vxor.u32 %v663, 2147483648
        %v963 = vxor.u32 %v665, 2147483648
        %v964 = vxor.u32 %v824, 2147483648
        %v965 = vxor.u32 %v826, 2147483648
        %v966 = vxor.u32 %v669, 2147483648
        %v967 = vxor.u32 %v671, 2147483648
        %v968 = vxor.u32 %v830, 2147483648
        %v969 = vxor.u32 %v832, 2147483648
        %v970 = vxor.u32 %v675, 2147483648
        %v971 = vxor.u32 %v677, 2147483648
        %v972 = vxor.u32 %v836, 2147483648
        %v973 = vxor.u32 %v838, 2147483648
        %v974 = vxor.u32 %v681, 2147483648
        %v975 = vxor.u32 %v683, 2147483648
        %v976 = vxor.u32 %v842, 2147483648
        %v977 = vxor.u32 %v844, 2147483648
        %v978 = vxor.u32 %v687, 2147483648
        %v979 = vxor.u32 %v689, 2147483648
        %v980 = vxor.u32 %v848, 2147483648
        %v981 = vxor.u32 %v850, 2147483648
        %v982 = vxor.u32 %v693, 2147483648
        %v983 = vxor.u32 %v695, 2147483648
        %v984 = vxor.u32 %v854, 2147483648
        %v985 = vxor.u32 %v856, 2147483648
        %v986 = vmul.f32 %v922, 1.442695
        %v987 = vpow.pop %v986
        %v988 = vmul.f32 %v923, 1.442695
        %v989 = vpow.pop %v988
        %v990 = vmul.f32 %v924, 1.442695
        %v991 = vpow.pop %v990
        %v992 = vmul.f32 %v925, 1.442695
        %v993 = vpow.pop %v992
        %v994 = vmul.f32 %v926, 1.442695
        %v995 = vpow.pop %v994
        %v996 = vmul.f32 %v927, 1.442695
        %v997 = vpow.pop %v996
        %v998 = vmul.f32 %v928, 1.442695
        %v999 = vpow.pop %v998
        %v1000 = vmul.f32 %v929, 1.442695
        %v1001 = vpow.pop %v1000
        %v1002 = vmul.f32 %v930, 1.442695
        %v1003 = vpow.pop %v1002
        %v1004 = vmul.f32 %v931, 1.442695
        %v1005 = vpow.pop %v1004
        %v1006 = vmul.f32 %v932, 1.442695
        %v1007 = vpow.pop %v1006
        %v1008 = vmul.f32 %v933, 1.442695
        %v1009 = vpow.pop %v1008
        %v1010 = vmul.f32 %v934, 1.442695
        %v1011 = vpow.pop %v1010
        %v1012 = vmul.f32 %v935, 1.442695
        %v1013 = vpow.pop %v1012
        %v1014 = vmul.f32 %v936, 1.442695
        %v1015 = vpow.pop %v1014
        %v1016 = vmul.f32 %v937, 1.442695
        %v1017 = vpow.pop %v1016
        %v1018 = vmul.f32 %v938, 1.442695
        %v1019 = vpow.pop %v1018
        %v1020 = vmul.f32 %v939, 1.442695
        %v1021 = vpow.pop %v1020
        %v1022 = vmul.f32 %v940, 1.442695
        %v1023 = vpow.pop %v1022
        %v1024 = vmul.f32 %v941, 1.442695
        %v1025 = vpow.pop %v1024
        %v1026 = vmul.f32 %v942, 1.442695
        %v1027 = vpow.pop %v1026
        %v1028 = vmul.f32 %v943, 1.442695
        %v1029 = vpow.pop %v1028
        %v1030 = vmul.f32 %v944, 1.442695
        %v1031 = vpow.pop %v1030
        %v1032 = vmul.f32 %v945, 1.442695
        %v1033 = vpow.pop %v1032
        %v1034 = vmul.f32 %v946, 1.442695
        %v1035 = vpow.pop %v1034
        %v1036 = vmul.f32 %v947, 1.442695
        %v1037 = vpow.pop %v1036
        %v1038 = vmul.f32 %v948, 1.442695
        %v1039 = vpow.pop %v1038
        %v1040 = vmul.f32 %v949, 1.442695
        %v1041 = vpow.pop %v1040
        %v1042 = vmul.f32 %v950, 1.442695
        %v1043 = vpow.pop %v1042
        %v1044 = vmul.f32 %v951, 1.442695
        %v1045 = vpow.pop %v1044
        %v1046 = vmul.f32 %v952, 1.442695
        %v1047 = vpow.pop %v1046
        %v1048 = vmul.f32 %v953, 1.442695
        %v1049 = vpow.pop %v1048
        %v1050 = vmul.f32 %v954, 1.442695
        %v1051 = vpow.pop %v1050
        %v1052 = vmul.f32 %v955, 1.442695
        %v1053 = vpow.pop %v1052
        %v1054 = vmul.f32 %v956, 1.442695
        %v1055 = vpow.pop %v1054
        %v1056 = vmul.f32 %v957, 1.442695
        %v1057 = vpow.pop %v1056
        %v1058 = vmul.f32 %v958, 1.442695
        %v1059 = vpow.pop %v1058
        %v1060 = vmul.f32 %v959, 1.442695
        %v1061 = vpow.pop %v1060
        %v1062 = vmul.f32 %v960, 1.442695
        %v1063 = vpow.pop %v1062
        %v1064 = vmul.f32 %v961, 1.442695
        %v1065 = vpow.pop %v1064
        %v1066 = vmul.f32 %v962, 1.442695
        %v1067 = vpow.pop %v1066
        %v1068 = vmul.f32 %v963, 1.442695
        %v1069 = vpow.pop %v1068
        %v1070 = vmul.f32 %v964, 1.442695
        %v1071 = vpow.pop %v1070
        %v1072 = vmul.f32 %v965, 1.442695
        %v1073 = vpow.pop %v1072
        %v1074 = vmul.f32 %v966, 1.442695
        %v1075 = vpow.pop %v1074
        %v1076 = vmul.f32 %v967, 1.442695
        %v1077 = vpow.pop %v1076
        %v1078 = vmul.f32 %v968, 1.442695
        %v1079 = vpow.pop %v1078
        %v1080 = vmul.f32 %v969, 1.442695
        %v1081 = vpow.pop %v1080
        %v1082 = vmul.f32 %v970, 1.442695
        %v1083 = vpow.pop %v1082
        %v1084 = vmul.f32 %v971, 1.442695
        %v1085 = vpow.pop %v1084
        %v1086 = vmul.f32 %v972, 1.442695
        %v1087 = vpow.pop %v1086
        %v1088 = vmul.f32 %v973, 1.442695
        %v1089 = vpow.pop %v1088
        %v1090 = vmul.f32 %v974, 1.442695
        %v1091 = vpow.pop %v1090
        %v1092 = vmul.f32 %v975, 1.442695
        %v1093 = vpow.pop %v1092
        %v1094 = vmul.f32 %v976, 1.442695
        %v1095 = vpow.pop %v1094
        %v1096 = vmul.f32 %v977, 1.442695
        %v1097 = vpow.pop %v1096
        %v1098 = vmul.f32 %v978, 1.442695
        %v1099 = vpow.pop %v1098
        %v1100 = vmul.f32 %v979, 1.442695
        %v1101 = vpow.pop %v1100
        %v1102 = vmul.f32 %v980, 1.442695
        %v1103 = vpow.pop %v1102
        %v1104 = vmul.f32 %v981, 1.442695
        %v1105 = vpow.pop %v1104
        %v1106 = vmul.f32 %v982, 1.442695
        %v1107 = vpow.pop %v1106
        %v1108 = vmul.f32 %v983, 1.442695
        %v1109 = vpow.pop %v1108
        %v1110 = vmul.f32 %v984, 1.442695
        %v1111 = vpow.pop %v1110
        %v1112 = vmul.f32 %v985, 1.442695
        %v1113 = vpow.pop %v1112
        %v1114 = vadd.f32 %v987, 1.0
        %v1115 = vadd.f32 %v989, 1.0
        %v1116 = vadd.f32 %v991, 1.0
        %v1117 = vadd.f32 %v993, 1.0
        %v1118 = vadd.f32 %v995, 1.0
        %v1119 = vadd.f32 %v997, 1.0
        %v1120 = vadd.f32 %v999, 1.0
        %v1121 = vadd.f32 %v1001, 1.0
        %v1122 = vadd.f32 %v1003, 1.0
        %v1123 = vadd.f32 %v1005, 1.0
        %v1124 = vadd.f32 %v1007, 1.0
        %v1125 = vadd.f32 %v1009, 1.0
        %v1126 = vadd.f32 %v1011, 1.0
        %v1127 = vadd.f32 %v1013, 1.0
        %v1128 = vadd.f32 %v1015, 1.0
        %v1129 = vadd.f32 %v1017, 1.0
        %v1130 = vadd.f32 %v1019, 1.0
        %v1131 = vadd.f32 %v1021, 1.0
        %v1132 = vadd.f32 %v1023, 1.0
        %v1133 = vadd.f32 %v1025, 1.0
        %v1134 = vadd.f32 %v1027, 1.0
        %v1135 = vadd.f32 %v1029, 1.0
        %v1136 = vadd.f32 %v1031, 1.0
        %v1137 = vadd.f32 %v1033, 1.0
        %v1138 = vadd.f32 %v1035, 1.0
        %v1139 = vadd.f32 %v1037, 1.0
        %v1140 = vadd.f32 %v1039, 1.0
        %v1141 = vadd.f32 %v1041, 1.0
        %v1142 = vadd.f32 %v1043, 1.0
        %v1143 = vadd.f32 %v1045, 1.0
        %v1144 = vadd.f32 %v1047, 1.0
        %v1145 = vadd.f32 %v1049, 1.0
        %v1146 = vadd.f32 %v1051, 1.0
        %v1147 = vadd.f32 %v1053, 1.0
        %v1148 = vadd.f32 %v1055, 1.0
        %v1149 = vadd.f32 %v1057, 1.0
        %v1150 = vadd.f32 %v1059, 1.0
        %v1151 = vadd.f32 %v1061, 1.0
        %v1152 = vadd.f32 %v1063, 1.0
        %v1153 = vadd.f32 %v1065, 1.0
        %v1154 = vadd.f32 %v1067, 1.0
        %v1155 = vadd.f32 %v1069, 1.0
        %v1156 = vadd.f32 %v1071, 1.0
        %v1157 = vadd.f32 %v1073, 1.0
        %v1158 = vadd.f32 %v1075, 1.0
        %v1159 = vadd.f32 %v1077, 1.0
        %v1160 = vadd.f32 %v1079, 1.0
        %v1161 = vadd.f32 %v1081, 1.0
        %v1162 = vadd.f32 %v1083, 1.0
        %v1163 = vadd.f32 %v1085, 1.0
        %v1164 = vadd.f32 %v1087, 1.0
        %v1165 = vadd.f32 %v1089, 1.0
        %v1166 = vadd.f32 %v1091, 1.0
        %v1167 = vadd.f32 %v1093, 1.0
        %v1168 = vadd.f32 %v1095, 1.0
        %v1169 = vadd.f32 %v1097, 1.0
        %v1170 = vadd.f32 %v1099, 1.0
        %v1171 = vadd.f32 %v1101, 1.0
        %v1172 = vadd.f32 %v1103, 1.0
        %v1173 = vadd.f32 %v1105, 1.0
        %v1174 = vadd.f32 %v1107, 1.0
        %v1175 = vadd.f32 %v1109, 1.0
        %v1176 = vadd.f32 %v1111, 1.0
        %v1177 = vadd.f32 %v1113, 1.0
        %v1178 = vrcp.pop %v1114
        %v1179 = vmul.f32 1.0, %v1178
        %v1180 = vrcp.pop %v1115
        %v1181 = vmul.f32 1.0, %v1180
        %v1182 = vrcp.pop %v1116
        %v1183 = vmul.f32 1.0, %v1182
        %v1184 = vrcp.pop %v1117
        %v1185 = vmul.f32 1.0, %v1184
        %v1186 = vrcp.pop %v1118
        %v1187 = vmul.f32 1.0, %v1186
        %v1188 = vrcp.pop %v1119
        %v1189 = vmul.f32 1.0, %v1188
        %v1190 = vrcp.pop %v1120
        %v1191 = vmul.f32 1.0, %v1190
        %v1192 = vrcp.pop %v1121
        %v1193 = vmul.f32 1.0, %v1192
        %v1194 = vrcp.pop %v1122
        %v1195 = vmul.f32 1.0, %v1194
        %v1196 = vrcp.pop %v1123
        %v1197 = vmul.f32 1.0, %v1196
        %v1198 = vrcp.pop %v1124
        %v1199 = vmul.f32 1.0, %v1198
        %v1200 = vrcp.pop %v1125
        %v1201 = vmul.f32 1.0, %v1200
        %v1202 = vrcp.pop %v1126
        %v1203 = vmul.f32 1.0, %v1202
        %v1204 = vrcp.pop %v1127
        %v1205 = vmul.f32 1.0, %v1204
        %v1206 = vrcp.pop %v1128
        %v1207 = vmul.f32 1.0, %v1206
        %v1208 = vrcp.pop %v1129
        %v1209 = vmul.f32 1.0, %v1208
        %v1210 = vrcp.pop %v1130
        %v1211 = vmul.f32 1.0, %v1210
        %v1212 = vrcp.pop %v1131
        %v1213 = vmul.f32 1.0, %v1212
        %v1214 = vrcp.pop %v1132
        %v1215 = vmul.f32 1.0, %v1214
        %v1216 = vrcp.pop %v1133
        %v1217 = vmul.f32 1.0, %v1216
        %v1218 = vrcp.pop %v1134
        %v1219 = vmul.f32 1.0, %v1218
        %v1220 = vrcp.pop %v1135
        %v1221 = vmul.f32 1.0, %v1220
        %v1222 = vrcp.pop %v1136
        %v1223 = vmul.f32 1.0, %v1222
        %v1224 = vrcp.pop %v1137
        %v1225 = vmul.f32 1.0, %v1224
        %v1226 = vrcp.pop %v1138
        %v1227 = vmul.f32 1.0, %v1226
        %v1228 = vrcp.pop %v1139
        %v1229 = vmul.f32 1.0, %v1228
        %v1230 = vrcp.pop %v1140
        %v1231 = vmul.f32 1.0, %v1230
        %v1232 = vrcp.pop %v1141
        %v1233 = vmul.f32 1.0, %v1232
        %v1234 = vrcp.pop %v1142
        %v1235 = vmul.f32 1.0, %v1234
        %v1236 = vrcp.pop %v1143
        %v1237 = vmul.f32 1.0, %v1236
        %v1238 = vrcp.pop %v1144
        %v1239 = vmul.f32 1.0, %v1238
        %v1240 = vrcp.pop %v1145
        %v1241 = vmul.f32 1.0, %v1240
        %v1242 = vrcp.pop %v1146
        %v1243 = vmul.f32 1.0, %v1242
        %v1244 = vrcp.pop %v1147
        %v1245 = vmul.f32 1.0, %v1244
        %v1246 = vrcp.pop %v1148
        %v1247 = vmul.f32 1.0, %v1246
        %v1248 = vrcp.pop %v1149
        %v1249 = vmul.f32 1.0, %v1248
        %v1250 = vrcp.pop %v1150
        %v1251 = vmul.f32 1.0, %v1250
        %v1252 = vrcp.pop %v1151
        %v1253 = vmul.f32 1.0, %v1252
        %v1254 = vrcp.pop %v1152
        %v1255 = vmul.f32 1.0, %v1254
        %v1256 = vrcp.pop %v1153
        %v1257 = vmul.f32 1.0, %v1256
        %v1258 = vrcp.pop %v1154
        %v1259 = vmul.f32 1.0, %v1258
        %v1260 = vrcp.pop %v1155
        %v1261 = vmul.f32 1.0, %v1260
        %v1262 = vrcp.pop %v1156
        %v1263 = vmul.f32 1.0, %v1262
        %v1264 = vrcp.pop %v1157
        %v1265 = vmul.f32 1.0, %v1264
        %v1266 = vrcp.pop %v1158
        %v1267 = vmul.f32 1.0, %v1266
        %v1268 = vrcp.pop %v1159
        %v1269 = vmul.f32 1.0, %v1268
        %v1270 = vrcp.pop %v1160
        %v1271 = vmul.f32 1.0, %v1270
        %v1272 = vrcp.pop %v1161
        %v1273 = vmul.f32 1.0, %v1272
        %v1274 = vrcp.pop %v1162
        %v1275 = vmul.f32 1.0, %v1274
        %v1276 = vrcp.pop %v1163
        %v1277 = vmul.f32 1.0, %v1276
        %v1278 = vrcp.pop %v1164
        %v1279 = vmul.f32 1.0, %v1278
        %v1280 = vrcp.pop %v1165
        %v1281 = vmul.f32 1.0, %v1280
        %v1282 = vrcp.pop %v1166
        %v1283 = vmul.f32 1.0, %v1282
        %v1284 = vrcp.pop %v1167
        %v1285 = vmul.f32 1.0, %v1284
        %v1286 = vrcp.pop %v1168
        %v1287 = vmul.f32 1.0, %v1286
        %v1288 = vrcp.pop %v1169
        %v1289 = vmul.f32 1.0, %v1288
        %v1290 = vrcp.pop %v1170
        %v1291 = vmul.f32 1.0, %v1290
        %v1292 = vrcp.pop %v1171
        %v1293 = vmul.f32 1.0, %v1292
        %v1294 = vrcp.pop %v1172
        %v1295 = vmul.f32 1.0, %v1294
        %v1296 = vrcp.pop %v1173
        %v1297 = vmul.f32 1.0, %v1296
        %v1298 = vrcp.pop %v1174
        %v1299 = vmul.f32 1.0, %v1298
        %v1300 = vrcp.pop %v1175
        %v1301 = vmul.f32 1.0, %v1300
        %v1302 = vrcp.pop %v1176
        %v1303 = vmul.f32 1.0, %v1302
        %v1304 = vrcp.pop %v1177
        %v1305 = vmul.f32 1.0, %v1304
        %1306 = vst [vmem:[%s289] sm:$0xff] %v1179
        %1307 = vst [vmem:[%s289 + $0x8] sm:$0xff] %v1181
        %1308 = vst [vmem:[%s289 + $0x10] sm:$0xff] %v1183
        %1309 = vst [vmem:[%s289 + $0x18] sm:$0xff] %v1185
        %1310 = vst [vmem:[%s289 + $0x20] sm:$0xff] %v1187
        %1311 = vst [vmem:[%s289 + $0x28] sm:$0xff] %v1189
        %1312 = vst [vmem:[%s289 + $0x30] sm:$0xff] %v1191
        %1313 = vst [vmem:[%s289 + $0x38] sm:$0xff] %v1193
        %1314 = vst [vmem:[%s289 + $0x40] sm:$0xff] %v1195
        %1315 = vst [vmem:[%s289 + $0x48] sm:$0xff] %v1197
        %1316 = vst [vmem:[%s289 + $0x50] sm:$0xff] %v1199
        %1317 = vst [vmem:[%s289 + $0x58] sm:$0xff] %v1201
        %1318 = vst [vmem:[%s289 + $0x60] sm:$0xff] %v1203
        %1319 = vst [vmem:[%s289 + $0x68] sm:$0xff] %v1205
        %1320 = vst [vmem:[%s289 + $0x70] sm:$0xff] %v1207
        %1321 = vst [vmem:[%s289 + $0x78] sm:$0xff] %v1209
        %1322 = vst [vmem:[%s289 + $0x80] sm:$0xff] %v1211
        %1323 = vst [vmem:[%s289 + $0x88] sm:$0xff] %v1213
        %1324 = vst [vmem:[%s289 + $0x90] sm:$0xff] %v1215
        %1325 = vst [vmem:[%s289 + $0x98] sm:$0xff] %v1217
        %1326 = vst [vmem:[%s289 + $0xa0] sm:$0xff] %v1219
        %1327 = vst [vmem:[%s289 + $0xa8] sm:$0xff] %v1221
        %1328 = vst [vmem:[%s289 + $0xb0] sm:$0xff] %v1223
        %1329 = vst [vmem:[%s289 + $0xb8] sm:$0xff] %v1225
        %1330 = vst [vmem:[%s289 + $0xc0] sm:$0xff] %v1227
        %1331 = vst [vmem:[%s289 + $0xc8] sm:$0xff] %v1229
        %1332 = vst [vmem:[%s289 + $0xd0] sm:$0xff] %v1231
        %1333 = vst [vmem:[%s289 + $0xd8] sm:$0xff] %v1233
        %1334 = vst [vmem:[%s289 + $0xe0] sm:$0xff] %v1235
        %1335 = vst [vmem:[%s289 + $0xe8] sm:$0xff] %v1237
        %1336 = vst [vmem:[%s289 + $0xf0] sm:$0xff] %v1239
        %1337 = vst [vmem:[%s289 + $0xf8] sm:$0xff] %v1241
        %1338 = vst [vmem:[%s289 + $0x100] sm:$0xff] %v1243
        %1339 = vst [vmem:[%s289 + $0x108] sm:$0xff] %v1245
        %1340 = vst [vmem:[%s289 + $0x110] sm:$0xff] %v1247
        %1341 = vst [vmem:[%s289 + $0x118] sm:$0xff] %v1249
        %1342 = vst [vmem:[%s289 + $0x120] sm:$0xff] %v1251
        %1343 = vst [vmem:[%s289 + $0x128] sm:$0xff] %v1253
        %1344 = vst [vmem:[%s289 + $0x130] sm:$0xff] %v1255
        %1345 = vst [vmem:[%s289 + $0x138] sm:$0xff] %v1257
        %1346 = vst [vmem:[%s289 + $0x140] sm:$0xff] %v1259
        %1347 = vst [vmem:[%s289 + $0x148] sm:$0xff] %v1261
        %1348 = vst [vmem:[%s289 + $0x150] sm:$0xff] %v1263
        %1349 = vst [vmem:[%s289 + $0x158] sm:$0xff] %v1265
        %1350 = vst [vmem:[%s289 + $0x160] sm:$0xff] %v1267
        %1351 = vst [vmem:[%s289 + $0x168] sm:$0xff] %v1269
        %1352 = vst [vmem:[%s289 + $0x170] sm:$0xff] %v1271
        %1353 = vst [vmem:[%s289 + $0x178] sm:$0xff] %v1273
        %1354 = vst [vmem:[%s289 + $0x180] sm:$0xff] %v1275
        %1355 = vst [vmem:[%s289 + $0x188] sm:$0xff] %v1277
        %1356 = vst [vmem:[%s289 + $0x190] sm:$0xff] %v1279
        %1357 = vst [vmem:[%s289 + $0x198] sm:$0xff] %v1281
        %1358 = vst [vmem:[%s289 + $0x1a0] sm:$0xff] %v1283
        %1359 = vst [vmem:[%s289 + $0x1a8] sm:$0xff] %v1285
        %1360 = vst [vmem:[%s289 + $0x1b0] sm:$0xff] %v1287
        %1361 = vst [vmem:[%s289 + $0x1b8] sm:$0xff] %v1289
        %1362 = vst [vmem:[%s289 + $0x1c0] sm:$0xff] %v1291
        %1363 = vst [vmem:[%s289 + $0x1c8] sm:$0xff] %v1293
        %1364 = vst [vmem:[%s289 + $0x1d0] sm:$0xff] %v1295
        %1365 = vst [vmem:[%s289 + $0x1d8] sm:$0xff] %v1297
        %1366 = vst [vmem:[%s289 + $0x1e0] sm:$0xff] %v1299
        %1367 = vst [vmem:[%s289 + $0x1e8] sm:$0xff] %v1301
        %1368 = vst [vmem:[%s289 + $0x1f0] sm:$0xff] %v1303
        %1369 = vst [vmem:[%s289 + $0x1f8] sm:$0xff] %v1305
        %s1370 = sand.u32 %s163, 1
        %s1371 = scalar_lea.sflag [#allocation4], %s1370
        %s1372 = sand.u32 %s163, 1
        %s1373 = smul.addr %s1372, 512
        %s1374 = scalar_lea.vmem [#allocation3], %s1373
        %s1375 = sand.u32 %s191, 1
        %s1376 = scalar_lea.sflag [#allocation6], %s1375
        %s1377 = sand.u32 %s191, 1
        %s1378 = smul.addr %s1377, 512
        %s1379 = scalar_lea.vmem [#allocation5], %s1378
        // Predicated region
        $region41: #{fcdiscriminator_wgan_forward.5} parent=39 // pred_check
          %p1380 = pneg %p173
        $region42: #{fcdiscriminator_wgan_forward.5} parent=39 // pred_check_branch
          %1382 = sbr.rel (%p1380) target = $region44
        $region43: #{fcdiscriminator_wgan_forward.5} parent=39 // pred_region
          %s1383 = smul.u32 16, %s31
          %s1385 = ssub.s32 8192, 8192
          %1386 = vsyncadd %s1371, %s1385
          %s1387 = smul.addr %s1383, 4
          %s1388 = smul.addr %s30, 256
          %s1389 = sadd.s32 %s1387, %s1388
          %s1390 = smul.addr %s1389, 128
          %s1391 = scalar_lea.hbm %s5, %s1390
          %s1392 = sshll.u32 %s1374, 4
          %s1393 = int_to_ptr.vmem [resolvable:$true] %s1392
          %1398 = dma.vmem_to_hbm [thread:$0]  %s1393, 8192, %s1391, %s1371, 512, 512, 32
        $region44: #{fcdiscriminator_wgan_forward.5} parent=39 // pred_fallthru
          _
        // Predicated region
        $region45: #{fcdiscriminator_wgan_forward.5} parent=39 // pred_check
          %p1399 = pneg %p201
        $region46: #{fcdiscriminator_wgan_forward.5} parent=39 // pred_check_branch
          %1401 = sbr.rel (%p1399) target = $region48
        $region47: #{fcdiscriminator_wgan_forward.5} parent=39 // pred_region
          %s1402 = smul.u32 16, %s31
          %s1404 = ssub.s32 8192, 8192
          %1405 = vsyncadd %s1376, %s1404
          %s1406 = smul.addr %s1402, 4
          %s1407 = smul.addr %s30, 256
          %s1408 = sadd.s32 %s1406, %s1407
          %s1409 = smul.addr %s1408, 128
          %s1410 = scalar_lea.hbm %s6, %s1409
          %s1411 = sshll.u32 %s1379, 4
          %s1412 = int_to_ptr.vmem [resolvable:$true] %s1411
          %1417 = dma.vmem_to_hbm [thread:$0]  %s1412, 8192, %s1410, %s1376, 512, 512, 32
        $region48: #{fcdiscriminator_wgan_forward.5} parent=39 // pred_fallthru
          _
      $region40: #{fcdiscriminator_wgan_forward.5} parent=5 // pred_fallthru
        _
      %p1418 = scmp.le.s32.totalorder 2, %s21
      // Predicated region
      $region49: #{fcdiscriminator_wgan_forward.5} parent=5 // pred_check
        %p1419 = pneg %p1418
      $region50: #{fcdiscriminator_wgan_forward.5} parent=5 // pred_check_branch
        %1421 = sbr.rel (%p1419) target = $region52
      $region51: #{fcdiscriminator_wgan_forward.5} parent=5 // pred_region
        %s1422 = ssub.s32 %s21, 2
        // Predicated region
        $region53: #{fcdiscriminator_wgan_forward.5} parent=51 // pred_check
          %p1423 = pneg %p179
        $region54: #{fcdiscriminator_wgan_forward.5} parent=51 // pred_check_branch
          %1425 = sbr.rel (%p1423) target = $region56
        $region55: #{fcdiscriminator_wgan_forward.5} parent=51 // pred_region
          %s1426 = sand.u32 %s164, 1
          %s1427 = scalar_lea.sflag [#allocation4], %s1426
          %s1428 = sand.u32 %s164, 1
          %s1429 = smul.addr %s1428, 512
          %s1430 = scalar_lea.vmem [#allocation3], %s1429
          %1431 = dma.done %s1427, 8192
        $region56: #{fcdiscriminator_wgan_forward.5} parent=51 // pred_fallthru
          _
        // Predicated region
        $region57: #{fcdiscriminator_wgan_forward.5} parent=51 // pred_check
          %p1432 = pneg %p207
        $region58: #{fcdiscriminator_wgan_forward.5} parent=51 // pred_check_branch
          %1434 = sbr.rel (%p1432) target = $region60
        $region59: #{fcdiscriminator_wgan_forward.5} parent=51 // pred_region
          %s1435 = sand.u32 %s192, 1
          %s1436 = scalar_lea.sflag [#allocation6], %s1435
          %s1437 = sand.u32 %s192, 1
          %s1438 = smul.addr %s1437, 512
          %s1439 = scalar_lea.vmem [#allocation5], %s1438
          %1440 = dma.done %s1436, 8192
        $region60: #{fcdiscriminator_wgan_forward.5} parent=51 // pred_fallthru
          _
      $region52: #{fcdiscriminator_wgan_forward.5} parent=5 // pred_fallthru
        _
    $region6: #{fcdiscriminator_wgan_forward.5} parent=1 // loop_footer
      %s25 = sadd.s32 1, %s21
    $region7: #{fcdiscriminator_wgan_forward.5} parent=1 // loop_footer_branch
      %20 = sbr.rel target = $region3
    $region8: #{fcdiscriminator_wgan_forward.5} parent=1 // loop_exit
      _
    %1441 = vsyncpa [#allocation4], 1
    %s1442 = scalar_lea.sflag [#allocation4], 1
    %1443 = vsyncpa %s1442, 1
    %1444 = vsyncpa [#allocation6], 1
    %s1445 = scalar_lea.sflag [#allocation6], 1
    %1446 = vsyncpa %s1445, 1

</llo_original>
